<compile_context>
chip_gen: v6e
topology: v6e:2x2x1
jax: 0.10.0
libtpu: 0.0.40
codegen_flags: <defaults>
</compile_context>

<pallas_src>
import jax
import jax.numpy as jnp
from jax import lax
from jax.experimental import pallas as pl
from jax.experimental.pallas import tpu as pltpu


# ----------------------------------------------------------------------------------
# shared per-tile conv (upsample folded into the weights) -- bf16 in, f32 accumulate
# ----------------------------------------------------------------------------------
def _conv_tile(xm_ref, xh_ref, w_ref):
    """One band of the fused upsample+conv as a single MXU matmul.

    xm_ref: (R, W+2, Cin)   bf16, rows [r*R, r*R+R)     of the +1-padded base-res input
    xh_ref: (2, W+2, Cin)   bf16, rows [r*R+R, r*R+R+2) (halo rows)
    w_ref : (9*Cin, ncols)  bf16 fused weights (3x3 taps folded into the contraction dim)
    returns (R*W, ncols) float32 -- columns = (parity(py,px), cout), possibly zero-padded.
    """
    xm = xm_ref[...]
    xh = xh_ref[...]
    R, Wp2, Cin = xm.shape
    W = Wp2 - 2
    xfull = jnp.concatenate([xm, xh], axis=0)               # (R+2, W+2, Cin)
    taps = []
    for dy in range(3):
        for dx in range(3):
            taps.append(xfull[dy:dy + R, dx:dx + W, :].reshape(R * W, Cin))
    patches = jnp.concatenate(taps, axis=1)                  # (R*W, 9*Cin) bf16 im2col-lite
    return jnp.dot(patches, w_ref[...], preferred_element_type=jnp.float32)


def upconv_stats_kernel(xm_ref, xh_ref, w_ref, stats_ref):
    """Pass 1: per-tile, per-column sum and sum-of-squares (BN batch statistics, f32)."""
    acc = _conv_tile(xm_ref, xh_ref, w_ref)                  # (M, ncols) f32
    s = jnp.sum(acc, axis=0, keepdims=True)                  # (1, ncols)
    ss = jnp.sum(acc * acc, axis=0, keepdims=True)           # (1, ncols)
    stats_ref[...] = jnp.concatenate([s, ss], axis=0)        # (2, ncols)


def upconv_apply_kernel(xm_ref, xh_ref, w_ref, scale_ref, shift_ref, o_ref):
    """Pass 2: recompute conv tile, apply precomputed BN scale/shift, ReLU, bf16 store."""
    acc = _conv_tile(xm_ref, xh_ref, w_ref)                  # (M, ncols) f32
    y = acc * scale_ref[...] + shift_ref[...]                # per-column FMA
    o_ref[...] = jnp.maximum(y, 0.0).astype(o_ref.dtype)


# ----------------------------------------------------------------------------------
# tiling heuristics
# ----------------------------------------------------------------------------------
def _pick_band_rows(H, W, N):
    """Band height R (base-res rows per grid step).

    Targets: M = R*W in ~[256, 2048] (fill the MXU row side / amortize the ~0.35us
    per-grid-step overhead without blowing VMEM), R even (2-row-halo index map), R | H,
    and N * (H/R) >= 2 so both v7x TensorCores get at least one tile.
    """
    even_divs = [r for r in range(2, H + 1, 2) if H % r == 0]
    if not even_divs:
        return H                                  # odd H -> caught by the assert below
    fit = [r for r in even_divs if r * W <= 2048]
    R = max(fit) if fit else min(even_divs)
    if N * (H // R) < 2:                          # keep >= 2 parallel tiles (v7x megacore)
        smaller = [r for r in even_divs if r < R]
        if smaller:
            R = max(smaller)
    return R


# ----------------------------------------------------------------------------------
# wrapper
# ----------------------------------------------------------------------------------
def upconv_pallas(x_nchw, w_oihw, bias, gamma, beta, *, eps=1e-5):
    """x_nchw: (N, Cin, H, W) f32 -> (N, Cout, 2H, 2W) f32 (matches PyTorch UpConv fwd)."""
    # Conv bias is exactly cancelled by training-mode BN's batch-mean subtraction
    # (variance unaffected).  Re-add it if this is ever reused with eval-mode BN.
    del bias

    N, Cin, H, W = x_nchw.shape
    Cout = w_oihw.shape[0]

    R = _pick_band_rows(H, W, N)
    assert H % R == 0 and R % 2 == 0, "TODO(synk): masked edge handling for odd H"
    nbands = H // R
    M = R * W                                    # matmul rows per tile (256 at demo size)
    ncols_used = 4 * Cout                        # 4 output parities x Cout
    # Only pad the lane axis when it is already >= 128 (no 4x write waste at small Cout).
    ncols = ncols_used if ncols_used < 128 else ((ncols_used + 127) // 128) * 128

    # ---- glue: NCHW -> NHWC, bf16, +1 zero pad of the ORIGINAL-resolution input only ----
    xp = jnp.pad(jnp.transpose(x_nchw, (0, 2, 3, 1)).astype(jnp.bfloat16),
                 ((0, 0), (1, 1), (1, 1), (0, 0)))            # (N, H+2, W+2, Cin) bf16

    # ---- fused upsample+conv weight: (9*Cin, ncols), col = (py*2+px)*Cout + co ----------
    # conv3x3(upsample2x(x))[2iy+py, 2ix+px] depends on xp[iy+dy, ix+dx] with
    # dy = 1 + (py-1+ky)//2, dx = 1 + (px-1+kx)//2 ; taps sharing (dy,dx) are summed.
    wbig = jnp.zeros((9 * Cin, ncols), jnp.float32)
    wf = w_oihw.astype(jnp.float32)
    for py in range(2):
        for px in range(2):
            col0 = (py * 2 + px) * Cout
            for ky in range(3):
                dy = 1 + (py - 1 + ky) // 2
                for kx in range(3):
                    dx = 1 + (px - 1 + kx) // 2
                    r0 = (dy * 3 + dx) * Cin
                    wbig = wbig.at[r0:r0 + Cin, col0:col0 + Cout].add(wf[:, :, ky, kx].T)
    wbig = wbig.astype(jnp.bfloat16)             # padded columns stay exactly zero

    # ---- specs ---------------------------------------------------------------------------
    grid = (N, nbands)
    xm_spec = pl.BlockSpec((None, R, W + 2, Cin), lambda n, r: (n, r, 0, 0))
    xh_spec = pl.BlockSpec((None, 2, W + 2, Cin),
                           lambda n, r: (n, (r + 1) * (R // 2), 0, 0))    # 2-row halo
    w_spec = pl.BlockSpec((9 * Cin, ncols), lambda n, r: (0, 0))          # constant block
    vec_spec = pl.BlockSpec((1, ncols), lambda n, r: (0, 0))

    # VMEM budget from the actual tile sizes (v7x only has 64 MiB/TC); 2x = double buffers.
    tile_vmem = (
        2 * R * (W + 2) * Cin * 2                 # xm blocks (bf16)
        + 2 * 2 * (W + 2) * Cin * 2               # halo blocks (bf16)
        + 2 * 9 * Cin * ncols * 2                 # fused weights (bf16, constant index)
        + 2 * 2 * ncols * 4                       # scale + shift vectors (f32)
        + 2 * M * ncols * 2                       # apply-pass output block (bf16)
        + 2 * 2 * ncols * 4                       # stats block (f32)
        + M * 9 * Cin * 2 + 2 * M * ncols * 4     # in-kernel patches + f32 accumulators
    )
    vmem_limit = int(min(64 * 1024 * 1024, max(32 * 1024 * 1024, 2 * tile_vmem)))
    cparams = pltpu.CompilerParams(
        dimension_semantics=("parallel", "parallel"),          # megacore split on v7x
        vmem_limit_bytes=vmem_limit)

    conv_flops = 2 * N * nbands * M * (9 * Cin) * ncols
    in_bytes = int(xp.size * 2 + wbig.size * 2)                # bf16 inputs

    # ---- pass 1: conv + partial BN statistics (tiny per-tile outputs, fully parallel) ----
    stats = pl.pallas_call(
        upconv_stats_kernel,
        out_shape=jax.ShapeDtypeStruct((N, nbands, 2, ncols), jnp.float32),
        grid=grid,
        in_specs=[xm_spec, xh_spec, w_spec],
        out_specs=pl.BlockSpec((None, None, 2, ncols), lambda n, r: (n, r, 0, 0)),
        compiler_params=cparams,
        cost_estimate=pl.CostEstimate(flops=int(conv_flops), transcendentals=0,
                                      bytes_accessed=in_bytes + N * nbands * 2 * ncols * 4),
    )(xp, xp, wbig)

    # ---- tiny wrapper reduction: batch mean/var -> per-column scale & shift ---------------
    tot = jnp.sum(stats, axis=(0, 1))                             # (2, ncols) f32
    s_c = jnp.sum(tot[0, :ncols_used].reshape(4, Cout), axis=0)   # per-channel sum
    ss_c = jnp.sum(tot[1, :ncols_used].reshape(4, Cout), axis=0)  # per-channel sum of sq
    cnt = N * (2 * H) * (2 * W)
    mean = s_c / cnt
    var = jnp.maximum(ss_c / cnt - mean * mean, 0.0)              # biased var (PyTorch BN)
    scale_c = gamma.astype(jnp.float32) * lax.rsqrt(var + eps)
    shift_c = beta.astype(jnp.float32) - mean * scale_c
    scale_cols = jnp.zeros((1, ncols), jnp.float32).at[0, :ncols_used].set(jnp.tile(scale_c, 4))
    shift_cols = jnp.zeros((1, ncols), jnp.float32).at[0, :ncols_used].set(jnp.tile(shift_c, 4))

    # ---- pass 2: conv (recomputed) + BN apply + ReLU, unpadded bf16 (M, 4*Cout) stores ----
    y = pl.pallas_call(
        upconv_apply_kernel,
        out_shape=jax.ShapeDtypeStruct((N, nbands, M, ncols), jnp.bfloat16),
        grid=grid,
        in_specs=[xm_spec, xh_spec, w_spec, vec_spec, vec_spec],
        out_specs=pl.BlockSpec((None, None, M, ncols), lambda n, r: (n, r, 0, 0)),
        compiler_params=cparams,
        cost_estimate=pl.CostEstimate(flops=int(conv_flops + 3 * N * nbands * M * ncols),
                                      transcendentals=0,
                                      bytes_accessed=in_bytes + N * nbands * M * ncols * 2),
    )(xp, xp, wbig, scale_cols, shift_cols)

    # ---- one fused layout pass: parity-major bf16 slab -> NCHW f32 (PyTorch parity) -------
    # The sub-pixel matmul is parity-major by construction, so exactly one interleaving
    # transpose is required; it now reads exact-size bf16 data and XLA fuses the
    # slice + reshape + transpose + f32 cast into a single copy.
    y = y[..., :ncols_used].reshape(N, nbands, R, W, 2, 2, Cout)   # (n, r, iy, ix, py, px, co)
    y = jnp.transpose(y, (0, 6, 1, 2, 4, 3, 5))                    # (n, co, r, iy, py, ix, px)
    return y.reshape(N, Cout, 2 * H, 2 * W).astype(jnp.float32)


# ----------------------------------------------------------------------------------
# pure-JAX reference matching the PyTorch forward (training-mode BN, with conv bias)
# ----------------------------------------------------------------------------------
def upconv_ref(x_nchw, w_oihw, bias, gamma, beta, eps=1e-5):
    up = jnp.repeat(jnp.repeat(x_nchw, 2, axis=2), 2, axis=3)
    y = lax.conv_general_dilated(up, w_oihw, window_strides=(1, 1),
                                 padding=[(1, 1), (1, 1)],
                                 dimension_numbers=("NCHW", "OIHW", "NCHW"))
    y = y + bias[None, :, None, None]
    mean = jnp.mean(y, axis=(0, 2, 3), keepdims=True)
    var = jnp.mean((y - mean) ** 2, axis=(0, 2, 3), keepdims=True)
    y = (y - mean) * lax.rsqrt(var + eps)
    y = y * gamma[None, :, None, None] + beta[None, :, None, None]
    return jnp.maximum(y, 0.0)


if __name__ == "__main__":
    N, Cin, Cout, H, W = 2, 4, 8, 16, 16

    key = jax.random.PRNGKey(0)
    kx, kw, kb, kg, kbe = jax.random.split(key, 5)
    x = jax.random.normal(kx, (N, Cin, H, W), dtype=jnp.float32)
    # Conv2d(Cin, Cout, 3, padding=1) parameters (synthetic deterministic init).
    w = 0.1 * jax.random.normal(kw, (Cout, Cin, 3, 3), dtype=jnp.float32)
    b = 0.1 * jax.random.normal(kb, (Cout,), dtype=jnp.float32)
    # BatchNorm2d affine params (non-trivial values to exercise the scale/shift path).
    gamma = 1.0 + 0.1 * jax.random.normal(kg, (Cout,), dtype=jnp.float32)
    beta = 0.1 * jax.random.normal(kbe, (Cout,), dtype=jnp.float32)

    out = jax.block_until_ready(jax.jit(upconv_pallas)(x, w, b, gamma, beta))
    ref = jax.block_until_ready(upconv_ref(x, w, b, gamma, beta))

    assert out.shape == (N, Cout, 2 * H, 2 * W), out.shape
    assert out.dtype == jnp.float32, out.dtype
    # bf16 MXU datapath + bf16 output store -> tolerance scaled to bf16 precision.
    err = float(jnp.max(jnp.abs(out - ref)))
    assert jnp.allclose(out, ref, atol=3e-2, rtol=3e-2), err
    print("KERNEL_OK")
</pallas_src>

<mosaic_0001>
module attributes {stable_mosaic.version = 11 : i64} {
  func.func @upconv_stats_kernel(%arg0: i32, %arg1: i32, %arg2: memref<1x16x18x4xbf16, #tpu.memory_space<vmem>>, %arg3: memref<1x2x18x4xbf16, #tpu.memory_space<vmem>>, %arg4: memref<36x32xbf16, #tpu.memory_space<vmem>>, %arg5: memref<1x1x2x32xf32, #tpu.memory_space<vmem>>) attributes {dimension_semantics = [#tpu.dimension_semantics<parallel>, #tpu.dimension_semantics<parallel>], iteration_bounds = array<i64: 2, 1>, scalar_prefetch = 0 : i64, scratch_operands = 0 : i64, tpu.core_type = #tpu.core_type<tc>, window_params = [{transform_indices = @transform_0, window_bounds = array<i64: 1, 16, 18, 4>}, {transform_indices = @transform_1, window_bounds = array<i64: 1, 2, 18, 4>}, {pipeline_mode = #tpu.pipeline_mode<synchronous>, transform_indices = @transform_2, window_bounds = array<i64: 36, 32>}, {transform_indices = @transform_3, window_bounds = array<i64: 1, 1, 2, 32>}]} {
    %c0 = arith.constant 0 : index
    %c0_0 = arith.constant 0 : index
    %c0_1 = arith.constant 0 : index
    %c0_2 = arith.constant 0 : index
    %0 = vector.load %arg2[%c0, %c0_0, %c0_1, %c0_2] : memref<1x16x18x4xbf16, #tpu.memory_space<vmem>>, vector<1x16x18x4xbf16>
    %1 = vector.shape_cast %0 : vector<1x16x18x4xbf16> to vector<16x18x4xbf16>
    %c0_3 = arith.constant 0 : index
    %c0_4 = arith.constant 0 : index
    %c0_5 = arith.constant 0 : index
    %c0_6 = arith.constant 0 : index
    %2 = vector.load %arg3[%c0_3, %c0_4, %c0_5, %c0_6] : memref<1x2x18x4xbf16, #tpu.memory_space<vmem>>, vector<1x2x18x4xbf16>
    %3 = vector.shape_cast %2 : vector<1x2x18x4xbf16> to vector<2x18x4xbf16>
    %4 = tpu.concatenate %1, %3 in 0 : vector<16x18x4xbf16>, vector<2x18x4xbf16> -> vector<18x18x4xbf16>
    %5 = vector.extract_strided_slice %4 {offsets = [0, 0, 0], sizes = [16, 16, 4], strides = [1, 1, 1]} : vector<18x18x4xbf16> to vector<16x16x4xbf16>
    %6 = vector.shape_cast %5 : vector<16x16x4xbf16> to vector<256x4xbf16>
    %7 = vector.extract_strided_slice %4 {offsets = [0, 1, 0], sizes = [16, 16, 4], strides = [1, 1, 1]} : vector<18x18x4xbf16> to vector<16x16x4xbf16>
    %8 = vector.shape_cast %7 : vector<16x16x4xbf16> to vector<256x4xbf16>
    %9 = vector.extract_strided_slice %4 {offsets = [0, 2, 0], sizes = [16, 16, 4], strides = [1, 1, 1]} : vector<18x18x4xbf16> to vector<16x16x4xbf16>
    %10 = vector.shape_cast %9 : vector<16x16x4xbf16> to vector<256x4xbf16>
    %11 = vector.extract_strided_slice %4 {offsets = [1, 0, 0], sizes = [16, 16, 4], strides = [1, 1, 1]} : vector<18x18x4xbf16> to vector<16x16x4xbf16>
    %12 = vector.shape_cast %11 : vector<16x16x4xbf16> to vector<256x4xbf16>
    %13 = vector.extract_strided_slice %4 {offsets = [1, 1, 0], sizes = [16, 16, 4], strides = [1, 1, 1]} : vector<18x18x4xbf16> to vector<16x16x4xbf16>
    %14 = vector.shape_cast %13 : vector<16x16x4xbf16> to vector<256x4xbf16>
    %15 = vector.extract_strided_slice %4 {offsets = [1, 2, 0], sizes = [16, 16, 4], strides = [1, 1, 1]} : vector<18x18x4xbf16> to vector<16x16x4xbf16>
    %16 = vector.shape_cast %15 : vector<16x16x4xbf16> to vector<256x4xbf16>
    %17 = vector.extract_strided_slice %4 {offsets = [2, 0, 0], sizes = [16, 16, 4], strides = [1, 1, 1]} : vector<18x18x4xbf16> to vector<16x16x4xbf16>
    %18 = vector.shape_cast %17 : vector<16x16x4xbf16> to vector<256x4xbf16>
    %19 = vector.extract_strided_slice %4 {offsets = [2, 1, 0], sizes = [16, 16, 4], strides = [1, 1, 1]} : vector<18x18x4xbf16> to vector<16x16x4xbf16>
    %20 = vector.shape_cast %19 : vector<16x16x4xbf16> to vector<256x4xbf16>
    %21 = vector.extract_strided_slice %4 {offsets = [2, 2, 0], sizes = [16, 16, 4], strides = [1, 1, 1]} : vector<18x18x4xbf16> to vector<16x16x4xbf16>
    %22 = vector.shape_cast %21 : vector<16x16x4xbf16> to vector<256x4xbf16>
    %23 = tpu.concatenate %6, %8, %10, %12, %14, %16, %18, %20, %22 in 1 : vector<256x4xbf16>, vector<256x4xbf16>, vector<256x4xbf16>, vector<256x4xbf16>, vector<256x4xbf16>, vector<256x4xbf16>, vector<256x4xbf16>, vector<256x4xbf16>, vector<256x4xbf16> -> vector<256x36xbf16>
    %c0_7 = arith.constant 0 : index
    %c0_8 = arith.constant 0 : index
    %24 = vector.load %arg4[%c0_7, %c0_8] : memref<36x32xbf16, #tpu.memory_space<vmem>>, vector<36x32xbf16>
    %cst = arith.constant dense<0.000000e+00> : vector<256x32xf32>
    %25 = tpu.matmul %23, %24, %cst {dimension_numbers = #tpu.dot_dimension_numbers<[1], [0], [0], [1], [0, 0, 1, 1], [], []>} : vector<256x36xbf16>, vector<36x32xbf16>, vector<256x32xf32> -> vector<256x32xf32>
    %cst_9 = arith.constant dense<0.000000e+00> : vector<32xf32>
    %26 = vector.multi_reduction <add>, %25, %cst_9 [0] : vector<256x32xf32> to vector<32xf32>
    %27 = vector.shape_cast %26 : vector<32xf32> to vector<1x32xf32>
    %28 = arith.mulf %25, %25 : vector<256x32xf32>
    %cst_10 = arith.constant dense<0.000000e+00> : vector<32xf32>
    %29 = vector.multi_reduction <add>, %28, %cst_10 [0] : vector<256x32xf32> to vector<32xf32>
    %30 = vector.shape_cast %29 : vector<32xf32> to vector<1x32xf32>
    %31 = tpu.concatenate %27, %30 in 0 : vector<1x32xf32>, vector<1x32xf32> -> vector<2x32xf32>
    %c0_11 = arith.constant 0 : index
    %c0_12 = arith.constant 0 : index
    %c0_13 = arith.constant 0 : index
    %c0_14 = arith.constant 0 : index
    %32 = vector.load %arg5[%c0_11, %c0_12, %c0_13, %c0_14] : memref<1x1x2x32xf32, #tpu.memory_space<vmem>>, vector<1x1x2x32xf32>
    %33 = vector.shape_cast %32 : vector<1x1x2x32xf32> to vector<2x32xf32>
    %34 = vector.shape_cast %31 : vector<2x32xf32> to vector<1x1x2x32xf32>
    tpu.vector_store %arg5[%c0_11, %c0_12, %c0_13, %c0_14], %34 {strides = array<i32>} : memref<1x1x2x32xf32, #tpu.memory_space<vmem>>, vector<1x1x2x32xf32>,
    return
  }
  func.func @transform_0(%arg0: i32, %arg1: i32) -> (i32, i32, i32, i32) {
    %c0_i32 = arith.constant 0 : i32
    %c0_i32_0 = arith.constant 0 : i32
    %c0_i32_1 = arith.constant 0 : i32
    return %arg0, %arg1, %c0_i32, %c0_i32_0 : i32, i32, i32, i32
  }
  func.func @transform_1(%arg0: i32, %arg1: i32) -> (i32, i32, i32, i32) {
    %c1_i32 = arith.constant 1 : i32
    %0 = arith.addi %arg1, %c1_i32 : i32
    %c8_i32 = arith.constant 8 : i32
    %1 = arith.muli %0, %c8_i32 : i32
    %c0_i32 = arith.constant 0 : i32
    %c0_i32_0 = arith.constant 0 : i32
    %c0_i32_1 = arith.constant 0 : i32
    return %arg0, %1, %c0_i32, %c0_i32_0 : i32, i32, i32, i32
  }
  func.func @transform_2(%arg0: i32, %arg1: i32) -> (i32, i32) {
    %c0_i32 = arith.constant 0 : i32
    %c0_i32_0 = arith.constant 0 : i32
    %c0_i32_1 = arith.constant 0 : i32
    return %c0_i32, %c0_i32_0 : i32, i32
  }
  func.func @transform_3(%arg0: i32, %arg1: i32) -> (i32, i32, i32, i32) {
    %c0_i32 = arith.constant 0 : i32
    %c0_i32_0 = arith.constant 0 : i32
    %c0_i32_1 = arith.constant 0 : i32
    return %arg0, %arg1, %c0_i32, %c0_i32_0 : i32, i32, i32, i32
  }
}

module attributes {stable_mosaic.version = 11 : i64} {
  func.func @upconv_apply_kernel(%arg0: i32, %arg1: i32, %arg2: memref<1x16x18x4xbf16, #tpu.memory_space<vmem>>, %arg3: memref<1x2x18x4xbf16, #tpu.memory_space<vmem>>, %arg4: memref<36x32xbf16, #tpu.memory_space<vmem>>, %arg5: memref<1x32xf32, #tpu.memory_space<vmem>>, %arg6: memref<1x32xf32, #tpu.memory_space<vmem>>, %arg7: memref<1x1x256x32xbf16, #tpu.memory_space<vmem>>) attributes {dimension_semantics = [#tpu.dimension_semantics<parallel>, #tpu.dimension_semantics<parallel>], iteration_bounds = array<i64: 2, 1>, scalar_prefetch = 0 : i64, scratch_operands = 0 : i64, tpu.core_type = #tpu.core_type<tc>, window_params = [{transform_indices = @transform_0, window_bounds = array<i64: 1, 16, 18, 4>}, {transform_indices = @transform_1, window_bounds = array<i64: 1, 2, 18, 4>}, {pipeline_mode = #tpu.pipeline_mode<synchronous>, transform_indices = @transform_2, window_bounds = array<i64: 36, 32>}, {pipeline_mode = #tpu.pipeline_mode<synchronous>, transform_indices = @transform_3, window_bounds = array<i64: 1, 32>}, {pipeline_mode = #tpu.pipeline_mode<synchronous>, transform_indices = @transform_4, window_bounds = array<i64: 1, 32>}, {transform_indices = @transform_5, window_bounds = array<i64: 1, 1, 256, 32>}]} {
    %c0 = arith.constant 0 : index
    %c0_0 = arith.constant 0 : index
    %c0_1 = arith.constant 0 : index
    %c0_2 = arith.constant 0 : index
    %0 = vector.load %arg2[%c0, %c0_0, %c0_1, %c0_2] : memref<1x16x18x4xbf16, #tpu.memory_space<vmem>>, vector<1x16x18x4xbf16>
    %1 = vector.shape_cast %0 : vector<1x16x18x4xbf16> to vector<16x18x4xbf16>
    %c0_3 = arith.constant 0 : index
    %c0_4 = arith.constant 0 : index
    %c0_5 = arith.constant 0 : index
    %c0_6 = arith.constant 0 : index
    %2 = vector.load %arg3[%c0_3, %c0_4, %c0_5, %c0_6] : memref<1x2x18x4xbf16, #tpu.memory_space<vmem>>, vector<1x2x18x4xbf16>
    %3 = vector.shape_cast %2 : vector<1x2x18x4xbf16> to vector<2x18x4xbf16>
    %4 = tpu.concatenate %1, %3 in 0 : vector<16x18x4xbf16>, vector<2x18x4xbf16> -> vector<18x18x4xbf16>
    %5 = vector.extract_strided_slice %4 {offsets = [0, 0, 0], sizes = [16, 16, 4], strides = [1, 1, 1]} : vector<18x18x4xbf16> to vector<16x16x4xbf16>
    %6 = vector.shape_cast %5 : vector<16x16x4xbf16> to vector<256x4xbf16>
    %7 = vector.extract_strided_slice %4 {offsets = [0, 1, 0], sizes = [16, 16, 4], strides = [1, 1, 1]} : vector<18x18x4xbf16> to vector<16x16x4xbf16>
    %8 = vector.shape_cast %7 : vector<16x16x4xbf16> to vector<256x4xbf16>
    %9 = vector.extract_strided_slice %4 {offsets = [0, 2, 0], sizes = [16, 16, 4], strides = [1, 1, 1]} : vector<18x18x4xbf16> to vector<16x16x4xbf16>
    %10 = vector.shape_cast %9 : vector<16x16x4xbf16> to vector<256x4xbf16>
    %11 = vector.extract_strided_slice %4 {offsets = [1, 0, 0], sizes = [16, 16, 4], strides = [1, 1, 1]} : vector<18x18x4xbf16> to vector<16x16x4xbf16>
    %12 = vector.shape_cast %11 : vector<16x16x4xbf16> to vector<256x4xbf16>
    %13 = vector.extract_strided_slice %4 {offsets = [1, 1, 0], sizes = [16, 16, 4], strides = [1, 1, 1]} : vector<18x18x4xbf16> to vector<16x16x4xbf16>
    %14 = vector.shape_cast %13 : vector<16x16x4xbf16> to vector<256x4xbf16>
    %15 = vector.extract_strided_slice %4 {offsets = [1, 2, 0], sizes = [16, 16, 4], strides = [1, 1, 1]} : vector<18x18x4xbf16> to vector<16x16x4xbf16>
    %16 = vector.shape_cast %15 : vector<16x16x4xbf16> to vector<256x4xbf16>
    %17 = vector.extract_strided_slice %4 {offsets = [2, 0, 0], sizes = [16, 16, 4], strides = [1, 1, 1]} : vector<18x18x4xbf16> to vector<16x16x4xbf16>
    %18 = vector.shape_cast %17 : vector<16x16x4xbf16> to vector<256x4xbf16>
    %19 = vector.extract_strided_slice %4 {offsets = [2, 1, 0], sizes = [16, 16, 4], strides = [1, 1, 1]} : vector<18x18x4xbf16> to vector<16x16x4xbf16>
    %20 = vector.shape_cast %19 : vector<16x16x4xbf16> to vector<256x4xbf16>
    %21 = vector.extract_strided_slice %4 {offsets = [2, 2, 0], sizes = [16, 16, 4], strides = [1, 1, 1]} : vector<18x18x4xbf16> to vector<16x16x4xbf16>
    %22 = vector.shape_cast %21 : vector<16x16x4xbf16> to vector<256x4xbf16>
    %23 = tpu.concatenate %6, %8, %10, %12, %14, %16, %18, %20, %22 in 1 : vector<256x4xbf16>, vector<256x4xbf16>, vector<256x4xbf16>, vector<256x4xbf16>, vector<256x4xbf16>, vector<256x4xbf16>, vector<256x4xbf16>, vector<256x4xbf16>, vector<256x4xbf16> -> vector<256x36xbf16>
    %c0_7 = arith.constant 0 : index
    %c0_8 = arith.constant 0 : index
    %24 = vector.load %arg4[%c0_7, %c0_8] : memref<36x32xbf16, #tpu.memory_space<vmem>>, vector<36x32xbf16>
    %cst = arith.constant dense<0.000000e+00> : vector<256x32xf32>
    %25 = tpu.matmul %23, %24, %cst {dimension_numbers = #tpu.dot_dimension_numbers<[1], [0], [0], [1], [0, 0, 1, 1], [], []>} : vector<256x36xbf16>, vector<36x32xbf16>, vector<256x32xf32> -> vector<256x32xf32>
    %c0_9 = arith.constant 0 : index
    %c0_10 = arith.constant 0 : index
    %26 = vector.load %arg5[%c0_9, %c0_10] : memref<1x32xf32, #tpu.memory_space<vmem>>, vector<1x32xf32>
    %27 = vector.broadcast %26 : vector<1x32xf32> to vector<256x32xf32>
    %28 = arith.mulf %25, %27 : vector<256x32xf32>
    %c0_11 = arith.constant 0 : index
    %c0_12 = arith.constant 0 : index
    %29 = vector.load %arg6[%c0_11, %c0_12] : memref<1x32xf32, #tpu.memory_space<vmem>>, vector<1x32xf32>
    %30 = vector.broadcast %29 : vector<1x32xf32> to vector<256x32xf32>
    %31 = arith.addf %28, %30 : vector<256x32xf32>
    %cst_13 = arith.constant 0.000000e+00 : f32
    %32 = vector.broadcast %cst_13 : f32 to vector<256x32xf32>
    %33 = arith.maximumf %31, %32 : vector<256x32xf32>
    %34 = arith.truncf %33 : vector<256x32xf32> to vector<256x32xbf16>
    %c0_14 = arith.constant 0 : index
    %c0_15 = arith.constant 0 : index
    %c0_16 = arith.constant 0 : index
    %c0_17 = arith.constant 0 : index
    %35 = vector.load %arg7[%c0_14, %c0_15, %c0_16, %c0_17] : memref<1x1x256x32xbf16, #tpu.memory_space<vmem>>, vector<1x1x256x32xbf16>
    %36 = vector.shape_cast %35 : vector<1x1x256x32xbf16> to vector<256x32xbf16>
    %37 = vector.shape_cast %34 : vector<256x32xbf16> to vector<1x1x256x32xbf16>
    tpu.vector_store %arg7[%c0_14, %c0_15, %c0_16, %c0_17], %37 {strides = array<i32>} : memref<1x1x256x32xbf16, #tpu.memory_space<vmem>>, vector<1x1x256x32xbf16>,
    return
  }
  func.func @transform_0(%arg0: i32, %arg1: i32) -> (i32, i32, i32, i32) {
    %c0_i32 = arith.constant 0 : i32
    %c0_i32_0 = arith.constant 0 : i32
    %c0_i32_1 = arith.constant 0 : i32
    return %arg0, %arg1, %c0_i32, %c0_i32_0 : i32, i32, i32, i32
  }
  func.func @transform_1(%arg0: i32, %arg1: i32) -> (i32, i32, i32, i32) {
    %c1_i32 = arith.constant 1 : i32
    %0 = arith.addi %arg1, %c1_i32 : i32
    %c8_i32 = arith.constant 8 : i32
    %1 = arith.muli %0, %c8_i32 : i32
    %c0_i32 = arith.constant 0 : i32
    %c0_i32_0 = arith.constant 0 : i32
    %c0_i32_1 = arith.constant 0 : i32
    return %arg0, %1, %c0_i32, %c0_i32_0 : i32, i32, i32, i32
  }
  func.func @transform_2(%arg0: i32, %arg1: i32) -> (i32, i32) {
    %c0_i32 = arith.constant 0 : i32
    %c0_i32_0 = arith.constant 0 : i32
    %c0_i32_1 = arith.constant 0 : i32
    return %c0_i32, %c0_i32_0 : i32, i32
  }
  func.func @transform_3(%arg0: i32, %arg1: i32) -> (i32, i32) {
    %c0_i32 = arith.constant 0 : i32
    %c0_i32_0 = arith.constant 0 : i32
    %c0_i32_1 = arith.constant 0 : i32
    return %c0_i32, %c0_i32_0 : i32, i32
  }
  func.func @transform_4(%arg0: i32, %arg1: i32) -> (i32, i32) {
    %c0_i32 = arith.constant 0 : i32
    %c0_i32_0 = arith.constant 0 : i32
    %c0_i32_1 = arith.constant 0 : i32
    return %c0_i32, %c0_i32_0 : i32, i32
  }
  func.func @transform_5(%arg0: i32, %arg1: i32) -> (i32, i32, i32, i32) {
    %c0_i32 = arith.constant 0 : i32
    %c0_i32_0 = arith.constant 0 : i32
    %c0_i32_1 = arith.constant 0 : i32
    return %arg0, %arg1, %c0_i32, %c0_i32_0 : i32, i32, i32, i32
  }
}

</mosaic_0001>

<llo_original>
// kernel: squeeze.74
$region0: #{squeeze.74}
  %s0 = inlined_call_operand.vmem [shape: f32[32], index: 0, kind: input, shape index: {}]
  %s1 = inlined_call_operand.vmem [shape: f32[4,8], index: 1, kind: output, shape index: {}]
  $region1: #{squeeze.74} parent=0
    #allocation0 [shape = 'u8[4096]{0}', space=vmem, size = 0x1000, scoped, tag = 'scoped mem for output reshape']
    #allocation1 [shape = 'u8[4096]{0}', space=vmem, size = 0x1000, scoped, tag = 'scoped mem for input reshape']
    %s3 = sshll.u32 1, 1
    %s4 = ssub.s32 %s3, 1
    %v5 = vld [vmem:[%s0] sm:%s4]
    %6 = vst [vmem:[#allocation1] sm:%s4] %v5
    %v7 = vld [vmem:[#allocation1] sm:$0x1]
    %vm8 = vcmask 64512
    %9 = vst.msk [vmem:[#allocation0] sm:$0x1] %vm8, %v7
    %v10 = vld [vmem:[#allocation1] sm:$0x1]
    %11 = vrot.lane.b32.xlu0 %v10, 120
    %v12 = vpop.permute.xlu0 %11
    %vm13 = vcmask 64512
    %s14 = scalar_lea.vmem [#allocation0], 1
    %15 = vst.msk [vmem:[%s14] sm:$0x1] %vm13, %v12
    %v16 = vld [vmem:[#allocation1] sm:$0x1]
    %17 = vrot.lane.b32.xlu0 %v16, 112
    %v18 = vpop.permute.xlu0 %17
    %vm19 = vcmask 64512
    %s20 = scalar_lea.vmem [#allocation0], 2
    %21 = vst.msk [vmem:[%s20] sm:$0x1] %vm19, %v18
    %v22 = vld [vmem:[#allocation1] sm:$0x1]
    %23 = vrot.lane.b32.xlu0 %v22, 104
    %v24 = vpop.permute.xlu0 %23
    %vm25 = vcmask 64512
    %s26 = scalar_lea.vmem [#allocation0], 3
    %27 = vst.msk [vmem:[%s26] sm:$0x1] %vm25, %v24
    %s29 = sshll.u32 1, 4
    %s30 = ssub.s32 %s29, 1
    %v32 = vld [vmem:[#allocation0] sm:%s30]
    %s33 = sshll.u32 1, 4
    %s34 = ssub.s32 %s33, 1
    %35 = vst [vmem:[%s1] sm:%s34] %v32

// kernel: tile.18
$region0: #{tile.18}
  #allocation0 [shape = 's32[1]{0}', space=sflag, size = 0x4, scoped, tag = 'scoped memory for tile.18']
  %s0 = inlined_call_operand.vmem [shape: f32[8], index: 0, kind: input, shape index: {}]
  %s1 = inlined_call_operand.vmem [shape: f32[4,8], index: 1, kind: output, shape index: {}]
  // Predicated region
  $region2: #{tile.18} parent=0 // pred_check
    _
  $region3: #{tile.18} parent=0 // pred_check_branch
    %3 = sbr.rel (0) target = $region5
  $region4: #{tile.18} parent=0 // pred_region
    _
  $region5: #{tile.18} parent=0 // pred_fallthru
    _
  %v4 = vld [vmem:[%s0] ss:$0 sm:$0xff]
  %5 = vst [vmem:[%s1] sm:$0xf] %v4

// kernel: upconv_pallas.2
$region0: #{upconv_pallas.2}
  #allocation0 [shape = 'u32[]', space=smem, size = 0x4, offset = 0x4, fixed_abs, tag = 'smem constant byte address 0x4 - core index']
  #allocation1 [shape = 'u32[144,128]{1,0:T(1,128)}', space=vmem, size = 0x12000, scoped, tag = 'internal scratch']
  %s0 = inlined_call_operand.vmem [shape: bf16[2,18,18,4], index: 0, kind: input, shape index: {}, may-alias: {0,1}]
  %s1 = inlined_call_operand.vmem [shape: bf16[2,18,18,4], index: 1, kind: input, shape index: {}, may-alias: {0,1}]
  %s2 = inlined_call_operand.vmem [shape: bf16[36,32], index: 2, kind: input, shape index: {}]
  %s3 = inlined_call_operand.vmem [shape: f32[2,1,2,32], index: 3, kind: output, shape index: {}]
  %s4 = sld [smem:[#allocation0]]
  $region45: #{upconv_pallas.2} parent=0
    _
  %s6 = ssub.s32 1, %s4
  %s7 = scalar_select 0, %s6, %s4
  loop: start=0, step=1, limit=4
  $region2: #{upconv_pallas.2} parent=0 // loop_pre_header
    _
  $region3: #{upconv_pallas.2} parent=0 // loop_header
    %s9 = sphi 0, %s13
    %p10 = scmp.ge.s32.totalorder %s9, 4
    %s16 = sphi 0, %s28
    %s17 = sphi 0, %s24
    %s18 = sphi 0, %s16
    %s19 = sphi 0, %s17
    %s20 = sphi 0, %s18
    %s21 = sphi 0, %s19
    %s33 = sphi 0, %s35
    %s36 = sphi 0, %s33
    %s37 = sphi 0, %s36
    %s53 = sphi 0, %s37
    %s65 = sphi 0, %s67
    %s68 = sphi 0, %s65
    %s69 = sphi 0, %s68
    %s85 = sphi 0, %s69
    %s89 = sphi 0, %s89
    %s91 = sphi 0, %s89
    %s92 = sphi 0, %s91
    %s106 = sphi 0, %s92
    %s114 = sphi 0, %s116
    %s117 = sphi 0, %s114
    %s118 = sphi 0, %s117
    %s134 = sphi 0, %s118
  $region4: #{upconv_pallas.2} parent=0 // loop_header_branch
    %12 = sbr.rel (%p10) target = $region8
  $region5: #{upconv_pallas.2} parent=0 // loop_body
    %s14 = ssub.s32 %s9, 1
    %s15 = ssub.s32 %s9, 2
    %s22 = sadd.s32 1, %s17
    %p23 = scmp.ge.s32.totalorder %s22, 1
    %s24 = scalar_select %p23, 0, %s22
    %s25 = sadd.s32 1, %s16
    %s26 = scalar_select %p23, %s25, %s16
    %p27 = scmp.ge.s32.totalorder %s26, 2
    %s28 = scalar_select %p27, 0, %s26
    %s29 = ssub.s32 %s16, %s28
    %s30 = ssub.s32 %s17, %s24
    %s31 = sor.u32 %s29, %s30
    %p32 = scmp.eq.s32.totalorder %s31, 0
    %s34 = sadd.s32 %s33, 1
    %s35 = scalar_select %p32, %s33, %s34
    %p38 = pneg %p32
    %p39 = scmp.eq.s32.totalorder %s9, 1
    %p40 = por %p38, %p39
    %p41 = scmp.ne.s32.totalorder %s33, %s36
    %p42 = scmp.eq.s32.totalorder %s9, 0
    %p43 = por %p41, %p42
    %p44 = scmp.ne.s32.totalorder %s33, %s36
    %p45 = scmp.eq.s32.totalorder %s14, 1
    %p46 = por %p44, %p45
    %p47 = scmp.ne.s32.totalorder %s36, %s37
    %p48 = scmp.eq.s32.totalorder %s14, 0
    %p49 = por %p47, %p48
    %p50 = scmp.ne.s32.totalorder %s36, %s37
    %p51 = scmp.eq.s32.totalorder %s15, 1
    %p52 = por %p50, %p51
    %p54 = scmp.ne.s32.totalorder %s37, %s53
    %p55 = scmp.eq.s32.totalorder %s15, 0
    %p56 = por %p54, %p55
    %s57 = sadd.s32 %s17, 1
    %s58 = smul.u32 %s57, 8
    %s59 = sadd.s32 %s24, 1
    %s60 = smul.u32 %s59, 8
    %s61 = ssub.s32 %s16, %s28
    %s62 = ssub.s32 %s58, %s60
    %s63 = sor.u32 %s61, %s62
    %p64 = scmp.eq.s32.totalorder %s63, 0
    %s66 = sadd.s32 %s65, 1
    %s67 = scalar_select %p64, %s65, %s66
    %p70 = pneg %p64
    %p71 = scmp.eq.s32.totalorder %s9, 1
    %p72 = por %p70, %p71
    %p73 = scmp.ne.s32.totalorder %s65, %s68
    %p74 = scmp.eq.s32.totalorder %s9, 0
    %p75 = por %p73, %p74
    %p76 = scmp.ne.s32.totalorder %s65, %s68
    %p77 = scmp.eq.s32.totalorder %s14, 1
    %p78 = por %p76, %p77
    %p79 = scmp.ne.s32.totalorder %s68, %s69
    %p80 = scmp.eq.s32.totalorder %s14, 0
    %p81 = por %p79, %p80
    %p82 = scmp.ne.s32.totalorder %s68, %s69
    %p83 = scmp.eq.s32.totalorder %s15, 1
    %p84 = por %p82, %p83
    %p86 = scmp.ne.s32.totalorder %s69, %s85
    %p87 = scmp.eq.s32.totalorder %s15, 0
    %p88 = por %p86, %p87
    %s90 = sadd.s32 %s89, 1
    %p93 = scmp.eq.s32.totalorder %s9, 1
    %p94 = scmp.ne.s32.totalorder %s89, %s91
    %p95 = scmp.eq.s32.totalorder %s9, 0
    %p96 = por %p94, %p95
    %p97 = scmp.ne.s32.totalorder %s89, %s91
    %p98 = scmp.eq.s32.totalorder %s14, 1
    %p99 = por %p97, %p98
    %p100 = scmp.ne.s32.totalorder %s91, %s92
    %p101 = scmp.eq.s32.totalorder %s14, 0
    %p102 = por %p100, %p101
    %p103 = scmp.ne.s32.totalorder %s91, %s92
    %p104 = scmp.eq.s32.totalorder %s15, 1
    %p105 = por %p103, %p104
    %p107 = scmp.ne.s32.totalorder %s92, %s106
    %p108 = scmp.eq.s32.totalorder %s15, 0
    %p109 = por %p107, %p108
    %s110 = ssub.s32 %s16, %s28
    %s111 = ssub.s32 %s17, %s24
    %s112 = sor.u32 %s110, %s111
    %p113 = scmp.eq.s32.totalorder %s112, 0
    %s115 = sadd.s32 %s114, 1
    %s116 = scalar_select %p113, %s114, %s115
    %p119 = pneg %p113
    %p120 = scmp.eq.s32.totalorder %s9, 1
    %p121 = por %p119, %p120
    %p122 = scmp.ne.s32.totalorder %s114, %s117
    %p123 = scmp.eq.s32.totalorder %s9, 0
    %p124 = por %p122, %p123
    %p125 = scmp.ne.s32.totalorder %s114, %s117
    %p126 = scmp.eq.s32.totalorder %s14, 1
    %p127 = por %p125, %p126
    %p128 = scmp.ne.s32.totalorder %s117, %s118
    %p129 = scmp.eq.s32.totalorder %s14, 0
    %p130 = por %p128, %p129
    %p131 = scmp.ne.s32.totalorder %s117, %s118
    %p132 = scmp.eq.s32.totalorder %s15, 1
    %p133 = por %p131, %p132
    %p135 = scmp.ne.s32.totalorder %s118, %s134
    %p136 = scmp.eq.s32.totalorder %s15, 0
    %p137 = por %p135, %p136
    %p138 = scmp.le.s32.totalorder 1, %s9
    %p139 = scmp.lt.s32.totalorder %s9, 3
    %p140 = pnand %p138, %p139
    %p141 = pneg %p140
    // Predicated region
    $region9: #{upconv_pallas.2} parent=5 // pred_check
      _
    $region10: #{upconv_pallas.2} parent=5 // pred_check_branch
      %143 = sbr.rel (%p140) target = $region12
    $region11: #{upconv_pallas.2} parent=5 // pred_region
      %s144 = ssub.s32 %s9, 1
      // Predicated region
      $region13: #{upconv_pallas.2} parent=11 // pred_check
        %p145 = pneg %p102
      $region14: #{upconv_pallas.2} parent=11 // pred_check_branch
        %147 = sbr.rel (%p145) target = $region16
      $region15: #{upconv_pallas.2} parent=11 // pred_region
        _
      $region16: #{upconv_pallas.2} parent=11 // pred_fallthru
        _
    $region12: #{upconv_pallas.2} parent=5 // pred_fallthru
      _
    %p148 = scmp.lt.s32.totalorder %s9, 2
    // Predicated region
    $region17: #{upconv_pallas.2} parent=5 // pred_check
      %p149 = pneg %p148
    $region18: #{upconv_pallas.2} parent=5 // pred_check_branch
      %151 = sbr.rel (%p149) target = $region20
    $region19: #{upconv_pallas.2} parent=5 // pred_region
      // Predicated region
      $region21: #{upconv_pallas.2} parent=19 // pred_check
        %p152 = pneg %p43
      $region22: #{upconv_pallas.2} parent=19 // pred_check_branch
        %154 = sbr.rel (%p152) target = $region24
      $region23: #{upconv_pallas.2} parent=19 // pred_region
        %s155 = smul.u32 16, %s17
        %s156 = ssub.s32 18, %s155
        %p157 = scmp.lt.s32.totalorder %s156, 16
        %s158 = scalar_select %p157, %s156, 16
        %s159 = smul.u32 64, %s158
        %s160 = smul.u32 %s159, 3
        %p161 = scmp.lt.s32.totalorder %s16, 1
        %s162 = scalar_select %p161, %s16, 1
        %p163 = scmp.lt.s32.totalorder %s155, 17
        %s164 = scalar_select %p163, %s155, 17
        %s165 = smul.addr %s164, 3
        %s166 = smul.addr %s162, 54
        %s167 = sadd.s32 %s165, %s166
        %s168 = smul.addr %s167, 4
        %s169 = scalar_lea.vmem %s0, %s168
        %s170 = smul.u32 16, %s17
        %s171 = ssub.s32 18, %s170
        %p172 = scmp.lt.s32.totalorder %s171, 16
        %s173 = scalar_select %p172, %s171, 16
        %s174 = smul.u32 64, %s173
        %s175 = smul.u32 %s174, 3
      $region24: #{upconv_pallas.2} parent=19 // pred_fallthru
        _
      // Predicated region
      $region25: #{upconv_pallas.2} parent=19 // pred_check
        %p176 = pneg %p75
      $region26: #{upconv_pallas.2} parent=19 // pred_check_branch
        %178 = sbr.rel (%p176) target = $region28
      $region27: #{upconv_pallas.2} parent=19 // pred_region
        %s179 = sadd.s32 %s17, 1
        %s180 = smul.u32 %s179, 8
        %s181 = smul.u32 2, %s180
        %p182 = scmp.lt.s32.totalorder %s16, 1
        %s183 = scalar_select %p182, %s16, 1
        %p184 = scmp.lt.s32.totalorder %s181, 17
        %s185 = scalar_select %p184, %s181, 17
        %s186 = smul.addr %s185, 3
        %s187 = smul.addr %s183, 54
        %s188 = sadd.s32 %s186, %s187
        %s189 = smul.addr %s188, 4
        %s190 = scalar_lea.vmem %s1, %s189
        %s191 = sadd.s32 %s17, 1
        %s192 = smul.u32 %s191, 8
        %s193 = smul.u32 2, %s192
      $region28: #{upconv_pallas.2} parent=19 // pred_fallthru
        _
    $region20: #{upconv_pallas.2} parent=5 // pred_fallthru
      _
    %p194 = scmp.le.s32.totalorder 1, %s9
    %p195 = scmp.lt.s32.totalorder %s9, 3
    %p196 = pnand %p194, %p195
    %p197 = pneg %p196
    // Predicated region
    $region29: #{upconv_pallas.2} parent=5 // pred_check
      _
    $region30: #{upconv_pallas.2} parent=5 // pred_check_branch
      %199 = sbr.rel (%p196) target = $region32
    $region31: #{upconv_pallas.2} parent=5 // pred_region
      %s200 = ssub.s32 %s9, 1
      %s201 = smul.u32 16, %s19
      %s202 = ssub.s32 18, %s201
      %p203 = scmp.lt.s32.totalorder %s202, 16
      %s204 = scalar_select %p203, %s202, 16
      %s205 = smul.u32 64, %s204
      %s206 = smul.u32 %s205, 3
      %p207 = scmp.lt.s32.totalorder %s18, 1
      %s208 = scalar_select %p207, %s18, 1
      %p209 = scmp.lt.s32.totalorder %s201, 17
      %s210 = scalar_select %p209, %s201, 17
      %s211 = smul.addr %s210, 3
      %s212 = smul.addr %s208, 54
      %s213 = sadd.s32 %s211, %s212
      %s214 = smul.addr %s213, 4
      %s215 = scalar_lea.vmem %s0, %s214
      %p216 = pneg %p49
      %p217 = pneg %p46
      %s218 = sadd.s32 %s19, 1
      %s219 = smul.u32 %s218, 8
      %s220 = smul.u32 2, %s219
      %p221 = scmp.lt.s32.totalorder %s18, 1
      %s222 = scalar_select %p221, %s18, 1
      %p223 = scmp.lt.s32.totalorder %s220, 17
      %s224 = scalar_select %p223, %s220, 17
      %s225 = smul.addr %s224, 3
      %s226 = smul.addr %s222, 54
      %s227 = sadd.s32 %s225, %s226
      %s228 = smul.addr %s227, 4
      %s229 = scalar_lea.vmem %s1, %s228
      %p230 = pneg %p81
      %p231 = pneg %p78
      %p232 = pneg %p102
      %p233 = pneg %p99
      %p234 = pneg %p130
      %p235 = pneg %p127
      %p236 = scmp.lt.s32.totalorder %s18, 1
      %s237 = scalar_select %p236, %s18, 1
      %p238 = scmp.lt.s32.totalorder %s19, 0
      %s239 = scalar_select %p238, %s19, 0
      %s240 = sadd.s32 %s239, %s237
      %s241 = smul.addr %s240, 2
      %s242 = scalar_lea.vmem %s3, %s241
      %s243 = smul.u32 16, %s19
      %s244 = ssub.s32 18, %s243
      %p245 = scmp.lt.s32.totalorder %s244, 16
      %s246 = scalar_select %p245, %s244, 16
      %s247 = smul.u32 64, %s246
      %s248 = smul.u32 %s247, 3
      %p249 = scmp.lt.s32.totalorder %s18, 1
      %s250 = scalar_select %p249, %s18, 1
      %p251 = scmp.lt.s32.totalorder %s243, 17
      %s252 = scalar_select %p251, %s243, 17
      %s253 = smul.addr %s252, 3
      %s254 = smul.addr %s250, 54
      %s255 = sadd.s32 %s253, %s254
      %s256 = smul.addr %s255, 4
      %s257 = scalar_lea.vmem %s0, %s256
      %s258 = smul.u32 16, %s19
      %s259 = ssub.s32 18, %s258
      %p260 = scmp.lt.s32.totalorder %s259, 16
      %s261 = scalar_select %p260, %s259, 16
      %s262 = smul.u32 64, %s261
      %s263 = smul.u32 %s262, 3
      %s264 = sadd.s32 %s19, 1
      %s265 = smul.u32 %s264, 8
      %s266 = smul.u32 2, %s265
      %p267 = scmp.lt.s32.totalorder %s18, 1
      %s268 = scalar_select %p267, %s18, 1
      %p269 = scmp.lt.s32.totalorder %s266, 17
      %s270 = scalar_select %p269, %s266, 17
      %s271 = smul.addr %s270, 3
      %s272 = smul.addr %s268, 54
      %s273 = sadd.s32 %s271, %s272
      %s274 = smul.addr %s273, 4
      %s275 = scalar_lea.vmem %s1, %s274
      %s276 = sadd.s32 %s19, 1
      %s277 = smul.u32 %s276, 8
      %s278 = smul.u32 2, %s277
      %p279 = scmp.lt.s32.totalorder %s18, 1
      %s280 = scalar_select %p279, %s18, 1
      %p281 = scmp.lt.s32.totalorder %s19, 0
      %s282 = scalar_select %p281, %s19, 0
      %s283 = sadd.s32 %s282, %s280
      %s284 = smul.addr %s283, 2
      %s285 = scalar_lea.vmem %s3, %s284
      %v287 = vld [vmem:[%s257] sm:$0xf]
      %v288 = vld [vmem:[%s257 + $0x4] sm:$0xf]
      %v289 = vld [vmem:[%s257 + $0x8] sm:$0x1]
      %v290 = vld [vmem:[%s257 + $0xc] sm:$0xf]
      %v291 = vld [vmem:[%s257 + $0x10] sm:$0xf]
      %v292 = vld [vmem:[%s257 + $0x14] sm:$0x1]
      %v293 = vld [vmem:[%s257 + $0x18] sm:$0xf]
      %v294 = vld [vmem:[%s257 + $0x1c] sm:$0xf]
      %v295 = vld [vmem:[%s257 + $0x20] sm:$0x1]
      %v296 = vld [vmem:[%s257 + $0x24] sm:$0xf]
      %v297 = vld [vmem:[%s257 + $0x28] sm:$0xf]
      %v298 = vld [vmem:[%s257 + $0x2c] sm:$0x1]
      %v299 = vld [vmem:[%s257 + $0x30] sm:$0xf]
      %v300 = vld [vmem:[%s257 + $0x34] sm:$0xf]
      %v301 = vld [vmem:[%s257 + $0x38] sm:$0x1]
      %v302 = vld [vmem:[%s257 + $0x3c] sm:$0xf]
      %v303 = vld [vmem:[%s257 + $0x40] sm:$0xf]
      %v304 = vld [vmem:[%s257 + $0x44] sm:$0x1]
      %v305 = vld [vmem:[%s257 + $0x48] sm:$0xf]
      %v306 = vld [vmem:[%s257 + $0x4c] sm:$0xf]
      %v307 = vld [vmem:[%s257 + $0x50] sm:$0x1]
      %v308 = vld [vmem:[%s257 + $0x54] sm:$0xf]
      %v309 = vld [vmem:[%s257 + $0x58] sm:$0xf]
      %v310 = vld [vmem:[%s257 + $0x5c] sm:$0x1]
      %v311 = vld [vmem:[%s257 + $0x60] sm:$0xf]
      %v312 = vld [vmem:[%s257 + $0x64] sm:$0xf]
      %v313 = vld [vmem:[%s257 + $0x68] sm:$0x1]
      %v314 = vld [vmem:[%s257 + $0x6c] sm:$0xf]
      %v315 = vld [vmem:[%s257 + $0x70] sm:$0xf]
      %v316 = vld [vmem:[%s257 + $0x74] sm:$0x1]
      %v317 = vld [vmem:[%s257 + $0x78] sm:$0xf]
      %v318 = vld [vmem:[%s257 + $0x7c] sm:$0xf]
      %v319 = vld [vmem:[%s257 + $0x80] sm:$0x1]
      %v320 = vld [vmem:[%s257 + $0x84] sm:$0xf]
      %v321 = vld [vmem:[%s257 + $0x88] sm:$0xf]
      %v322 = vld [vmem:[%s257 + $0x8c] sm:$0x1]
      %v323 = vld [vmem:[%s257 + $0x90] sm:$0xf]
      %v324 = vld [vmem:[%s257 + $0x94] sm:$0xf]
      %v325 = vld [vmem:[%s257 + $0x98] sm:$0x1]
      %v326 = vld [vmem:[%s257 + $0x9c] sm:$0xf]
      %v327 = vld [vmem:[%s257 + $0xa0] sm:$0xf]
      %v328 = vld [vmem:[%s257 + $0xa4] sm:$0x1]
      %v329 = vld [vmem:[%s257 + $0xa8] sm:$0xf]
      %v330 = vld [vmem:[%s257 + $0xac] sm:$0xf]
      %v331 = vld [vmem:[%s257 + $0xb0] sm:$0x1]
      %v332 = vld [vmem:[%s257 + $0xb4] sm:$0xf]
      %v333 = vld [vmem:[%s257 + $0xb8] sm:$0xf]
      %v334 = vld [vmem:[%s257 + $0xbc] sm:$0x1]
      %v335 = vld [vmem:[%s275] sm:$0xf]
      %v336 = vld [vmem:[%s275 + $0x4] sm:$0xf]
      %v337 = vld [vmem:[%s275 + $0x8] sm:$0x1]
      %v338 = vld [vmem:[%s275 + $0xc] sm:$0xf]
      %v339 = vld [vmem:[%s275 + $0x10] sm:$0xf]
      %v340 = vld [vmem:[%s275 + $0x14] sm:$0x1]
      %vm341 = vsmask.f32 3328
      %vm342 = vsmask.f32 7440
      %vm343 = vmor %vm341, %vm342
      %v345 = vshrl.u32 %v287, 16
      %v347 = vrot.slane %v345, 4
      %v348 = vshll.u32 %v287, 16
      %v350 = vrot.slane %v348, 5
      %v351 = vor.u32 %v347, %v350
      %v352 = vrot.slane %v351, 4
      %v354 = vshll.u32 %v288, 16
      %v356 = vrot.slane %v354, 5
      %v357 = vsel %vm343, %v352, %v356
      %v358 = vshrl.u32 %v288, 16
      %v360 = vrot.slane %v358, 4
      %v361 = vor.u32 %v360, %v356
      %v362 = vrot.slane %v361, 4
      %v364 = vshll.u32 %v289, 16
      %v366 = vrot.slane %v364, 5
      %v367 = vsel %vm343, %v362, %v366
      %v369 = vshrl.u32 %v290, 16
      %v371 = vrot.slane %v369, 4
      %v372 = vshll.u32 %v290, 16
      %v374 = vrot.slane %v372, 5
      %v375 = vor.u32 %v371, %v374
      %v376 = vrot.slane %v375, 4
      %v378 = vshll.u32 %v291, 16
      %v380 = vrot.slane %v378, 5
      %v381 = vsel %vm343, %v376, %v380
      %v382 = vshrl.u32 %v291, 16
      %v384 = vrot.slane %v382, 4
      %v385 = vor.u32 %v384, %v380
      %v386 = vrot.slane %v385, 4
      %v388 = vshll.u32 %v292, 16
      %v390 = vrot.slane %v388, 5
      %v391 = vsel %vm343, %v386, %v390
      %v393 = vshrl.u32 %v293, 16
      %v395 = vrot.slane %v393, 4
      %v396 = vshll.u32 %v293, 16
      %v398 = vrot.slane %v396, 5
      %v399 = vor.u32 %v395, %v398
      %v400 = vrot.slane %v399, 4
      %v402 = vshll.u32 %v294, 16
      %v404 = vrot.slane %v402, 5
      %v405 = vsel %vm343, %v400, %v404
      %v406 = vshrl.u32 %v294, 16
      %v408 = vrot.slane %v406, 4
      %v409 = vor.u32 %v408, %v404
      %v410 = vrot.slane %v409, 4
      %v412 = vshll.u32 %v295, 16
      %v414 = vrot.slane %v412, 5
      %v415 = vsel %vm343, %v410, %v414
      %v417 = vshrl.u32 %v296, 16
      %v419 = vrot.slane %v417, 4
      %v420 = vshll.u32 %v296, 16
      %v422 = vrot.slane %v420, 5
      %v423 = vor.u32 %v419, %v422
      %v424 = vrot.slane %v423, 4
      %v426 = vshll.u32 %v297, 16
      %v428 = vrot.slane %v426, 5
      %v429 = vsel %vm343, %v424, %v428
      %v430 = vshrl.u32 %v297, 16
      %v432 = vrot.slane %v430, 4
      %v433 = vor.u32 %v432, %v428
      %v434 = vrot.slane %v433, 4
      %v436 = vshll.u32 %v298, 16
      %v438 = vrot.slane %v436, 5
      %v439 = vsel %vm343, %v434, %v438
      %v441 = vshrl.u32 %v299, 16
      %v443 = vrot.slane %v441, 4
      %v444 = vshll.u32 %v299, 16
      %v446 = vrot.slane %v444, 5
      %v447 = vor.u32 %v443, %v446
      %v448 = vrot.slane %v447, 4
      %v450 = vshll.u32 %v300, 16
      %v452 = vrot.slane %v450, 5
      %v453 = vsel %vm343, %v448, %v452
      %v454 = vshrl.u32 %v300, 16
      %v456 = vrot.slane %v454, 4
      %v457 = vor.u32 %v456, %v452
      %v458 = vrot.slane %v457, 4
      %v460 = vshll.u32 %v301, 16
      %v462 = vrot.slane %v460, 5
      %v463 = vsel %vm343, %v458, %v462
      %v465 = vshrl.u32 %v302, 16
      %v467 = vrot.slane %v465, 4
      %v468 = vshll.u32 %v302, 16
      %v470 = vrot.slane %v468, 5
      %v471 = vor.u32 %v467, %v470
      %v472 = vrot.slane %v471, 4
      %v474 = vshll.u32 %v303, 16
      %v476 = vrot.slane %v474, 5
      %v477 = vsel %vm343, %v472, %v476
      %v478 = vshrl.u32 %v303, 16
      %v480 = vrot.slane %v478, 4
      %v481 = vor.u32 %v480, %v476
      %v482 = vrot.slane %v481, 4
      %v484 = vshll.u32 %v304, 16
      %v486 = vrot.slane %v484, 5
      %v487 = vsel %vm343, %v482, %v486
      %v489 = vshrl.u32 %v305, 16
      %v491 = vrot.slane %v489, 4
      %v492 = vshll.u32 %v305, 16
      %v494 = vrot.slane %v492, 5
      %v495 = vor.u32 %v491, %v494
      %v496 = vrot.slane %v495, 4
      %v498 = vshll.u32 %v306, 16
      %v500 = vrot.slane %v498, 5
      %v501 = vsel %vm343, %v496, %v500
      %v502 = vshrl.u32 %v306, 16
      %v504 = vrot.slane %v502, 4
      %v505 = vor.u32 %v504, %v500
      %v506 = vrot.slane %v505, 4
      %v508 = vshll.u32 %v307, 16
      %v510 = vrot.slane %v508, 5
      %v511 = vsel %vm343, %v506, %v510
      %v513 = vshrl.u32 %v308, 16
      %v515 = vrot.slane %v513, 4
      %v516 = vshll.u32 %v308, 16
      %v518 = vrot.slane %v516, 5
      %v519 = vor.u32 %v515, %v518
      %v520 = vrot.slane %v519, 4
      %v522 = vshll.u32 %v309, 16
      %v524 = vrot.slane %v522, 5
      %v525 = vsel %vm343, %v520, %v524
      %v526 = vshrl.u32 %v309, 16
      %v528 = vrot.slane %v526, 4
      %v529 = vor.u32 %v528, %v524
      %v530 = vrot.slane %v529, 4
      %v532 = vshll.u32 %v310, 16
      %v534 = vrot.slane %v532, 5
      %v535 = vsel %vm343, %v530, %v534
      %v537 = vshrl.u32 %v311, 16
      %v539 = vrot.slane %v537, 4
      %v540 = vshll.u32 %v311, 16
      %v542 = vrot.slane %v540, 5
      %v543 = vor.u32 %v539, %v542
      %v544 = vrot.slane %v543, 4
      %v546 = vshll.u32 %v312, 16
      %v548 = vrot.slane %v546, 5
      %v549 = vsel %vm343, %v544, %v548
      %v550 = vshrl.u32 %v312, 16
      %v552 = vrot.slane %v550, 4
      %v553 = vor.u32 %v552, %v548
      %v554 = vrot.slane %v553, 4
      %v556 = vshll.u32 %v313, 16
      %v558 = vrot.slane %v556, 5
      %v559 = vsel %vm343, %v554, %v558
      %v561 = vshrl.u32 %v314, 16
      %v563 = vrot.slane %v561, 4
      %v564 = vshll.u32 %v314, 16
      %v566 = vrot.slane %v564, 5
      %v567 = vor.u32 %v563, %v566
      %v568 = vrot.slane %v567, 4
      %v570 = vshll.u32 %v315, 16
      %v572 = vrot.slane %v570, 5
      %v573 = vsel %vm343, %v568, %v572
      %v574 = vshrl.u32 %v315, 16
      %v576 = vrot.slane %v574, 4
      %v577 = vor.u32 %v576, %v572
      %v578 = vrot.slane %v577, 4
      %v580 = vshll.u32 %v316, 16
      %v582 = vrot.slane %v580, 5
      %v583 = vsel %vm343, %v578, %v582
      %v585 = vshrl.u32 %v317, 16
      %v587 = vrot.slane %v585, 4
      %v588 = vshll.u32 %v317, 16
      %v590 = vrot.slane %v588, 5
      %v591 = vor.u32 %v587, %v590
      %v592 = vrot.slane %v591, 4
      %v594 = vshll.u32 %v318, 16
      %v596 = vrot.slane %v594, 5
      %v597 = vsel %vm343, %v592, %v596
      %v598 = vshrl.u32 %v318, 16
      %v600 = vrot.slane %v598, 4
      %v601 = vor.u32 %v600, %v596
      %v602 = vrot.slane %v601, 4
      %v604 = vshll.u32 %v319, 16
      %v606 = vrot.slane %v604, 5
      %v607 = vsel %vm343, %v602, %v606
      %v609 = vshrl.u32 %v320, 16
      %v611 = vrot.slane %v609, 4
      %v612 = vshll.u32 %v320, 16
      %v614 = vrot.slane %v612, 5
      %v615 = vor.u32 %v611, %v614
      %v616 = vrot.slane %v615, 4
      %v618 = vshll.u32 %v321, 16
      %v620 = vrot.slane %v618, 5
      %v621 = vsel %vm343, %v616, %v620
      %v622 = vshrl.u32 %v321, 16
      %v624 = vrot.slane %v622, 4
      %v625 = vor.u32 %v624, %v620
      %v626 = vrot.slane %v625, 4
      %v628 = vshll.u32 %v322, 16
      %v630 = vrot.slane %v628, 5
      %v631 = vsel %vm343, %v626, %v630
      %v633 = vshrl.u32 %v323, 16
      %v635 = vrot.slane %v633, 4
      %v636 = vshll.u32 %v323, 16
      %v638 = vrot.slane %v636, 5
      %v639 = vor.u32 %v635, %v638
      %v640 = vrot.slane %v639, 4
      %v642 = vshll.u32 %v324, 16
      %v644 = vrot.slane %v642, 5
      %v645 = vsel %vm343, %v640, %v644
      %v646 = vshrl.u32 %v324, 16
      %v648 = vrot.slane %v646, 4
      %v649 = vor.u32 %v648, %v644
      %v650 = vrot.slane %v649, 4
      %v652 = vshll.u32 %v325, 16
      %v654 = vrot.slane %v652, 5
      %v655 = vsel %vm343, %v650, %v654
      %v657 = vshrl.u32 %v326, 16
      %v659 = vrot.slane %v657, 4
      %v660 = vshll.u32 %v326, 16
      %v662 = vrot.slane %v660, 5
      %v663 = vor.u32 %v659, %v662
      %v664 = vrot.slane %v663, 4
      %v666 = vshll.u32 %v327, 16
      %v668 = vrot.slane %v666, 5
      %v669 = vsel %vm343, %v664, %v668
      %v670 = vshrl.u32 %v327, 16
      %v672 = vrot.slane %v670, 4
      %v673 = vor.u32 %v672, %v668
      %v674 = vrot.slane %v673, 4
      %v676 = vshll.u32 %v328, 16
      %v678 = vrot.slane %v676, 5
      %v679 = vsel %vm343, %v674, %v678
      %v681 = vshrl.u32 %v329, 16
      %v683 = vrot.slane %v681, 4
      %v684 = vshll.u32 %v329, 16
      %v686 = vrot.slane %v684, 5
      %v687 = vor.u32 %v683, %v686
      %v688 = vrot.slane %v687, 4
      %v690 = vshll.u32 %v330, 16
      %v692 = vrot.slane %v690, 5
      %v693 = vsel %vm343, %v688, %v692
      %v694 = vshrl.u32 %v330, 16
      %v696 = vrot.slane %v694, 4
      %v697 = vor.u32 %v696, %v692
      %v698 = vrot.slane %v697, 4
      %v700 = vshll.u32 %v331, 16
      %v702 = vrot.slane %v700, 5
      %v703 = vsel %vm343, %v698, %v702
      %v705 = vshrl.u32 %v332, 16
      %v707 = vrot.slane %v705, 4
      %v708 = vshll.u32 %v332, 16
      %v710 = vrot.slane %v708, 5
      %v711 = vor.u32 %v707, %v710
      %v712 = vrot.slane %v711, 4
      %v714 = vshll.u32 %v333, 16
      %v716 = vrot.slane %v714, 5
      %v717 = vsel %vm343, %v712, %v716
      %v718 = vshrl.u32 %v333, 16
      %v720 = vrot.slane %v718, 4
      %v721 = vor.u32 %v720, %v716
      %v722 = vrot.slane %v721, 4
      %v724 = vshll.u32 %v334, 16
      %v726 = vrot.slane %v724, 5
      %v727 = vsel %vm343, %v722, %v726
      %vm776 = vcmask 1042432
      %vm777 = vcmask 1046532
      %vm778 = vmor %vm776, %vm777
      %v779 = vrot.slane %v287, 5
      %v780 = vrot.slane %v779, 4
      %v781 = vrot.slane %v288, 5
      %v782 = vsel %vm778, %v780, %v781
      %v783 = vrot.slane %v781, 4
      %v784 = vrot.slane %v289, 5
      %v785 = vsel %vm778, %v783, %v784
      %v786 = vrot.slane %v290, 5
      %v787 = vrot.slane %v786, 4
      %v788 = vrot.slane %v291, 5
      %v789 = vsel %vm778, %v787, %v788
      %v790 = vrot.slane %v788, 4
      %v791 = vrot.slane %v292, 5
      %v792 = vsel %vm778, %v790, %v791
      %v793 = vrot.slane %v293, 5
      %v794 = vrot.slane %v793, 4
      %v795 = vrot.slane %v294, 5
      %v796 = vsel %vm778, %v794, %v795
      %v797 = vrot.slane %v795, 4
      %v798 = vrot.slane %v295, 5
      %v799 = vsel %vm778, %v797, %v798
      %v800 = vrot.slane %v296, 5
      %v801 = vrot.slane %v800, 4
      %v802 = vrot.slane %v297, 5
      %v803 = vsel %vm778, %v801, %v802
      %v804 = vrot.slane %v802, 4
      %v805 = vrot.slane %v298, 5
      %v806 = vsel %vm778, %v804, %v805
      %v807 = vrot.slane %v299, 5
      %v808 = vrot.slane %v807, 4
      %v809 = vrot.slane %v300, 5
      %v810 = vsel %vm778, %v808, %v809
      %v811 = vrot.slane %v809, 4
      %v812 = vrot.slane %v301, 5
      %v813 = vsel %vm778, %v811, %v812
      %v814 = vrot.slane %v302, 5
      %v815 = vrot.slane %v814, 4
      %v816 = vrot.slane %v303, 5
      %v817 = vsel %vm778, %v815, %v816
      %v818 = vrot.slane %v816, 4
      %v819 = vrot.slane %v304, 5
      %v820 = vsel %vm778, %v818, %v819
      %v821 = vrot.slane %v305, 5
      %v822 = vrot.slane %v821, 4
      %v823 = vrot.slane %v306, 5
      %v824 = vsel %vm778, %v822, %v823
      %v825 = vrot.slane %v823, 4
      %v826 = vrot.slane %v307, 5
      %v827 = vsel %vm778, %v825, %v826
      %v828 = vrot.slane %v308, 5
      %v829 = vrot.slane %v828, 4
      %v830 = vrot.slane %v309, 5
      %v831 = vsel %vm778, %v829, %v830
      %v832 = vrot.slane %v830, 4
      %v833 = vrot.slane %v310, 5
      %v834 = vsel %vm778, %v832, %v833
      %v835 = vrot.slane %v311, 5
      %v836 = vrot.slane %v835, 4
      %v837 = vrot.slane %v312, 5
      %v838 = vsel %vm778, %v836, %v837
      %v839 = vrot.slane %v837, 4
      %v840 = vrot.slane %v313, 5
      %v841 = vsel %vm778, %v839, %v840
      %v842 = vrot.slane %v314, 5
      %v843 = vrot.slane %v842, 4
      %v844 = vrot.slane %v315, 5
      %v845 = vsel %vm778, %v843, %v844
      %v846 = vrot.slane %v844, 4
      %v847 = vrot.slane %v316, 5
      %v848 = vsel %vm778, %v846, %v847
      %v849 = vrot.slane %v317, 5
      %v850 = vrot.slane %v849, 4
      %v851 = vrot.slane %v318, 5
      %v852 = vsel %vm778, %v850, %v851
      %v853 = vrot.slane %v851, 4
      %v854 = vrot.slane %v319, 5
      %v855 = vsel %vm778, %v853, %v854
      %v856 = vrot.slane %v320, 5
      %v857 = vrot.slane %v856, 4
      %v858 = vrot.slane %v321, 5
      %v859 = vsel %vm778, %v857, %v858
      %v860 = vrot.slane %v858, 4
      %v861 = vrot.slane %v322, 5
      %v862 = vsel %vm778, %v860, %v861
      %v863 = vrot.slane %v323, 5
      %v864 = vrot.slane %v863, 4
      %v865 = vrot.slane %v324, 5
      %v866 = vsel %vm778, %v864, %v865
      %v867 = vrot.slane %v865, 4
      %v868 = vrot.slane %v325, 5
      %v869 = vsel %vm778, %v867, %v868
      %v870 = vrot.slane %v326, 5
      %v871 = vrot.slane %v870, 4
      %v872 = vrot.slane %v327, 5
      %v873 = vsel %vm778, %v871, %v872
      %v874 = vrot.slane %v872, 4
      %v875 = vrot.slane %v328, 5
      %v876 = vsel %vm778, %v874, %v875
      %v877 = vrot.slane %v329, 5
      %v878 = vrot.slane %v877, 4
      %v879 = vrot.slane %v330, 5
      %v880 = vsel %vm778, %v878, %v879
      %v881 = vrot.slane %v879, 4
      %v882 = vrot.slane %v331, 5
      %v883 = vsel %vm778, %v881, %v882
      %v884 = vrot.slane %v332, 5
      %v885 = vrot.slane %v884, 4
      %v886 = vrot.slane %v333, 5
      %v887 = vsel %vm778, %v885, %v886
      %v888 = vrot.slane %v886, 4
      %v889 = vrot.slane %v334, 5
      %v890 = vsel %vm778, %v888, %v889
      %v892 = vshrl.u32 %v335, 16
      %v894 = vrot.slane %v892, 4
      %v895 = vshll.u32 %v335, 16
      %v897 = vrot.slane %v895, 5
      %v898 = vor.u32 %v894, %v897
      %v899 = vrot.slane %v898, 4
      %v901 = vshll.u32 %v336, 16
      %v903 = vrot.slane %v901, 5
      %v904 = vsel %vm343, %v899, %v903
      %v905 = vshrl.u32 %v336, 16
      %v907 = vrot.slane %v905, 4
      %v908 = vor.u32 %v907, %v903
      %v909 = vrot.slane %v908, 4
      %v911 = vshll.u32 %v337, 16
      %v913 = vrot.slane %v911, 5
      %v914 = vsel %vm343, %v909, %v913
      %v918 = vrot.slane %v335, 5
      %v919 = vrot.slane %v918, 4
      %v920 = vrot.slane %v336, 5
      %v921 = vsel %vm778, %v919, %v920
      %v922 = vrot.slane %v920, 4
      %v923 = vrot.slane %v337, 5
      %v924 = vsel %vm778, %v922, %v923
      %v926 = vshrl.u32 %v338, 16
      %v928 = vrot.slane %v926, 4
      %v929 = vshll.u32 %v338, 16
      %v931 = vrot.slane %v929, 5
      %v932 = vor.u32 %v928, %v931
      %v933 = vrot.slane %v932, 4
      %v935 = vshll.u32 %v339, 16
      %v937 = vrot.slane %v935, 5
      %v938 = vsel %vm343, %v933, %v937
      %v939 = vshrl.u32 %v339, 16
      %v941 = vrot.slane %v939, 4
      %v942 = vor.u32 %v941, %v937
      %v943 = vrot.slane %v942, 4
      %v945 = vshll.u32 %v340, 16
      %v947 = vrot.slane %v945, 5
      %v948 = vsel %vm343, %v943, %v947
      %v952 = vrot.slane %v338, 5
      %v953 = vrot.slane %v952, 4
      %v954 = vrot.slane %v339, 5
      %v955 = vsel %vm778, %v953, %v954
      %v956 = vrot.slane %v954, 4
      %v957 = vrot.slane %v340, 5
      %v958 = vsel %vm778, %v956, %v957
      %v959 = vunpack.c.l.b16 %v287
      %v960 = vunpack.c.l.b16 %v288
      %v961 = vunpack.c.l.b16 %v290
      %v962 = vunpack.c.l.b16 %v291
      %v963 = vunpack.c.l.b16 %v293
      %v964 = vunpack.c.l.b16 %v294
      %v965 = vunpack.c.l.b16 %v296
      %v966 = vunpack.c.l.b16 %v297
      %v967 = vunpack.c.l.b16 %v299
      %v968 = vunpack.c.l.b16 %v300
      %v969 = vunpack.c.l.b16 %v302
      %v970 = vunpack.c.l.b16 %v303
      %v971 = vunpack.c.l.b16 %v305
      %v972 = vunpack.c.l.b16 %v306
      %v973 = vunpack.c.l.b16 %v308
      %v974 = vunpack.c.l.b16 %v309
      %v975 = vunpack.c.l.b16 %v311
      %v976 = vunpack.c.l.b16 %v312
      %v977 = vunpack.c.l.b16 %v314
      %v978 = vunpack.c.l.b16 %v315
      %v979 = vunpack.c.l.b16 %v317
      %v980 = vunpack.c.l.b16 %v318
      %v981 = vunpack.c.l.b16 %v320
      %v982 = vunpack.c.l.b16 %v321
      %v983 = vunpack.c.l.b16 %v323
      %v984 = vunpack.c.l.b16 %v324
      %v985 = vunpack.c.l.b16 %v326
      %v986 = vunpack.c.l.b16 %v327
      %v987 = vunpack.c.l.b16 %v329
      %v988 = vunpack.c.l.b16 %v330
      %v989 = vunpack.c.l.b16 %v332
      %v990 = vunpack.c.l.b16 %v333
      %v991 = vpack.c.b16 %v960, %v959
      %v992 = vpack.c.b16 %v962, %v961
      %v993 = vpack.c.b16 %v964, %v963
      %v994 = vpack.c.b16 %v966, %v965
      %v995 = vpack.c.b16 %v968, %v967
      %v996 = vpack.c.b16 %v970, %v969
      %v997 = vpack.c.b16 %v972, %v971
      %v998 = vpack.c.b16 %v974, %v973
      %v999 = vpack.c.b16 %v976, %v975
      %v1000 = vpack.c.b16 %v978, %v977
      %v1001 = vpack.c.b16 %v980, %v979
      %v1002 = vpack.c.b16 %v982, %v981
      %v1003 = vpack.c.b16 %v984, %v983
      %v1004 = vpack.c.b16 %v986, %v985
      %v1005 = vpack.c.b16 %v988, %v987
      %v1006 = vpack.c.b16 %v990, %v989
      %v1007 = vunpack.c.l.b16 %v357
      %v1008 = vunpack.c.l.b16 %v367
      %v1009 = vunpack.c.l.b16 %v381
      %v1010 = vunpack.c.l.b16 %v391
      %v1011 = vunpack.c.l.b16 %v405
      %v1012 = vunpack.c.l.b16 %v415
      %v1013 = vunpack.c.l.b16 %v429
      %v1014 = vunpack.c.l.b16 %v439
      %v1015 = vunpack.c.l.b16 %v453
      %v1016 = vunpack.c.l.b16 %v463
      %v1017 = vunpack.c.l.b16 %v477
      %v1018 = vunpack.c.l.b16 %v487
      %v1019 = vunpack.c.l.b16 %v501
      %v1020 = vunpack.c.l.b16 %v511
      %v1021 = vunpack.c.l.b16 %v525
      %v1022 = vunpack.c.l.b16 %v535
      %v1023 = vunpack.c.l.b16 %v549
      %v1024 = vunpack.c.l.b16 %v559
      %v1025 = vunpack.c.l.b16 %v573
      %v1026 = vunpack.c.l.b16 %v583
      %v1027 = vunpack.c.l.b16 %v597
      %v1028 = vunpack.c.l.b16 %v607
      %v1029 = vunpack.c.l.b16 %v621
      %v1030 = vunpack.c.l.b16 %v631
      %v1031 = vunpack.c.l.b16 %v645
      %v1032 = vunpack.c.l.b16 %v655
      %v1033 = vunpack.c.l.b16 %v669
      %v1034 = vunpack.c.l.b16 %v679
      %v1035 = vunpack.c.l.b16 %v693
      %v1036 = vunpack.c.l.b16 %v703
      %v1037 = vunpack.c.l.b16 %v717
      %v1038 = vunpack.c.l.b16 %v727
      %v1039 = vpack.c.b16 %v1008, %v1007
      %v1040 = vpack.c.b16 %v1010, %v1009
      %v1041 = vpack.c.b16 %v1012, %v1011
      %v1042 = vpack.c.b16 %v1014, %v1013
      %v1043 = vpack.c.b16 %v1016, %v1015
      %v1044 = vpack.c.b16 %v1018, %v1017
      %v1045 = vpack.c.b16 %v1020, %v1019
      %v1046 = vpack.c.b16 %v1022, %v1021
      %v1047 = vpack.c.b16 %v1024, %v1023
      %v1048 = vpack.c.b16 %v1026, %v1025
      %v1049 = vpack.c.b16 %v1028, %v1027
      %v1050 = vpack.c.b16 %v1030, %v1029
      %v1051 = vpack.c.b16 %v1032, %v1031
      %v1052 = vpack.c.b16 %v1034, %v1033
      %v1053 = vpack.c.b16 %v1036, %v1035
      %v1054 = vpack.c.b16 %v1038, %v1037
      %1055 = vrot.lane.b32.xlu0 %v1039, 4
      %v1056 = vpop.permute.xlu0 %1055
      %1057 = vrot.lane.b32.xlu0 %v1040, 4
      %v1058 = vpop.permute.xlu0 %1057
      %1059 = vrot.lane.b32.xlu0 %v1041, 4
      %v1060 = vpop.permute.xlu0 %1059
      %1061 = vrot.lane.b32.xlu0 %v1042, 4
      %v1062 = vpop.permute.xlu0 %1061
      %1063 = vrot.lane.b32.xlu0 %v1043, 4
      %v1064 = vpop.permute.xlu0 %1063
      %1065 = vrot.lane.b32.xlu0 %v1044, 4
      %v1066 = vpop.permute.xlu0 %1065
      %1067 = vrot.lane.b32.xlu0 %v1045, 4
      %v1068 = vpop.permute.xlu0 %1067
      %1069 = vrot.lane.b32.xlu0 %v1046, 4
      %v1070 = vpop.permute.xlu0 %1069
      %1071 = vrot.lane.b32.xlu0 %v1047, 4
      %v1072 = vpop.permute.xlu0 %1071
      %1073 = vrot.lane.b32.xlu0 %v1048, 4
      %v1074 = vpop.permute.xlu0 %1073
      %1075 = vrot.lane.b32.xlu0 %v1049, 4
      %v1076 = vpop.permute.xlu0 %1075
      %1077 = vrot.lane.b32.xlu0 %v1050, 4
      %v1078 = vpop.permute.xlu0 %1077
      %1079 = vrot.lane.b32.xlu0 %v1051, 4
      %v1080 = vpop.permute.xlu0 %1079
      %1081 = vrot.lane.b32.xlu0 %v1052, 4
      %v1082 = vpop.permute.xlu0 %1081
      %1083 = vrot.lane.b32.xlu0 %v1053, 4
      %v1084 = vpop.permute.xlu0 %1083
      %1085 = vrot.lane.b32.xlu0 %v1054, 4
      %v1086 = vpop.permute.xlu0 %1085
      %v1087 = vunpack.c.l.b16 %v782
      %v1088 = vunpack.c.l.b16 %v785
      %v1089 = vunpack.c.l.b16 %v789
      %v1090 = vunpack.c.l.b16 %v792
      %v1091 = vunpack.c.l.b16 %v796
      %v1092 = vunpack.c.l.b16 %v799
      %v1093 = vunpack.c.l.b16 %v803
      %v1094 = vunpack.c.l.b16 %v806
      %v1095 = vunpack.c.l.b16 %v810
      %v1096 = vunpack.c.l.b16 %v813
      %v1097 = vunpack.c.l.b16 %v817
      %v1098 = vunpack.c.l.b16 %v820
      %v1099 = vunpack.c.l.b16 %v824
      %v1100 = vunpack.c.l.b16 %v827
      %v1101 = vunpack.c.l.b16 %v831
      %v1102 = vunpack.c.l.b16 %v834
      %v1103 = vunpack.c.l.b16 %v838
      %v1104 = vunpack.c.l.b16 %v841
      %v1105 = vunpack.c.l.b16 %v845
      %v1106 = vunpack.c.l.b16 %v848
      %v1107 = vunpack.c.l.b16 %v852
      %v1108 = vunpack.c.l.b16 %v855
      %v1109 = vunpack.c.l.b16 %v859
      %v1110 = vunpack.c.l.b16 %v862
      %v1111 = vunpack.c.l.b16 %v866
      %v1112 = vunpack.c.l.b16 %v869
      %v1113 = vunpack.c.l.b16 %v873
      %v1114 = vunpack.c.l.b16 %v876
      %v1115 = vunpack.c.l.b16 %v880
      %v1116 = vunpack.c.l.b16 %v883
      %v1117 = vunpack.c.l.b16 %v887
      %v1118 = vunpack.c.l.b16 %v890
      %v1119 = vpack.c.b16 %v1088, %v1087
      %v1120 = vpack.c.b16 %v1090, %v1089
      %v1121 = vpack.c.b16 %v1092, %v1091
      %v1122 = vpack.c.b16 %v1094, %v1093
      %v1123 = vpack.c.b16 %v1096, %v1095
      %v1124 = vpack.c.b16 %v1098, %v1097
      %v1125 = vpack.c.b16 %v1100, %v1099
      %v1126 = vpack.c.b16 %v1102, %v1101
      %v1127 = vpack.c.b16 %v1104, %v1103
      %v1128 = vpack.c.b16 %v1106, %v1105
      %v1129 = vpack.c.b16 %v1108, %v1107
      %v1130 = vpack.c.b16 %v1110, %v1109
      %v1131 = vpack.c.b16 %v1112, %v1111
      %v1132 = vpack.c.b16 %v1114, %v1113
      %v1133 = vpack.c.b16 %v1116, %v1115
      %v1134 = vpack.c.b16 %v1118, %v1117
      %1135 = vrot.lane.b32.xlu0 %v1119, 8
      %v1136 = vpop.permute.xlu0 %1135
      %1137 = vrot.lane.b32.xlu0 %v1120, 8
      %v1138 = vpop.permute.xlu0 %1137
      %1139 = vrot.lane.b32.xlu0 %v1121, 8
      %v1140 = vpop.permute.xlu0 %1139
      %1141 = vrot.lane.b32.xlu0 %v1122, 8
      %v1142 = vpop.permute.xlu0 %1141
      %1143 = vrot.lane.b32.xlu0 %v1123, 8
      %v1144 = vpop.permute.xlu0 %1143
      %1145 = vrot.lane.b32.xlu0 %v1124, 8
      %v1146 = vpop.permute.xlu0 %1145
      %1147 = vrot.lane.b32.xlu0 %v1125, 8
      %v1148 = vpop.permute.xlu0 %1147
      %1149 = vrot.lane.b32.xlu0 %v1126, 8
      %v1150 = vpop.permute.xlu0 %1149
      %1151 = vrot.lane.b32.xlu0 %v1127, 8
      %v1152 = vpop.permute.xlu0 %1151
      %1153 = vrot.lane.b32.xlu0 %v1128, 8
      %v1154 = vpop.permute.xlu0 %1153
      %1155 = vrot.lane.b32.xlu0 %v1129, 8
      %v1156 = vpop.permute.xlu0 %1155
      %1157 = vrot.lane.b32.xlu0 %v1130, 8
      %v1158 = vpop.permute.xlu0 %1157
      %1159 = vrot.lane.b32.xlu0 %v1131, 8
      %v1160 = vpop.permute.xlu0 %1159
      %1161 = vrot.lane.b32.xlu0 %v1132, 8
      %v1162 = vpop.permute.xlu0 %1161
      %1163 = vrot.lane.b32.xlu0 %v1133, 8
      %v1164 = vpop.permute.xlu0 %1163
      %1165 = vrot.lane.b32.xlu0 %v1134, 8
      %v1166 = vpop.permute.xlu0 %1165
      %v1167 = vunpack.c.l.b16 %v335
      %v1168 = vunpack.c.l.b16 %v336
      %v1169 = vpack.c.b16 %v1168, %v1167
      %1170 = vrot.lane.b32.xlu0 %v992, 12
      %v1171 = vpop.permute.xlu0 %1170
      %1172 = vrot.lane.b32.xlu0 %v993, 12
      %v1173 = vpop.permute.xlu0 %1172
      %1174 = vrot.lane.b32.xlu0 %v994, 12
      %v1175 = vpop.permute.xlu0 %1174
      %1176 = vrot.lane.b32.xlu0 %v995, 12
      %v1177 = vpop.permute.xlu0 %1176
      %1178 = vrot.lane.b32.xlu0 %v996, 12
      %v1179 = vpop.permute.xlu0 %1178
      %1180 = vrot.lane.b32.xlu0 %v997, 12
      %v1181 = vpop.permute.xlu0 %1180
      %1182 = vrot.lane.b32.xlu0 %v998, 12
      %v1183 = vpop.permute.xlu0 %1182
      %1184 = vrot.lane.b32.xlu0 %v999, 12
      %v1185 = vpop.permute.xlu0 %1184
      %1186 = vrot.lane.b32.xlu0 %v1000, 12
      %v1187 = vpop.permute.xlu0 %1186
      %1188 = vrot.lane.b32.xlu0 %v1001, 12
      %v1189 = vpop.permute.xlu0 %1188
      %1190 = vrot.lane.b32.xlu0 %v1002, 12
      %v1191 = vpop.permute.xlu0 %1190
      %1192 = vrot.lane.b32.xlu0 %v1003, 12
      %v1193 = vpop.permute.xlu0 %1192
      %1194 = vrot.lane.b32.xlu0 %v1004, 12
      %v1195 = vpop.permute.xlu0 %1194
      %1196 = vrot.lane.b32.xlu0 %v1005, 12
      %v1197 = vpop.permute.xlu0 %1196
      %1198 = vrot.lane.b32.xlu0 %v1006, 12
      %v1199 = vpop.permute.xlu0 %1198
      %1200 = vrot.lane.b32.xlu0 %v1169, 12
      %v1201 = vpop.permute.xlu0 %1200
      %v1202 = vunpack.c.l.b16 %v904
      %v1203 = vunpack.c.l.b16 %v914
      %v1204 = vpack.c.b16 %v1203, %v1202
      %1205 = vrot.lane.b32.xlu0 %v1040, 16
      %v1206 = vpop.permute.xlu0 %1205
      %1207 = vrot.lane.b32.xlu0 %v1041, 16
      %v1208 = vpop.permute.xlu0 %1207
      %1209 = vrot.lane.b32.xlu0 %v1042, 16
      %v1210 = vpop.permute.xlu0 %1209
      %1211 = vrot.lane.b32.xlu0 %v1043, 16
      %v1212 = vpop.permute.xlu0 %1211
      %1213 = vrot.lane.b32.xlu0 %v1044, 16
      %v1214 = vpop.permute.xlu0 %1213
      %1215 = vrot.lane.b32.xlu0 %v1045, 16
      %v1216 = vpop.permute.xlu0 %1215
      %1217 = vrot.lane.b32.xlu0 %v1046, 16
      %v1218 = vpop.permute.xlu0 %1217
      %1219 = vrot.lane.b32.xlu0 %v1047, 16
      %v1220 = vpop.permute.xlu0 %1219
      %1221 = vrot.lane.b32.xlu0 %v1048, 16
      %v1222 = vpop.permute.xlu0 %1221
      %1223 = vrot.lane.b32.xlu0 %v1049, 16
      %v1224 = vpop.permute.xlu0 %1223
      %1225 = vrot.lane.b32.xlu0 %v1050, 16
      %v1226 = vpop.permute.xlu0 %1225
      %1227 = vrot.lane.b32.xlu0 %v1051, 16
      %v1228 = vpop.permute.xlu0 %1227
      %1229 = vrot.lane.b32.xlu0 %v1052, 16
      %v1230 = vpop.permute.xlu0 %1229
      %1231 = vrot.lane.b32.xlu0 %v1053, 16
      %v1232 = vpop.permute.xlu0 %1231
      %1233 = vrot.lane.b32.xlu0 %v1054, 16
      %v1234 = vpop.permute.xlu0 %1233
      %1235 = vrot.lane.b32.xlu0 %v1204, 16
      %v1236 = vpop.permute.xlu0 %1235
      %v1237 = vunpack.c.l.b16 %v921
      %v1238 = vunpack.c.l.b16 %v924
      %v1239 = vpack.c.b16 %v1238, %v1237
      %1240 = vrot.lane.b32.xlu0 %v1120, 20
      %v1241 = vpop.permute.xlu0 %1240
      %1242 = vrot.lane.b32.xlu0 %v1121, 20
      %v1243 = vpop.permute.xlu0 %1242
      %1244 = vrot.lane.b32.xlu0 %v1122, 20
      %v1245 = vpop.permute.xlu0 %1244
      %1246 = vrot.lane.b32.xlu0 %v1123, 20
      %v1247 = vpop.permute.xlu0 %1246
      %1248 = vrot.lane.b32.xlu0 %v1124, 20
      %v1249 = vpop.permute.xlu0 %1248
      %1250 = vrot.lane.b32.xlu0 %v1125, 20
      %v1251 = vpop.permute.xlu0 %1250
      %1252 = vrot.lane.b32.xlu0 %v1126, 20
      %v1253 = vpop.permute.xlu0 %1252
      %1254 = vrot.lane.b32.xlu0 %v1127, 20
      %v1255 = vpop.permute.xlu0 %1254
      %1256 = vrot.lane.b32.xlu0 %v1128, 20
      %v1257 = vpop.permute.xlu0 %1256
      %1258 = vrot.lane.b32.xlu0 %v1129, 20
      %v1259 = vpop.permute.xlu0 %1258
      %1260 = vrot.lane.b32.xlu0 %v1130, 20
      %v1261 = vpop.permute.xlu0 %1260
      %1262 = vrot.lane.b32.xlu0 %v1131, 20
      %v1263 = vpop.permute.xlu0 %1262
      %1264 = vrot.lane.b32.xlu0 %v1132, 20
      %v1265 = vpop.permute.xlu0 %1264
      %1266 = vrot.lane.b32.xlu0 %v1133, 20
      %v1267 = vpop.permute.xlu0 %1266
      %1268 = vrot.lane.b32.xlu0 %v1134, 20
      %v1269 = vpop.permute.xlu0 %1268
      %1270 = vrot.lane.b32.xlu0 %v1239, 20
      %v1271 = vpop.permute.xlu0 %1270
      %v1272 = vunpack.c.l.b16 %v338
      %v1273 = vunpack.c.l.b16 %v339
      %v1274 = vpack.c.b16 %v1273, %v1272
      %1275 = vrot.lane.b32.xlu0 %v993, 24
      %v1276 = vpop.permute.xlu0 %1275
      %1277 = vrot.lane.b32.xlu0 %v994, 24
      %v1278 = vpop.permute.xlu0 %1277
      %1279 = vrot.lane.b32.xlu0 %v995, 24
      %v1280 = vpop.permute.xlu0 %1279
      %1281 = vrot.lane.b32.xlu0 %v996, 24
      %v1282 = vpop.permute.xlu0 %1281
      %1283 = vrot.lane.b32.xlu0 %v997, 24
      %v1284 = vpop.permute.xlu0 %1283
      %1285 = vrot.lane.b32.xlu0 %v998, 24
      %v1286 = vpop.permute.xlu0 %1285
      %1287 = vrot.lane.b32.xlu0 %v999, 24
      %v1288 = vpop.permute.xlu0 %1287
      %1289 = vrot.lane.b32.xlu0 %v1000, 24
      %v1290 = vpop.permute.xlu0 %1289
      %1291 = vrot.lane.b32.xlu0 %v1001, 24
      %v1292 = vpop.permute.xlu0 %1291
      %1293 = vrot.lane.b32.xlu0 %v1002, 24
      %v1294 = vpop.permute.xlu0 %1293
      %1295 = vrot.lane.b32.xlu0 %v1003, 24
      %v1296 = vpop.permute.xlu0 %1295
      %1297 = vrot.lane.b32.xlu0 %v1004, 24
      %v1298 = vpop.permute.xlu0 %1297
      %1299 = vrot.lane.b32.xlu0 %v1005, 24
      %v1300 = vpop.permute.xlu0 %1299
      %1301 = vrot.lane.b32.xlu0 %v1006, 24
      %v1302 = vpop.permute.xlu0 %1301
      %1303 = vrot.lane.b32.xlu0 %v1169, 24
      %v1304 = vpop.permute.xlu0 %1303
      %1305 = vrot.lane.b32.xlu0 %v1274, 24
      %v1306 = vpop.permute.xlu0 %1305
      %v1307 = vunpack.c.l.b16 %v938
      %v1308 = vunpack.c.l.b16 %v948
      %v1309 = vpack.c.b16 %v1308, %v1307
      %1310 = vrot.lane.b32.xlu0 %v1041, 28
      %v1311 = vpop.permute.xlu0 %1310
      %1312 = vrot.lane.b32.xlu0 %v1042, 28
      %v1313 = vpop.permute.xlu0 %1312
      %1314 = vrot.lane.b32.xlu0 %v1043, 28
      %v1315 = vpop.permute.xlu0 %1314
      %1316 = vrot.lane.b32.xlu0 %v1044, 28
      %v1317 = vpop.permute.xlu0 %1316
      %1318 = vrot.lane.b32.xlu0 %v1045, 28
      %v1319 = vpop.permute.xlu0 %1318
      %1320 = vrot.lane.b32.xlu0 %v1046, 28
      %v1321 = vpop.permute.xlu0 %1320
      %1322 = vrot.lane.b32.xlu0 %v1047, 28
      %v1323 = vpop.permute.xlu0 %1322
      %1324 = vrot.lane.b32.xlu0 %v1048, 28
      %v1325 = vpop.permute.xlu0 %1324
      %1326 = vrot.lane.b32.xlu0 %v1049, 28
      %v1327 = vpop.permute.xlu0 %1326
      %1328 = vrot.lane.b32.xlu0 %v1050, 28
      %v1329 = vpop.permute.xlu0 %1328
      %1330 = vrot.lane.b32.xlu0 %v1051, 28
      %v1331 = vpop.permute.xlu0 %1330
      %1332 = vrot.lane.b32.xlu0 %v1052, 28
      %v1333 = vpop.permute.xlu0 %1332
      %1334 = vrot.lane.b32.xlu0 %v1053, 28
      %v1335 = vpop.permute.xlu0 %1334
      %1336 = vrot.lane.b32.xlu0 %v1054, 28
      %v1337 = vpop.permute.xlu0 %1336
      %1338 = vrot.lane.b32.xlu0 %v1204, 28
      %v1339 = vpop.permute.xlu0 %1338
      %1340 = vrot.lane.b32.xlu0 %v1309, 28
      %v1341 = vpop.permute.xlu0 %1340
      %v1342 = vunpack.c.l.b16 %v955
      %v1343 = vunpack.c.l.b16 %v958
      %v1344 = vpack.c.b16 %v1343, %v1342
      %1345 = vrot.lane.b32.xlu0 %v1121, 32
      %v1346 = vpop.permute.xlu0 %1345
      %1347 = vrot.lane.b32.xlu0 %v1122, 32
      %v1348 = vpop.permute.xlu0 %1347
      %1349 = vrot.lane.b32.xlu0 %v1123, 32
      %v1350 = vpop.permute.xlu0 %1349
      %1351 = vrot.lane.b32.xlu0 %v1124, 32
      %v1352 = vpop.permute.xlu0 %1351
      %1353 = vrot.lane.b32.xlu0 %v1125, 32
      %v1354 = vpop.permute.xlu0 %1353
      %1355 = vrot.lane.b32.xlu0 %v1126, 32
      %v1356 = vpop.permute.xlu0 %1355
      %1357 = vrot.lane.b32.xlu0 %v1127, 32
      %v1358 = vpop.permute.xlu0 %1357
      %1359 = vrot.lane.b32.xlu0 %v1128, 32
      %v1360 = vpop.permute.xlu0 %1359
      %1361 = vrot.lane.b32.xlu0 %v1129, 32
      %v1362 = vpop.permute.xlu0 %1361
      %1363 = vrot.lane.b32.xlu0 %v1130, 32
      %v1364 = vpop.permute.xlu0 %1363
      %1365 = vrot.lane.b32.xlu0 %v1131, 32
      %v1366 = vpop.permute.xlu0 %1365
      %1367 = vrot.lane.b32.xlu0 %v1132, 32
      %v1368 = vpop.permute.xlu0 %1367
      %1369 = vrot.lane.b32.xlu0 %v1133, 32
      %v1370 = vpop.permute.xlu0 %1369
      %1371 = vrot.lane.b32.xlu0 %v1134, 32
      %v1372 = vpop.permute.xlu0 %1371
      %1373 = vrot.lane.b32.xlu0 %v1239, 32
      %v1374 = vpop.permute.xlu0 %1373
      %1375 = vrot.lane.b32.xlu0 %v1344, 32
      %v1376 = vpop.permute.xlu0 %1375
      %vm1377 = vcmask 31744
      %v1380 = vsel %vm1377, %v991, %v1056
      %v1383 = vsel %vm1377, %v992, %v1058
      %v1386 = vsel %vm1377, %v993, %v1060
      %v1389 = vsel %vm1377, %v994, %v1062
      %v1392 = vsel %vm1377, %v995, %v1064
      %v1395 = vsel %vm1377, %v996, %v1066
      %v1398 = vsel %vm1377, %v997, %v1068
      %v1401 = vsel %vm1377, %v998, %v1070
      %v1404 = vsel %vm1377, %v999, %v1072
      %v1407 = vsel %vm1377, %v1000, %v1074
      %v1410 = vsel %vm1377, %v1001, %v1076
      %v1413 = vsel %vm1377, %v1002, %v1078
      %v1416 = vsel %vm1377, %v1003, %v1080
      %v1419 = vsel %vm1377, %v1004, %v1082
      %v1422 = vsel %vm1377, %v1005, %v1084
      %v1425 = vsel %vm1377, %v1006, %v1086
      %vm1426 = vcmask 64512
      %v1428 = vsel %vm1426, %v1380, %v1136
      %v1430 = vsel %vm1426, %v1383, %v1138
      %v1432 = vsel %vm1426, %v1386, %v1140
      %v1434 = vsel %vm1426, %v1389, %v1142
      %v1436 = vsel %vm1426, %v1392, %v1144
      %v1438 = vsel %vm1426, %v1395, %v1146
      %v1440 = vsel %vm1426, %v1398, %v1148
      %v1442 = vsel %vm1426, %v1401, %v1150
      %v1444 = vsel %vm1426, %v1404, %v1152
      %v1446 = vsel %vm1426, %v1407, %v1154
      %v1448 = vsel %vm1426, %v1410, %v1156
      %v1450 = vsel %vm1426, %v1413, %v1158
      %v1452 = vsel %vm1426, %v1416, %v1160
      %v1454 = vsel %vm1426, %v1419, %v1162
      %v1456 = vsel %vm1426, %v1422, %v1164
      %v1458 = vsel %vm1426, %v1425, %v1166
      %vm1459 = vcmask 97280
      %v1461 = vsel %vm1459, %v1428, %v1171
      %v1463 = vsel %vm1459, %v1430, %v1173
      %v1465 = vsel %vm1459, %v1432, %v1175
      %v1467 = vsel %vm1459, %v1434, %v1177
      %v1469 = vsel %vm1459, %v1436, %v1179
      %v1471 = vsel %vm1459, %v1438, %v1181
      %v1473 = vsel %vm1459, %v1440, %v1183
      %v1475 = vsel %vm1459, %v1442, %v1185
      %v1477 = vsel %vm1459, %v1444, %v1187
      %v1479 = vsel %vm1459, %v1446, %v1189
      %v1481 = vsel %vm1459, %v1448, %v1191
      %v1483 = vsel %vm1459, %v1450, %v1193
      %v1485 = vsel %vm1459, %v1452, %v1195
      %v1487 = vsel %vm1459, %v1454, %v1197
      %v1489 = vsel %vm1459, %v1456, %v1199
      %v1491 = vsel %vm1459, %v1458, %v1201
      %vm1492 = vcmask 130048
      %v1494 = vsel %vm1492, %v1461, %v1206
      %v1496 = vsel %vm1492, %v1463, %v1208
      %v1498 = vsel %vm1492, %v1465, %v1210
      %v1500 = vsel %vm1492, %v1467, %v1212
      %v1502 = vsel %vm1492, %v1469, %v1214
      %v1504 = vsel %vm1492, %v1471, %v1216
      %v1506 = vsel %vm1492, %v1473, %v1218
      %v1508 = vsel %vm1492, %v1475, %v1220
      %v1510 = vsel %vm1492, %v1477, %v1222
      %v1512 = vsel %vm1492, %v1479, %v1224
      %v1514 = vsel %vm1492, %v1481, %v1226
      %v1516 = vsel %vm1492, %v1483, %v1228
      %v1518 = vsel %vm1492, %v1485, %v1230
      %v1520 = vsel %vm1492, %v1487, %v1232
      %v1522 = vsel %vm1492, %v1489, %v1234
      %v1524 = vsel %vm1492, %v1491, %v1236
      %vm1525 = vcmask 162816
      %v1527 = vsel %vm1525, %v1494, %v1241
      %v1529 = vsel %vm1525, %v1496, %v1243
      %v1531 = vsel %vm1525, %v1498, %v1245
      %v1533 = vsel %vm1525, %v1500, %v1247
      %v1535 = vsel %vm1525, %v1502, %v1249
      %v1537 = vsel %vm1525, %v1504, %v1251
      %v1539 = vsel %vm1525, %v1506, %v1253
      %v1541 = vsel %vm1525, %v1508, %v1255
      %v1543 = vsel %vm1525, %v1510, %v1257
      %v1545 = vsel %vm1525, %v1512, %v1259
      %v1547 = vsel %vm1525, %v1514, %v1261
      %v1549 = vsel %vm1525, %v1516, %v1263
      %v1551 = vsel %vm1525, %v1518, %v1265
      %v1553 = vsel %vm1525, %v1520, %v1267
      %v1555 = vsel %vm1525, %v1522, %v1269
      %v1557 = vsel %vm1525, %v1524, %v1271
      %vm1558 = vcmask 195584
      %v1560 = vsel %vm1558, %v1527, %v1276
      %v1562 = vsel %vm1558, %v1529, %v1278
      %v1564 = vsel %vm1558, %v1531, %v1280
      %v1566 = vsel %vm1558, %v1533, %v1282
      %v1568 = vsel %vm1558, %v1535, %v1284
      %v1570 = vsel %vm1558, %v1537, %v1286
      %v1572 = vsel %vm1558, %v1539, %v1288
      %v1574 = vsel %vm1558, %v1541, %v1290
      %v1576 = vsel %vm1558, %v1543, %v1292
      %v1578 = vsel %vm1558, %v1545, %v1294
      %v1580 = vsel %vm1558, %v1547, %v1296
      %v1582 = vsel %vm1558, %v1549, %v1298
      %v1584 = vsel %vm1558, %v1551, %v1300
      %v1586 = vsel %vm1558, %v1553, %v1302
      %v1588 = vsel %vm1558, %v1555, %v1304
      %v1590 = vsel %vm1558, %v1557, %v1306
      %vm1591 = vcmask 228352
      %v1593 = vsel %vm1591, %v1560, %v1311
      %v1595 = vsel %vm1591, %v1562, %v1313
      %v1597 = vsel %vm1591, %v1564, %v1315
      %v1599 = vsel %vm1591, %v1566, %v1317
      %v1601 = vsel %vm1591, %v1568, %v1319
      %v1603 = vsel %vm1591, %v1570, %v1321
      %v1605 = vsel %vm1591, %v1572, %v1323
      %v1607 = vsel %vm1591, %v1574, %v1325
      %v1609 = vsel %vm1591, %v1576, %v1327
      %v1611 = vsel %vm1591, %v1578, %v1329
      %v1613 = vsel %vm1591, %v1580, %v1331
      %v1615 = vsel %vm1591, %v1582, %v1333
      %v1617 = vsel %vm1591, %v1584, %v1335
      %v1619 = vsel %vm1591, %v1586, %v1337
      %v1621 = vsel %vm1591, %v1588, %v1339
      %v1623 = vsel %vm1591, %v1590, %v1341
      %vm1624 = vcmask 261120
      %v1626 = vsel %vm1624, %v1593, %v1346
      %v1628 = vsel %vm1624, %v1595, %v1348
      %v1630 = vsel %vm1624, %v1597, %v1350
      %v1632 = vsel %vm1624, %v1599, %v1352
      %v1634 = vsel %vm1624, %v1601, %v1354
      %v1636 = vsel %vm1624, %v1603, %v1356
      %v1638 = vsel %vm1624, %v1605, %v1358
      %v1640 = vsel %vm1624, %v1607, %v1360
      %v1642 = vsel %vm1624, %v1609, %v1362
      %v1644 = vsel %vm1624, %v1611, %v1364
      %v1646 = vsel %vm1624, %v1613, %v1366
      %v1648 = vsel %vm1624, %v1615, %v1368
      %v1650 = vsel %vm1624, %v1617, %v1370
      %v1652 = vsel %vm1624, %v1619, %v1372
      %v1654 = vsel %vm1624, %v1621, %v1374
      %v1656 = vsel %vm1624, %v1623, %v1376
      %v1657 = vld [vmem:[%s2] sm:$0xf]
      %v1658 = vld [vmem:[%s2 + $0x4] sm:$0xf]
      %v1659 = vld [vmem:[%s2 + $0x8] sm:$0xf]
      %v1660 = vld [vmem:[%s2 + $0xc] sm:$0xf]
      %v1661 = vld [vmem:[%s2 + $0x10] sm:$0x3]
      %v1667 = vunpack.c.l.b16 %v1657
      %v1668 = vunpack.c.l.b16 %v1658
      %v1669 = vunpack.c.l.b16 %v1659
      %v1670 = vunpack.c.l.b16 %v1660
      %v1671 = vunpack.c.l.b16 %v1661
      %v1672 = vpack.c.b16 %v1668, %v1667
      %v1673 = vpack.c.b16 %v1670, %v1669
      %v1674 = vpack.c.b16 %v1671, %v1671
      %vm1677 = vcmask 293888
      %v1678 = vsel %vm1677, %v1626, 0
      %v1680 = vsel %vm1677, %v1628, 0
      %v1682 = vsel %vm1677, %v1630, 0
      %v1684 = vsel %vm1677, %v1632, 0
      %v1686 = vsel %vm1677, %v1634, 0
      %v1688 = vsel %vm1677, %v1636, 0
      %v1690 = vsel %vm1677, %v1638, 0
      %v1692 = vsel %vm1677, %v1640, 0
      %v1694 = vsel %vm1677, %v1642, 0
      %v1696 = vsel %vm1677, %v1644, 0
      %v1698 = vsel %vm1677, %v1646, 0
      %v1700 = vsel %vm1677, %v1648, 0
      %v1702 = vsel %vm1677, %v1650, 0
      %v1704 = vsel %vm1677, %v1652, 0
      %v1706 = vsel %vm1677, %v1654, 0
      %v1708 = vsel %vm1677, %v1656, 0
      %vm1710 = vcmask 1041408
      %v1712 = vsel %vm1710, %v1674, 0
      %1714 = vmatprep.subr.bf16.mxu0 0
      %1715 = vmatpush1.bf16.msra.mxu0 0
      %1716 = vmatprep.subr.bf16.mxu0 0
      %1717 = vmatpush1.bf16.msra.mxu0 0
      %1718 = vmatprep.subr.bf16.mxu0 0
      %1719 = vmatpush1.bf16.msra.mxu0 0
      %1720 = vmatprep.subr.bf16.mxu0 0
      %1721 = vmatpush1.bf16.msra.mxu0 0
      %1722 = vmatprep.subr.bf16.mxu0 0
      %1723 = vmatpush1.bf16.msra.mxu0 0
      %1724 = vmatprep.subr.bf16.mxu0 0
      %1725 = vmatpush1.bf16.msra.mxu0 %v1712
      %1726 = vmatprep.subr.bf16.mxu0 0
      %1727 = vmatpush1.bf16.msra.mxu0 %v1673
      %1728 = vmatprep.subr.bf16.mxu0 0
      %1729 = vmatpush1.bf16.msra.mxu0 %v1672
      %1730 = vmatprep.subr.bf16.mxu0 0
      %1731 = vmatpush2.bf16.msra.mxu0 0
      %1732 = vmatprep.subr.bf16.mxu0 0
      %1733 = vmatpush2.bf16.msra.mxu0 0
      %1734 = vmatprep.subr.bf16.mxu0 0
      %1735 = vmatpush2.bf16.msra.mxu0 0
      %1736 = vmatprep.subr.bf16.mxu0 0
      %1737 = vmatpush2.bf16.msra.mxu0 0
      %1738 = vmatprep.subr.bf16.mxu0 0
      %1739 = vmatpush2.bf16.msra.mxu0 0
      %1740 = vmatprep.subr.bf16.mxu0 0
      %1741 = vmatpush2.bf16.msra.mxu0 0
      %1742 = vmatprep.subr.bf16.mxu0 0
      %1743 = vmatpush2.bf16.msra.mxu0 0
      %1744 = vmatprep.subr.bf16.mxu0 0
      %1745 = vmatpush2.bf16.msra.mxu0 0
      %1746 = vmatprep.mubr.bf16.mxu0 0
      %1747 = vmatmul.mubr.bf16.gmra.mxu0 %v1678
      %v1748 = vpop.f32.mrf.mxu0
      %v1749 = vadd.f32 0.0, %v1748
      %v1750 = vpop.f32.mrf.mxu0
      %v1751 = vpop.f32.mrf.mxu0
      %v1752 = vadd.f32 0.0, %v1751
      %v1753 = vpop.f32.mrf.mxu0
      %1754 = vmatprep.mubr.bf16.mxu0 0
      %1755 = vmatmul.mubr.bf16.gmra.mxu0 %v1680
      %v1756 = vpop.f32.mrf.mxu0
      %v1757 = vadd.f32 0.0, %v1756
      %v1758 = vpop.f32.mrf.mxu0
      %v1759 = vpop.f32.mrf.mxu0
      %v1760 = vadd.f32 0.0, %v1759
      %v1761 = vpop.f32.mrf.mxu0
      %1762 = vmatprep.mubr.bf16.mxu0 0
      %1763 = vmatmul.mubr.bf16.gmra.mxu0 %v1682
      %v1764 = vpop.f32.mrf.mxu0
      %v1765 = vadd.f32 0.0, %v1764
      %v1766 = vpop.f32.mrf.mxu0
      %v1767 = vpop.f32.mrf.mxu0
      %v1768 = vadd.f32 0.0, %v1767
      %v1769 = vpop.f32.mrf.mxu0
      %1770 = vmatprep.mubr.bf16.mxu0 0
      %1771 = vmatmul.mubr.bf16.gmra.mxu0 %v1684
      %v1772 = vpop.f32.mrf.mxu0
      %v1773 = vadd.f32 0.0, %v1772
      %v1774 = vpop.f32.mrf.mxu0
      %v1775 = vpop.f32.mrf.mxu0
      %v1776 = vadd.f32 0.0, %v1775
      %v1777 = vpop.f32.mrf.mxu0
      %1778 = vmatprep.mubr.bf16.mxu0 0
      %1779 = vmatmul.mubr.bf16.gmra.mxu0 %v1686
      %v1780 = vpop.f32.mrf.mxu0
      %v1781 = vadd.f32 0.0, %v1780
      %v1782 = vpop.f32.mrf.mxu0
      %v1783 = vpop.f32.mrf.mxu0
      %v1784 = vadd.f32 0.0, %v1783
      %v1785 = vpop.f32.mrf.mxu0
      %1786 = vmatprep.mubr.bf16.mxu0 0
      %1787 = vmatmul.mubr.bf16.gmra.mxu0 %v1688
      %v1788 = vpop.f32.mrf.mxu0
      %v1789 = vadd.f32 0.0, %v1788
      %v1790 = vpop.f32.mrf.mxu0
      %v1791 = vpop.f32.mrf.mxu0
      %v1792 = vadd.f32 0.0, %v1791
      %v1793 = vpop.f32.mrf.mxu0
      %1794 = vmatprep.mubr.bf16.mxu0 0
      %1795 = vmatmul.mubr.bf16.gmra.mxu0 %v1690
      %v1796 = vpop.f32.mrf.mxu0
      %v1797 = vadd.f32 0.0, %v1796
      %v1798 = vpop.f32.mrf.mxu0
      %v1799 = vpop.f32.mrf.mxu0
      %v1800 = vadd.f32 0.0, %v1799
      %v1801 = vpop.f32.mrf.mxu0
      %1802 = vmatprep.mubr.bf16.mxu0 0
      %1803 = vmatmul.mubr.bf16.gmra.mxu0 %v1692
      %v1804 = vpop.f32.mrf.mxu0
      %v1805 = vadd.f32 0.0, %v1804
      %v1806 = vpop.f32.mrf.mxu0
      %v1807 = vpop.f32.mrf.mxu0
      %v1808 = vadd.f32 0.0, %v1807
      %v1809 = vpop.f32.mrf.mxu0
      %1810 = vmatprep.mubr.bf16.mxu0 0
      %1811 = vmatmul.mubr.bf16.gmra.mxu0 %v1694
      %v1812 = vpop.f32.mrf.mxu0
      %v1813 = vadd.f32 0.0, %v1812
      %v1814 = vpop.f32.mrf.mxu0
      %v1815 = vpop.f32.mrf.mxu0
      %v1816 = vadd.f32 0.0, %v1815
      %v1817 = vpop.f32.mrf.mxu0
      %1818 = vmatprep.mubr.bf16.mxu0 0
      %1819 = vmatmul.mubr.bf16.gmra.mxu0 %v1696
      %v1820 = vpop.f32.mrf.mxu0
      %v1821 = vadd.f32 0.0, %v1820
      %v1822 = vpop.f32.mrf.mxu0
      %v1823 = vpop.f32.mrf.mxu0
      %v1824 = vadd.f32 0.0, %v1823
      %v1825 = vpop.f32.mrf.mxu0
      %1826 = vmatprep.mubr.bf16.mxu0 0
      %1827 = vmatmul.mubr.bf16.gmra.mxu0 %v1698
      %v1828 = vpop.f32.mrf.mxu0
      %v1829 = vadd.f32 0.0, %v1828
      %v1830 = vpop.f32.mrf.mxu0
      %v1831 = vpop.f32.mrf.mxu0
      %v1832 = vadd.f32 0.0, %v1831
      %v1833 = vpop.f32.mrf.mxu0
      %1834 = vmatprep.mubr.bf16.mxu0 0
      %1835 = vmatmul.mubr.bf16.gmra.mxu0 %v1700
      %v1836 = vpop.f32.mrf.mxu0
      %v1837 = vadd.f32 0.0, %v1836
      %v1838 = vpop.f32.mrf.mxu0
      %v1839 = vpop.f32.mrf.mxu0
      %v1840 = vadd.f32 0.0, %v1839
      %v1841 = vpop.f32.mrf.mxu0
      %1842 = vmatprep.mubr.bf16.mxu0 0
      %1843 = vmatmul.mubr.bf16.gmra.mxu0 %v1702
      %v1844 = vpop.f32.mrf.mxu0
      %v1845 = vadd.f32 0.0, %v1844
      %v1846 = vpop.f32.mrf.mxu0
      %v1847 = vpop.f32.mrf.mxu0
      %v1848 = vadd.f32 0.0, %v1847
      %v1849 = vpop.f32.mrf.mxu0
      %1850 = vmatprep.mubr.bf16.mxu0 0
      %1851 = vmatmul.mubr.bf16.gmra.mxu0 %v1704
      %v1852 = vpop.f32.mrf.mxu0
      %v1853 = vadd.f32 0.0, %v1852
      %v1854 = vpop.f32.mrf.mxu0
      %v1855 = vpop.f32.mrf.mxu0
      %v1856 = vadd.f32 0.0, %v1855
      %v1857 = vpop.f32.mrf.mxu0
      %1858 = vmatprep.mubr.bf16.mxu0 0
      %1859 = vmatmul.mubr.bf16.gmra.mxu0 %v1706
      %v1860 = vpop.f32.mrf.mxu0
      %v1861 = vadd.f32 0.0, %v1860
      %v1862 = vpop.f32.mrf.mxu0
      %v1863 = vpop.f32.mrf.mxu0
      %v1864 = vadd.f32 0.0, %v1863
      %v1865 = vpop.f32.mrf.mxu0
      %1866 = vmatprep.mubr.bf16.mxu0 0
      %1867 = vmatmul.mubr.bf16.gmra.mxu0 %v1708
      %v1868 = vpop.f32.mrf.mxu0
      %v1869 = vadd.f32 0.0, %v1868
      %v1870 = vpop.f32.mrf.mxu0
      %v1871 = vpop.f32.mrf.mxu0
      %v1872 = vadd.f32 0.0, %v1871
      %v1873 = vpop.f32.mrf.mxu0
      %1874 = vdwg.mxu0
      %v1875 = vsel %vm1624, %v1749, 0.0
      %v1876 = vsel %vm1624, %v1752, 0.0
      %v1877 = vadd.f32 %v1875, %v1876
      %v1878 = vsel %vm1624, %v1757, 0.0
      %v1879 = vadd.f32 %v1877, %v1878
      %v1880 = vsel %vm1624, %v1760, 0.0
      %v1881 = vadd.f32 %v1879, %v1880
      %v1882 = vsel %vm1624, %v1765, 0.0
      %v1883 = vadd.f32 %v1881, %v1882
      %v1884 = vsel %vm1624, %v1768, 0.0
      %v1885 = vadd.f32 %v1883, %v1884
      %v1886 = vsel %vm1624, %v1773, 0.0
      %v1887 = vadd.f32 %v1885, %v1886
      %v1888 = vsel %vm1624, %v1776, 0.0
      %v1889 = vadd.f32 %v1887, %v1888
      %v1890 = vsel %vm1624, %v1781, 0.0
      %v1891 = vadd.f32 %v1889, %v1890
      %v1892 = vsel %vm1624, %v1784, 0.0
      %v1893 = vadd.f32 %v1891, %v1892
      %v1894 = vsel %vm1624, %v1789, 0.0
      %v1895 = vadd.f32 %v1893, %v1894
      %v1896 = vsel %vm1624, %v1792, 0.0
      %v1897 = vadd.f32 %v1895, %v1896
      %v1898 = vsel %vm1624, %v1797, 0.0
      %v1899 = vadd.f32 %v1897, %v1898
      %v1900 = vsel %vm1624, %v1800, 0.0
      %v1901 = vadd.f32 %v1899, %v1900
      %v1902 = vsel %vm1624, %v1805, 0.0
      %v1903 = vadd.f32 %v1901, %v1902
      %v1904 = vsel %vm1624, %v1808, 0.0
      %v1905 = vadd.f32 %v1903, %v1904
      %v1906 = vsel %vm1624, %v1813, 0.0
      %v1907 = vadd.f32 %v1905, %v1906
      %v1908 = vsel %vm1624, %v1816, 0.0
      %v1909 = vadd.f32 %v1907, %v1908
      %v1910 = vsel %vm1624, %v1821, 0.0
      %v1911 = vadd.f32 %v1909, %v1910
      %v1912 = vsel %vm1624, %v1824, 0.0
      %v1913 = vadd.f32 %v1911, %v1912
      %v1914 = vsel %vm1624, %v1829, 0.0
      %v1915 = vadd.f32 %v1913, %v1914
      %v1916 = vsel %vm1624, %v1832, 0.0
      %v1917 = vadd.f32 %v1915, %v1916
      %v1918 = vsel %vm1624, %v1837, 0.0
      %v1919 = vadd.f32 %v1917, %v1918
      %v1920 = vsel %vm1624, %v1840, 0.0
      %v1921 = vadd.f32 %v1919, %v1920
      %v1922 = vsel %vm1624, %v1845, 0.0
      %v1923 = vadd.f32 %v1921, %v1922
      %v1924 = vsel %vm1624, %v1848, 0.0
      %v1925 = vadd.f32 %v1923, %v1924
      %v1926 = vsel %vm1624, %v1853, 0.0
      %v1927 = vadd.f32 %v1925, %v1926
      %v1928 = vsel %vm1624, %v1856, 0.0
      %v1929 = vadd.f32 %v1927, %v1928
      %v1930 = vsel %vm1624, %v1861, 0.0
      %v1931 = vadd.f32 %v1929, %v1930
      %v1932 = vsel %vm1624, %v1864, 0.0
      %v1933 = vadd.f32 %v1931, %v1932
      %v1934 = vsel %vm1624, %v1869, 0.0
      %v1935 = vadd.f32 %v1933, %v1934
      %v1936 = vsel %vm1624, %v1872, 0.0
      %v1937 = vadd.f32 %v1935, %v1936
      %v1938 = vrot.slane %v1937, 4
      %v1939 = vadd.f32 %v1937, %v1938
      %v1940 = vrot.slane %v1939, 2
      %v1941 = vadd.f32 %v1939, %v1940
      %v1942 = vrot.slane %v1941, 1
      %v1943 = vadd.f32 %v1941, %v1942
      %v1944 = vmul.f32 %v1749, %v1749
      %v1945 = vmul.f32 %v1752, %v1752
      %v1946 = vmul.f32 %v1757, %v1757
      %v1947 = vmul.f32 %v1760, %v1760
      %v1948 = vmul.f32 %v1765, %v1765
      %v1949 = vmul.f32 %v1768, %v1768
      %v1950 = vmul.f32 %v1773, %v1773
      %v1951 = vmul.f32 %v1776, %v1776
      %v1952 = vmul.f32 %v1781, %v1781
      %v1953 = vmul.f32 %v1784, %v1784
      %v1954 = vmul.f32 %v1789, %v1789
      %v1955 = vmul.f32 %v1792, %v1792
      %v1956 = vmul.f32 %v1797, %v1797
      %v1957 = vmul.f32 %v1800, %v1800
      %v1958 = vmul.f32 %v1805, %v1805
      %v1959 = vmul.f32 %v1808, %v1808
      %v1960 = vmul.f32 %v1813, %v1813
      %v1961 = vmul.f32 %v1816, %v1816
      %v1962 = vmul.f32 %v1821, %v1821
      %v1963 = vmul.f32 %v1824, %v1824
      %v1964 = vmul.f32 %v1829, %v1829
      %v1965 = vmul.f32 %v1832, %v1832
      %v1966 = vmul.f32 %v1837, %v1837
      %v1967 = vmul.f32 %v1840, %v1840
      %v1968 = vmul.f32 %v1845, %v1845
      %v1969 = vmul.f32 %v1848, %v1848
      %v1970 = vmul.f32 %v1853, %v1853
      %v1971 = vmul.f32 %v1856, %v1856
      %v1972 = vmul.f32 %v1861, %v1861
      %v1973 = vmul.f32 %v1864, %v1864
      %v1974 = vmul.f32 %v1869, %v1869
      %v1975 = vmul.f32 %v1872, %v1872
      %v1976 = vsel %vm1624, %v1944, 0.0
      %v1977 = vsel %vm1624, %v1945, 0.0
      %v1978 = vadd.f32 %v1976, %v1977
      %v1979 = vsel %vm1624, %v1946, 0.0
      %v1980 = vadd.f32 %v1978, %v1979
      %v1981 = vsel %vm1624, %v1947, 0.0
      %v1982 = vadd.f32 %v1980, %v1981
      %v1983 = vsel %vm1624, %v1948, 0.0
      %v1984 = vadd.f32 %v1982, %v1983
      %v1985 = vsel %vm1624, %v1949, 0.0
      %v1986 = vadd.f32 %v1984, %v1985
      %v1987 = vsel %vm1624, %v1950, 0.0
      %v1988 = vadd.f32 %v1986, %v1987
      %v1989 = vsel %vm1624, %v1951, 0.0
      %v1990 = vadd.f32 %v1988, %v1989
      %v1991 = vsel %vm1624, %v1952, 0.0
      %v1992 = vadd.f32 %v1990, %v1991
      %v1993 = vsel %vm1624, %v1953, 0.0
      %v1994 = vadd.f32 %v1992, %v1993
      %v1995 = vsel %vm1624, %v1954, 0.0
      %v1996 = vadd.f32 %v1994, %v1995
      %v1997 = vsel %vm1624, %v1955, 0.0
      %v1998 = vadd.f32 %v1996, %v1997
      %v1999 = vsel %vm1624, %v1956, 0.0
      %v2000 = vadd.f32 %v1998, %v1999
      %v2001 = vsel %vm1624, %v1957, 0.0
      %v2002 = vadd.f32 %v2000, %v2001
      %v2003 = vsel %vm1624, %v1958, 0.0
      %v2004 = vadd.f32 %v2002, %v2003
      %v2005 = vsel %vm1624, %v1959, 0.0
      %v2006 = vadd.f32 %v2004, %v2005
      %v2007 = vsel %vm1624, %v1960, 0.0
      %v2008 = vadd.f32 %v2006, %v2007
      %v2009 = vsel %vm1624, %v1961, 0.0
      %v2010 = vadd.f32 %v2008, %v2009
      %v2011 = vsel %vm1624, %v1962, 0.0
      %v2012 = vadd.f32 %v2010, %v2011
      %v2013 = vsel %vm1624, %v1963, 0.0
      %v2014 = vadd.f32 %v2012, %v2013
      %v2015 = vsel %vm1624, %v1964, 0.0
      %v2016 = vadd.f32 %v2014, %v2015
      %v2017 = vsel %vm1624, %v1965, 0.0
      %v2018 = vadd.f32 %v2016, %v2017
      %v2019 = vsel %vm1624, %v1966, 0.0
      %v2020 = vadd.f32 %v2018, %v2019
      %v2021 = vsel %vm1624, %v1967, 0.0
      %v2022 = vadd.f32 %v2020, %v2021
      %v2023 = vsel %vm1624, %v1968, 0.0
      %v2024 = vadd.f32 %v2022, %v2023
      %v2025 = vsel %vm1624, %v1969, 0.0
      %v2026 = vadd.f32 %v2024, %v2025
      %v2027 = vsel %vm1624, %v1970, 0.0
      %v2028 = vadd.f32 %v2026, %v2027
      %v2029 = vsel %vm1624, %v1971, 0.0
      %v2030 = vadd.f32 %v2028, %v2029
      %v2031 = vsel %vm1624, %v1972, 0.0
      %v2032 = vadd.f32 %v2030, %v2031
      %v2033 = vsel %vm1624, %v1973, 0.0
      %v2034 = vadd.f32 %v2032, %v2033
      %v2035 = vsel %vm1624, %v1974, 0.0
      %v2036 = vadd.f32 %v2034, %v2035
      %v2037 = vsel %vm1624, %v1975, 0.0
      %v2038 = vadd.f32 %v2036, %v2037
      %v2039 = vrot.slane %v2038, 4
      %v2040 = vadd.f32 %v2038, %v2039
      %v2041 = vrot.slane %v2040, 2
      %v2042 = vadd.f32 %v2040, %v2041
      %v2043 = vrot.slane %v2042, 1
      %v2044 = vadd.f32 %v2042, %v2043
      %vm2045 = vcmask 1040384
      %v2046 = vsel %vm2045, %v1943, %v2044
      %vm2047 = vcmask 254976
      %2048 = vst.msk [vmem:[%s285] sm:$0x3] %vm2047, %v2046
      %p2049 = scmp.lt.s32.totalorder %s18, 1
      %s2050 = scalar_select %p2049, %s18, 1
      %p2051 = scmp.lt.s32.totalorder %s19, 0
      %s2052 = scalar_select %p2051, %s19, 0
      %s2053 = sadd.s32 %s2052, %s2050
      %s2054 = smul.addr %s2053, 2
      %s2055 = scalar_lea.vmem %s3, %s2054
      // Predicated region
      $region33: #{upconv_pallas.2} parent=31 // pred_check
        %p2056 = pneg %p127
      $region34: #{upconv_pallas.2} parent=31 // pred_check_branch
        %2058 = sbr.rel (%p2056) target = $region36
      $region35: #{upconv_pallas.2} parent=31 // pred_region
        _
      $region36: #{upconv_pallas.2} parent=31 // pred_fallthru
        _
    $region32: #{upconv_pallas.2} parent=5 // pred_fallthru
      _
    %p2059 = scmp.le.s32.totalorder 2, %s9
    // Predicated region
    $region37: #{upconv_pallas.2} parent=5 // pred_check
      %p2060 = pneg %p2059
    $region38: #{upconv_pallas.2} parent=5 // pred_check_branch
      %2062 = sbr.rel (%p2060) target = $region40
    $region39: #{upconv_pallas.2} parent=5 // pred_region
      %s2063 = ssub.s32 %s9, 2
      // Predicated region
      $region41: #{upconv_pallas.2} parent=39 // pred_check
        %p2064 = pneg %p133
      $region42: #{upconv_pallas.2} parent=39 // pred_check_branch
        %2066 = sbr.rel (%p2064) target = $region44
      $region43: #{upconv_pallas.2} parent=39 // pred_region
        %p2067 = scmp.lt.s32.totalorder %s20, 1
        %s2068 = scalar_select %p2067, %s20, 1
        %p2069 = scmp.lt.s32.totalorder %s21, 0
        %s2070 = scalar_select %p2069, %s21, 0
        %s2071 = sadd.s32 %s2070, %s2068
        %s2072 = smul.addr %s2071, 2
        %s2073 = scalar_lea.vmem %s3, %s2072
      $region44: #{upconv_pallas.2} parent=39 // pred_fallthru
        _
    $region40: #{upconv_pallas.2} parent=5 // pred_fallthru
      _
  $region6: #{upconv_pallas.2} parent=0 // loop_footer
    %s13 = sadd.s32 1, %s9
  $region7: #{upconv_pallas.2} parent=0 // loop_footer_branch
    %8 = sbr.rel target = $region3
  $region8: #{upconv_pallas.2} parent=0 // loop_exit
    _

// kernel: upconv_pallas.3
$region0: #{upconv_pallas.3}
  #allocation0 [shape = 'u32[]', space=smem, size = 0x4, offset = 0x4, fixed_abs, tag = 'smem constant byte address 0x4 - core index']
  #allocation1 [shape = 'u32[144,128]{1,0:T(1,128)}', space=vmem, size = 0x12000, scoped, tag = 'internal scratch']
  %s0 = inlined_call_operand.vmem [shape: bf16[2,18,18,4], index: 0, kind: input, shape index: {}, may-alias: {0,1}]
  %s1 = inlined_call_operand.vmem [shape: bf16[2,18,18,4], index: 1, kind: input, shape index: {}, may-alias: {0,1}]
  %s2 = inlined_call_operand.vmem [shape: bf16[36,32], index: 2, kind: input, shape index: {}]
  %s3 = inlined_call_operand.vmem [shape: f32[1,32], index: 3, kind: input, shape index: {}]
  %s4 = inlined_call_operand.vmem [shape: f32[1,32], index: 4, kind: input, shape index: {}]
  %s5 = inlined_call_operand.vmem [shape: bf16[2,1,256,32], index: 5, kind: output, shape index: {}]
  %s6 = sld [smem:[#allocation0]]
  $region53: #{upconv_pallas.3} parent=0
    _
  %s8 = ssub.s32 1, %s6
  %s9 = scalar_select 0, %s8, %s6
  loop: start=0, step=1, limit=4
  $region2: #{upconv_pallas.3} parent=0 // loop_pre_header
    _
  $region3: #{upconv_pallas.3} parent=0 // loop_header
    %s11 = sphi 0, %s15
    %p12 = scmp.ge.s32.totalorder %s11, 4
    %s18 = sphi 0, %s30
    %s19 = sphi 0, %s26
    %s20 = sphi 0, %s18
    %s21 = sphi 0, %s19
    %s22 = sphi 0, %s20
    %s23 = sphi 0, %s21
    %s35 = sphi 0, %s37
    %s38 = sphi 0, %s35
    %s39 = sphi 0, %s38
    %s55 = sphi 0, %s39
    %s67 = sphi 0, %s69
    %s70 = sphi 0, %s67
    %s71 = sphi 0, %s70
    %s87 = sphi 0, %s71
    %s91 = sphi 0, %s91
    %s93 = sphi 0, %s91
    %s94 = sphi 0, %s93
    %s108 = sphi 0, %s94
    %s112 = sphi 0, %s112
    %s114 = sphi 0, %s112
    %s115 = sphi 0, %s114
    %s129 = sphi 0, %s115
    %s133 = sphi 0, %s133
    %s135 = sphi 0, %s133
    %s136 = sphi 0, %s135
    %s150 = sphi 0, %s136
    %s158 = sphi 0, %s160
    %s161 = sphi 0, %s158
    %s162 = sphi 0, %s161
    %s178 = sphi 0, %s162
  $region4: #{upconv_pallas.3} parent=0 // loop_header_branch
    %14 = sbr.rel (%p12) target = $region8
  $region5: #{upconv_pallas.3} parent=0 // loop_body
    %s16 = ssub.s32 %s11, 1
    %s17 = ssub.s32 %s11, 2
    %s24 = sadd.s32 1, %s19
    %p25 = scmp.ge.s32.totalorder %s24, 1
    %s26 = scalar_select %p25, 0, %s24
    %s27 = sadd.s32 1, %s18
    %s28 = scalar_select %p25, %s27, %s18
    %p29 = scmp.ge.s32.totalorder %s28, 2
    %s30 = scalar_select %p29, 0, %s28
    %s31 = ssub.s32 %s18, %s30
    %s32 = ssub.s32 %s19, %s26
    %s33 = sor.u32 %s31, %s32
    %p34 = scmp.eq.s32.totalorder %s33, 0
    %s36 = sadd.s32 %s35, 1
    %s37 = scalar_select %p34, %s35, %s36
    %p40 = pneg %p34
    %p41 = scmp.eq.s32.totalorder %s11, 1
    %p42 = por %p40, %p41
    %p43 = scmp.ne.s32.totalorder %s35, %s38
    %p44 = scmp.eq.s32.totalorder %s11, 0
    %p45 = por %p43, %p44
    %p46 = scmp.ne.s32.totalorder %s35, %s38
    %p47 = scmp.eq.s32.totalorder %s16, 1
    %p48 = por %p46, %p47
    %p49 = scmp.ne.s32.totalorder %s38, %s39
    %p50 = scmp.eq.s32.totalorder %s16, 0
    %p51 = por %p49, %p50
    %p52 = scmp.ne.s32.totalorder %s38, %s39
    %p53 = scmp.eq.s32.totalorder %s17, 1
    %p54 = por %p52, %p53
    %p56 = scmp.ne.s32.totalorder %s39, %s55
    %p57 = scmp.eq.s32.totalorder %s17, 0
    %p58 = por %p56, %p57
    %s59 = sadd.s32 %s19, 1
    %s60 = smul.u32 %s59, 8
    %s61 = sadd.s32 %s26, 1
    %s62 = smul.u32 %s61, 8
    %s63 = ssub.s32 %s18, %s30
    %s64 = ssub.s32 %s60, %s62
    %s65 = sor.u32 %s63, %s64
    %p66 = scmp.eq.s32.totalorder %s65, 0
    %s68 = sadd.s32 %s67, 1
    %s69 = scalar_select %p66, %s67, %s68
    %p72 = pneg %p66
    %p73 = scmp.eq.s32.totalorder %s11, 1
    %p74 = por %p72, %p73
    %p75 = scmp.ne.s32.totalorder %s67, %s70
    %p76 = scmp.eq.s32.totalorder %s11, 0
    %p77 = por %p75, %p76
    %p78 = scmp.ne.s32.totalorder %s67, %s70
    %p79 = scmp.eq.s32.totalorder %s16, 1
    %p80 = por %p78, %p79
    %p81 = scmp.ne.s32.totalorder %s70, %s71
    %p82 = scmp.eq.s32.totalorder %s16, 0
    %p83 = por %p81, %p82
    %p84 = scmp.ne.s32.totalorder %s70, %s71
    %p85 = scmp.eq.s32.totalorder %s17, 1
    %p86 = por %p84, %p85
    %p88 = scmp.ne.s32.totalorder %s71, %s87
    %p89 = scmp.eq.s32.totalorder %s17, 0
    %p90 = por %p88, %p89
    %s92 = sadd.s32 %s91, 1
    %p95 = scmp.eq.s32.totalorder %s11, 1
    %p96 = scmp.ne.s32.totalorder %s91, %s93
    %p97 = scmp.eq.s32.totalorder %s11, 0
    %p98 = por %p96, %p97
    %p99 = scmp.ne.s32.totalorder %s91, %s93
    %p100 = scmp.eq.s32.totalorder %s16, 1
    %p101 = por %p99, %p100
    %p102 = scmp.ne.s32.totalorder %s93, %s94
    %p103 = scmp.eq.s32.totalorder %s16, 0
    %p104 = por %p102, %p103
    %p105 = scmp.ne.s32.totalorder %s93, %s94
    %p106 = scmp.eq.s32.totalorder %s17, 1
    %p107 = por %p105, %p106
    %p109 = scmp.ne.s32.totalorder %s94, %s108
    %p110 = scmp.eq.s32.totalorder %s17, 0
    %p111 = por %p109, %p110
    %s113 = sadd.s32 %s112, 1
    %p116 = scmp.eq.s32.totalorder %s11, 1
    %p117 = scmp.ne.s32.totalorder %s112, %s114
    %p118 = scmp.eq.s32.totalorder %s11, 0
    %p119 = por %p117, %p118
    %p120 = scmp.ne.s32.totalorder %s112, %s114
    %p121 = scmp.eq.s32.totalorder %s16, 1
    %p122 = por %p120, %p121
    %p123 = scmp.ne.s32.totalorder %s114, %s115
    %p124 = scmp.eq.s32.totalorder %s16, 0
    %p125 = por %p123, %p124
    %p126 = scmp.ne.s32.totalorder %s114, %s115
    %p127 = scmp.eq.s32.totalorder %s17, 1
    %p128 = por %p126, %p127
    %p130 = scmp.ne.s32.totalorder %s115, %s129
    %p131 = scmp.eq.s32.totalorder %s17, 0
    %p132 = por %p130, %p131
    %s134 = sadd.s32 %s133, 1
    %p137 = scmp.eq.s32.totalorder %s11, 1
    %p138 = scmp.ne.s32.totalorder %s133, %s135
    %p139 = scmp.eq.s32.totalorder %s11, 0
    %p140 = por %p138, %p139
    %p141 = scmp.ne.s32.totalorder %s133, %s135
    %p142 = scmp.eq.s32.totalorder %s16, 1
    %p143 = por %p141, %p142
    %p144 = scmp.ne.s32.totalorder %s135, %s136
    %p145 = scmp.eq.s32.totalorder %s16, 0
    %p146 = por %p144, %p145
    %p147 = scmp.ne.s32.totalorder %s135, %s136
    %p148 = scmp.eq.s32.totalorder %s17, 1
    %p149 = por %p147, %p148
    %p151 = scmp.ne.s32.totalorder %s136, %s150
    %p152 = scmp.eq.s32.totalorder %s17, 0
    %p153 = por %p151, %p152
    %s154 = ssub.s32 %s18, %s30
    %s155 = ssub.s32 %s19, %s26
    %s156 = sor.u32 %s154, %s155
    %p157 = scmp.eq.s32.totalorder %s156, 0
    %s159 = sadd.s32 %s158, 1
    %s160 = scalar_select %p157, %s158, %s159
    %p163 = pneg %p157
    %p164 = scmp.eq.s32.totalorder %s11, 1
    %p165 = por %p163, %p164
    %p166 = scmp.ne.s32.totalorder %s158, %s161
    %p167 = scmp.eq.s32.totalorder %s11, 0
    %p168 = por %p166, %p167
    %p169 = scmp.ne.s32.totalorder %s158, %s161
    %p170 = scmp.eq.s32.totalorder %s16, 1
    %p171 = por %p169, %p170
    %p172 = scmp.ne.s32.totalorder %s161, %s162
    %p173 = scmp.eq.s32.totalorder %s16, 0
    %p174 = por %p172, %p173
    %p175 = scmp.ne.s32.totalorder %s161, %s162
    %p176 = scmp.eq.s32.totalorder %s17, 1
    %p177 = por %p175, %p176
    %p179 = scmp.ne.s32.totalorder %s162, %s178
    %p180 = scmp.eq.s32.totalorder %s17, 0
    %p181 = por %p179, %p180
    %p182 = scmp.le.s32.totalorder 1, %s11
    %p183 = scmp.lt.s32.totalorder %s11, 3
    %p184 = pnand %p182, %p183
    %p185 = pneg %p184
    // Predicated region
    $region9: #{upconv_pallas.3} parent=5 // pred_check
      _
    $region10: #{upconv_pallas.3} parent=5 // pred_check_branch
      %187 = sbr.rel (%p184) target = $region12
    $region11: #{upconv_pallas.3} parent=5 // pred_region
      %s188 = ssub.s32 %s11, 1
      // Predicated region
      $region13: #{upconv_pallas.3} parent=11 // pred_check
        %p189 = pneg %p104
      $region14: #{upconv_pallas.3} parent=11 // pred_check_branch
        %191 = sbr.rel (%p189) target = $region16
      $region15: #{upconv_pallas.3} parent=11 // pred_region
        _
      $region16: #{upconv_pallas.3} parent=11 // pred_fallthru
        _
      // Predicated region
      $region17: #{upconv_pallas.3} parent=11 // pred_check
        %p192 = pneg %p125
      $region18: #{upconv_pallas.3} parent=11 // pred_check_branch
        %194 = sbr.rel (%p192) target = $region20
      $region19: #{upconv_pallas.3} parent=11 // pred_region
        _
      $region20: #{upconv_pallas.3} parent=11 // pred_fallthru
        _
      // Predicated region
      $region21: #{upconv_pallas.3} parent=11 // pred_check
        %p195 = pneg %p146
      $region22: #{upconv_pallas.3} parent=11 // pred_check_branch
        %197 = sbr.rel (%p195) target = $region24
      $region23: #{upconv_pallas.3} parent=11 // pred_region
        _
      $region24: #{upconv_pallas.3} parent=11 // pred_fallthru
        _
    $region12: #{upconv_pallas.3} parent=5 // pred_fallthru
      _
    %p198 = scmp.lt.s32.totalorder %s11, 2
    // Predicated region
    $region25: #{upconv_pallas.3} parent=5 // pred_check
      %p199 = pneg %p198
    $region26: #{upconv_pallas.3} parent=5 // pred_check_branch
      %201 = sbr.rel (%p199) target = $region28
    $region27: #{upconv_pallas.3} parent=5 // pred_region
      // Predicated region
      $region29: #{upconv_pallas.3} parent=27 // pred_check
        %p202 = pneg %p45
      $region30: #{upconv_pallas.3} parent=27 // pred_check_branch
        %204 = sbr.rel (%p202) target = $region32
      $region31: #{upconv_pallas.3} parent=27 // pred_region
        %s205 = smul.u32 16, %s19
        %s206 = ssub.s32 18, %s205
        %p207 = scmp.lt.s32.totalorder %s206, 16
        %s208 = scalar_select %p207, %s206, 16
        %s209 = smul.u32 64, %s208
        %s210 = smul.u32 %s209, 3
        %p211 = scmp.lt.s32.totalorder %s18, 1
        %s212 = scalar_select %p211, %s18, 1
        %p213 = scmp.lt.s32.totalorder %s205, 17
        %s214 = scalar_select %p213, %s205, 17
        %s215 = smul.addr %s214, 3
        %s216 = smul.addr %s212, 54
        %s217 = sadd.s32 %s215, %s216
        %s218 = smul.addr %s217, 4
        %s219 = scalar_lea.vmem %s0, %s218
        %s220 = smul.u32 16, %s19
        %s221 = ssub.s32 18, %s220
        %p222 = scmp.lt.s32.totalorder %s221, 16
        %s223 = scalar_select %p222, %s221, 16
        %s224 = smul.u32 64, %s223
        %s225 = smul.u32 %s224, 3
      $region32: #{upconv_pallas.3} parent=27 // pred_fallthru
        _
      // Predicated region
      $region33: #{upconv_pallas.3} parent=27 // pred_check
        %p226 = pneg %p77
      $region34: #{upconv_pallas.3} parent=27 // pred_check_branch
        %228 = sbr.rel (%p226) target = $region36
      $region35: #{upconv_pallas.3} parent=27 // pred_region
        %s229 = sadd.s32 %s19, 1
        %s230 = smul.u32 %s229, 8
        %s231 = smul.u32 2, %s230
        %p232 = scmp.lt.s32.totalorder %s18, 1
        %s233 = scalar_select %p232, %s18, 1
        %p234 = scmp.lt.s32.totalorder %s231, 17
        %s235 = scalar_select %p234, %s231, 17
        %s236 = smul.addr %s235, 3
        %s237 = smul.addr %s233, 54
        %s238 = sadd.s32 %s236, %s237
        %s239 = smul.addr %s238, 4
        %s240 = scalar_lea.vmem %s1, %s239
        %s241 = sadd.s32 %s19, 1
        %s242 = smul.u32 %s241, 8
        %s243 = smul.u32 2, %s242
      $region36: #{upconv_pallas.3} parent=27 // pred_fallthru
        _
    $region28: #{upconv_pallas.3} parent=5 // pred_fallthru
      _
    %p244 = scmp.le.s32.totalorder 1, %s11
    %p245 = scmp.lt.s32.totalorder %s11, 3
    %p246 = pnand %p244, %p245
    %p247 = pneg %p246
    // Predicated region
    $region37: #{upconv_pallas.3} parent=5 // pred_check
      _
    $region38: #{upconv_pallas.3} parent=5 // pred_check_branch
      %249 = sbr.rel (%p246) target = $region40
    $region39: #{upconv_pallas.3} parent=5 // pred_region
      %s250 = ssub.s32 %s11, 1
      %s251 = smul.u32 16, %s21
      %s252 = ssub.s32 18, %s251
      %p253 = scmp.lt.s32.totalorder %s252, 16
      %s254 = scalar_select %p253, %s252, 16
      %s255 = smul.u32 64, %s254
      %s256 = smul.u32 %s255, 3
      %p257 = scmp.lt.s32.totalorder %s20, 1
      %s258 = scalar_select %p257, %s20, 1
      %p259 = scmp.lt.s32.totalorder %s251, 17
      %s260 = scalar_select %p259, %s251, 17
      %s261 = smul.addr %s260, 3
      %s262 = smul.addr %s258, 54
      %s263 = sadd.s32 %s261, %s262
      %s264 = smul.addr %s263, 4
      %s265 = scalar_lea.vmem %s0, %s264
      %p266 = pneg %p51
      %p267 = pneg %p48
      %s268 = sadd.s32 %s21, 1
      %s269 = smul.u32 %s268, 8
      %s270 = smul.u32 2, %s269
      %p271 = scmp.lt.s32.totalorder %s20, 1
      %s272 = scalar_select %p271, %s20, 1
      %p273 = scmp.lt.s32.totalorder %s270, 17
      %s274 = scalar_select %p273, %s270, 17
      %s275 = smul.addr %s274, 3
      %s276 = smul.addr %s272, 54
      %s277 = sadd.s32 %s275, %s276
      %s278 = smul.addr %s277, 4
      %s279 = scalar_lea.vmem %s1, %s278
      %p280 = pneg %p83
      %p281 = pneg %p80
      %p282 = pneg %p104
      %p283 = pneg %p101
      %p284 = pneg %p125
      %p285 = pneg %p122
      %p286 = pneg %p146
      %p287 = pneg %p143
      %p288 = pneg %p174
      %p289 = pneg %p171
      %p290 = scmp.lt.s32.totalorder %s20, 1
      %s291 = scalar_select %p290, %s20, 1
      %p292 = scmp.lt.s32.totalorder %s21, 0
      %s293 = scalar_select %p292, %s21, 0
      %s294 = smul.addr %s293, 32
      %s295 = smul.addr %s291, 32
      %s296 = sadd.s32 %s294, %s295
      %s297 = smul.addr %s296, 4
      %s298 = scalar_lea.vmem %s5, %s297
      %s299 = smul.u32 16, %s21
      %s300 = ssub.s32 18, %s299
      %p301 = scmp.lt.s32.totalorder %s300, 16
      %s302 = scalar_select %p301, %s300, 16
      %s303 = smul.u32 64, %s302
      %s304 = smul.u32 %s303, 3
      %p305 = scmp.lt.s32.totalorder %s20, 1
      %s306 = scalar_select %p305, %s20, 1
      %p307 = scmp.lt.s32.totalorder %s299, 17
      %s308 = scalar_select %p307, %s299, 17
      %s309 = smul.addr %s308, 3
      %s310 = smul.addr %s306, 54
      %s311 = sadd.s32 %s309, %s310
      %s312 = smul.addr %s311, 4
      %s313 = scalar_lea.vmem %s0, %s312
      %s314 = smul.u32 16, %s21
      %s315 = ssub.s32 18, %s314
      %p316 = scmp.lt.s32.totalorder %s315, 16
      %s317 = scalar_select %p316, %s315, 16
      %s318 = smul.u32 64, %s317
      %s319 = smul.u32 %s318, 3
      %s320 = sadd.s32 %s21, 1
      %s321 = smul.u32 %s320, 8
      %s322 = smul.u32 2, %s321
      %p323 = scmp.lt.s32.totalorder %s20, 1
      %s324 = scalar_select %p323, %s20, 1
      %p325 = scmp.lt.s32.totalorder %s322, 17
      %s326 = scalar_select %p325, %s322, 17
      %s327 = smul.addr %s326, 3
      %s328 = smul.addr %s324, 54
      %s329 = sadd.s32 %s327, %s328
      %s330 = smul.addr %s329, 4
      %s331 = scalar_lea.vmem %s1, %s330
      %s332 = sadd.s32 %s21, 1
      %s333 = smul.u32 %s332, 8
      %s334 = smul.u32 2, %s333
      %p335 = scmp.lt.s32.totalorder %s20, 1
      %s336 = scalar_select %p335, %s20, 1
      %p337 = scmp.lt.s32.totalorder %s21, 0
      %s338 = scalar_select %p337, %s21, 0
      %s339 = smul.addr %s338, 32
      %s340 = smul.addr %s336, 32
      %s341 = sadd.s32 %s339, %s340
      %s342 = smul.addr %s341, 4
      %s343 = scalar_lea.vmem %s5, %s342
      %v345 = vld [vmem:[%s313] sm:$0xf]
      %v346 = vld [vmem:[%s313 + $0x4] sm:$0xf]
      %v347 = vld [vmem:[%s313 + $0x8] sm:$0x1]
      %v348 = vld [vmem:[%s313 + $0xc] sm:$0xf]
      %v349 = vld [vmem:[%s313 + $0x10] sm:$0xf]
      %v350 = vld [vmem:[%s313 + $0x14] sm:$0x1]
      %v351 = vld [vmem:[%s313 + $0x18] sm:$0xf]
      %v352 = vld [vmem:[%s313 + $0x1c] sm:$0xf]
      %v353 = vld [vmem:[%s313 + $0x20] sm:$0x1]
      %v354 = vld [vmem:[%s313 + $0x24] sm:$0xf]
      %v355 = vld [vmem:[%s313 + $0x28] sm:$0xf]
      %v356 = vld [vmem:[%s313 + $0x2c] sm:$0x1]
      %v357 = vld [vmem:[%s313 + $0x30] sm:$0xf]
      %v358 = vld [vmem:[%s313 + $0x34] sm:$0xf]
      %v359 = vld [vmem:[%s313 + $0x38] sm:$0x1]
      %v360 = vld [vmem:[%s313 + $0x3c] sm:$0xf]
      %v361 = vld [vmem:[%s313 + $0x40] sm:$0xf]
      %v362 = vld [vmem:[%s313 + $0x44] sm:$0x1]
      %v363 = vld [vmem:[%s313 + $0x48] sm:$0xf]
      %v364 = vld [vmem:[%s313 + $0x4c] sm:$0xf]
      %v365 = vld [vmem:[%s313 + $0x50] sm:$0x1]
      %v366 = vld [vmem:[%s313 + $0x54] sm:$0xf]
      %v367 = vld [vmem:[%s313 + $0x58] sm:$0xf]
      %v368 = vld [vmem:[%s313 + $0x5c] sm:$0x1]
      %v369 = vld [vmem:[%s313 + $0x60] sm:$0xf]
      %v370 = vld [vmem:[%s313 + $0x64] sm:$0xf]
      %v371 = vld [vmem:[%s313 + $0x68] sm:$0x1]
      %v372 = vld [vmem:[%s313 + $0x6c] sm:$0xf]
      %v373 = vld [vmem:[%s313 + $0x70] sm:$0xf]
      %v374 = vld [vmem:[%s313 + $0x74] sm:$0x1]
      %v375 = vld [vmem:[%s313 + $0x78] sm:$0xf]
      %v376 = vld [vmem:[%s313 + $0x7c] sm:$0xf]
      %v377 = vld [vmem:[%s313 + $0x80] sm:$0x1]
      %v378 = vld [vmem:[%s313 + $0x84] sm:$0xf]
      %v379 = vld [vmem:[%s313 + $0x88] sm:$0xf]
      %v380 = vld [vmem:[%s313 + $0x8c] sm:$0x1]
      %v381 = vld [vmem:[%s313 + $0x90] sm:$0xf]
      %v382 = vld [vmem:[%s313 + $0x94] sm:$0xf]
      %v383 = vld [vmem:[%s313 + $0x98] sm:$0x1]
      %v384 = vld [vmem:[%s313 + $0x9c] sm:$0xf]
      %v385 = vld [vmem:[%s313 + $0xa0] sm:$0xf]
      %v386 = vld [vmem:[%s313 + $0xa4] sm:$0x1]
      %v387 = vld [vmem:[%s313 + $0xa8] sm:$0xf]
      %v388 = vld [vmem:[%s313 + $0xac] sm:$0xf]
      %v389 = vld [vmem:[%s313 + $0xb0] sm:$0x1]
      %v390 = vld [vmem:[%s313 + $0xb4] sm:$0xf]
      %v391 = vld [vmem:[%s313 + $0xb8] sm:$0xf]
      %v392 = vld [vmem:[%s313 + $0xbc] sm:$0x1]
      %v393 = vld [vmem:[%s331] sm:$0xf]
      %v394 = vld [vmem:[%s331 + $0x4] sm:$0xf]
      %v395 = vld [vmem:[%s331 + $0x8] sm:$0x1]
      %v396 = vld [vmem:[%s331 + $0xc] sm:$0xf]
      %v397 = vld [vmem:[%s331 + $0x10] sm:$0xf]
      %v398 = vld [vmem:[%s331 + $0x14] sm:$0x1]
      %vm399 = vsmask.f32 3328
      %vm400 = vsmask.f32 7440
      %vm401 = vmor %vm399, %vm400
      %v403 = vshrl.u32 %v345, 16
      %v405 = vrot.slane %v403, 4
      %v406 = vshll.u32 %v345, 16
      %v408 = vrot.slane %v406, 5
      %v409 = vor.u32 %v405, %v408
      %v410 = vrot.slane %v409, 4
      %v412 = vshll.u32 %v346, 16
      %v414 = vrot.slane %v412, 5
      %v415 = vsel %vm401, %v410, %v414
      %v416 = vshrl.u32 %v346, 16
      %v418 = vrot.slane %v416, 4
      %v419 = vor.u32 %v418, %v414
      %v420 = vrot.slane %v419, 4
      %v422 = vshll.u32 %v347, 16
      %v424 = vrot.slane %v422, 5
      %v425 = vsel %vm401, %v420, %v424
      %v427 = vshrl.u32 %v348, 16
      %v429 = vrot.slane %v427, 4
      %v430 = vshll.u32 %v348, 16
      %v432 = vrot.slane %v430, 5
      %v433 = vor.u32 %v429, %v432
      %v434 = vrot.slane %v433, 4
      %v436 = vshll.u32 %v349, 16
      %v438 = vrot.slane %v436, 5
      %v439 = vsel %vm401, %v434, %v438
      %v440 = vshrl.u32 %v349, 16
      %v442 = vrot.slane %v440, 4
      %v443 = vor.u32 %v442, %v438
      %v444 = vrot.slane %v443, 4
      %v446 = vshll.u32 %v350, 16
      %v448 = vrot.slane %v446, 5
      %v449 = vsel %vm401, %v444, %v448
      %v451 = vshrl.u32 %v351, 16
      %v453 = vrot.slane %v451, 4
      %v454 = vshll.u32 %v351, 16
      %v456 = vrot.slane %v454, 5
      %v457 = vor.u32 %v453, %v456
      %v458 = vrot.slane %v457, 4
      %v460 = vshll.u32 %v352, 16
      %v462 = vrot.slane %v460, 5
      %v463 = vsel %vm401, %v458, %v462
      %v464 = vshrl.u32 %v352, 16
      %v466 = vrot.slane %v464, 4
      %v467 = vor.u32 %v466, %v462
      %v468 = vrot.slane %v467, 4
      %v470 = vshll.u32 %v353, 16
      %v472 = vrot.slane %v470, 5
      %v473 = vsel %vm401, %v468, %v472
      %v475 = vshrl.u32 %v354, 16
      %v477 = vrot.slane %v475, 4
      %v478 = vshll.u32 %v354, 16
      %v480 = vrot.slane %v478, 5
      %v481 = vor.u32 %v477, %v480
      %v482 = vrot.slane %v481, 4
      %v484 = vshll.u32 %v355, 16
      %v486 = vrot.slane %v484, 5
      %v487 = vsel %vm401, %v482, %v486
      %v488 = vshrl.u32 %v355, 16
      %v490 = vrot.slane %v488, 4
      %v491 = vor.u32 %v490, %v486
      %v492 = vrot.slane %v491, 4
      %v494 = vshll.u32 %v356, 16
      %v496 = vrot.slane %v494, 5
      %v497 = vsel %vm401, %v492, %v496
      %v499 = vshrl.u32 %v357, 16
      %v501 = vrot.slane %v499, 4
      %v502 = vshll.u32 %v357, 16
      %v504 = vrot.slane %v502, 5
      %v505 = vor.u32 %v501, %v504
      %v506 = vrot.slane %v505, 4
      %v508 = vshll.u32 %v358, 16
      %v510 = vrot.slane %v508, 5
      %v511 = vsel %vm401, %v506, %v510
      %v512 = vshrl.u32 %v358, 16
      %v514 = vrot.slane %v512, 4
      %v515 = vor.u32 %v514, %v510
      %v516 = vrot.slane %v515, 4
      %v518 = vshll.u32 %v359, 16
      %v520 = vrot.slane %v518, 5
      %v521 = vsel %vm401, %v516, %v520
      %v523 = vshrl.u32 %v360, 16
      %v525 = vrot.slane %v523, 4
      %v526 = vshll.u32 %v360, 16
      %v528 = vrot.slane %v526, 5
      %v529 = vor.u32 %v525, %v528
      %v530 = vrot.slane %v529, 4
      %v532 = vshll.u32 %v361, 16
      %v534 = vrot.slane %v532, 5
      %v535 = vsel %vm401, %v530, %v534
      %v536 = vshrl.u32 %v361, 16
      %v538 = vrot.slane %v536, 4
      %v539 = vor.u32 %v538, %v534
      %v540 = vrot.slane %v539, 4
      %v542 = vshll.u32 %v362, 16
      %v544 = vrot.slane %v542, 5
      %v545 = vsel %vm401, %v540, %v544
      %v547 = vshrl.u32 %v363, 16
      %v549 = vrot.slane %v547, 4
      %v550 = vshll.u32 %v363, 16
      %v552 = vrot.slane %v550, 5
      %v553 = vor.u32 %v549, %v552
      %v554 = vrot.slane %v553, 4
      %v556 = vshll.u32 %v364, 16
      %v558 = vrot.slane %v556, 5
      %v559 = vsel %vm401, %v554, %v558
      %v560 = vshrl.u32 %v364, 16
      %v562 = vrot.slane %v560, 4
      %v563 = vor.u32 %v562, %v558
      %v564 = vrot.slane %v563, 4
      %v566 = vshll.u32 %v365, 16
      %v568 = vrot.slane %v566, 5
      %v569 = vsel %vm401, %v564, %v568
      %v571 = vshrl.u32 %v366, 16
      %v573 = vrot.slane %v571, 4
      %v574 = vshll.u32 %v366, 16
      %v576 = vrot.slane %v574, 5
      %v577 = vor.u32 %v573, %v576
      %v578 = vrot.slane %v577, 4
      %v580 = vshll.u32 %v367, 16
      %v582 = vrot.slane %v580, 5
      %v583 = vsel %vm401, %v578, %v582
      %v584 = vshrl.u32 %v367, 16
      %v586 = vrot.slane %v584, 4
      %v587 = vor.u32 %v586, %v582
      %v588 = vrot.slane %v587, 4
      %v590 = vshll.u32 %v368, 16
      %v592 = vrot.slane %v590, 5
      %v593 = vsel %vm401, %v588, %v592
      %v595 = vshrl.u32 %v369, 16
      %v597 = vrot.slane %v595, 4
      %v598 = vshll.u32 %v369, 16
      %v600 = vrot.slane %v598, 5
      %v601 = vor.u32 %v597, %v600
      %v602 = vrot.slane %v601, 4
      %v604 = vshll.u32 %v370, 16
      %v606 = vrot.slane %v604, 5
      %v607 = vsel %vm401, %v602, %v606
      %v608 = vshrl.u32 %v370, 16
      %v610 = vrot.slane %v608, 4
      %v611 = vor.u32 %v610, %v606
      %v612 = vrot.slane %v611, 4
      %v614 = vshll.u32 %v371, 16
      %v616 = vrot.slane %v614, 5
      %v617 = vsel %vm401, %v612, %v616
      %v619 = vshrl.u32 %v372, 16
      %v621 = vrot.slane %v619, 4
      %v622 = vshll.u32 %v372, 16
      %v624 = vrot.slane %v622, 5
      %v625 = vor.u32 %v621, %v624
      %v626 = vrot.slane %v625, 4
      %v628 = vshll.u32 %v373, 16
      %v630 = vrot.slane %v628, 5
      %v631 = vsel %vm401, %v626, %v630
      %v632 = vshrl.u32 %v373, 16
      %v634 = vrot.slane %v632, 4
      %v635 = vor.u32 %v634, %v630
      %v636 = vrot.slane %v635, 4
      %v638 = vshll.u32 %v374, 16
      %v640 = vrot.slane %v638, 5
      %v641 = vsel %vm401, %v636, %v640
      %v643 = vshrl.u32 %v375, 16
      %v645 = vrot.slane %v643, 4
      %v646 = vshll.u32 %v375, 16
      %v648 = vrot.slane %v646, 5
      %v649 = vor.u32 %v645, %v648
      %v650 = vrot.slane %v649, 4
      %v652 = vshll.u32 %v376, 16
      %v654 = vrot.slane %v652, 5
      %v655 = vsel %vm401, %v650, %v654
      %v656 = vshrl.u32 %v376, 16
      %v658 = vrot.slane %v656, 4
      %v659 = vor.u32 %v658, %v654
      %v660 = vrot.slane %v659, 4
      %v662 = vshll.u32 %v377, 16
      %v664 = vrot.slane %v662, 5
      %v665 = vsel %vm401, %v660, %v664
      %v667 = vshrl.u32 %v378, 16
      %v669 = vrot.slane %v667, 4
      %v670 = vshll.u32 %v378, 16
      %v672 = vrot.slane %v670, 5
      %v673 = vor.u32 %v669, %v672
      %v674 = vrot.slane %v673, 4
      %v676 = vshll.u32 %v379, 16
      %v678 = vrot.slane %v676, 5
      %v679 = vsel %vm401, %v674, %v678
      %v680 = vshrl.u32 %v379, 16
      %v682 = vrot.slane %v680, 4
      %v683 = vor.u32 %v682, %v678
      %v684 = vrot.slane %v683, 4
      %v686 = vshll.u32 %v380, 16
      %v688 = vrot.slane %v686, 5
      %v689 = vsel %vm401, %v684, %v688
      %v691 = vshrl.u32 %v381, 16
      %v693 = vrot.slane %v691, 4
      %v694 = vshll.u32 %v381, 16
      %v696 = vrot.slane %v694, 5
      %v697 = vor.u32 %v693, %v696
      %v698 = vrot.slane %v697, 4
      %v700 = vshll.u32 %v382, 16
      %v702 = vrot.slane %v700, 5
      %v703 = vsel %vm401, %v698, %v702
      %v704 = vshrl.u32 %v382, 16
      %v706 = vrot.slane %v704, 4
      %v707 = vor.u32 %v706, %v702
      %v708 = vrot.slane %v707, 4
      %v710 = vshll.u32 %v383, 16
      %v712 = vrot.slane %v710, 5
      %v713 = vsel %vm401, %v708, %v712
      %v715 = vshrl.u32 %v384, 16
      %v717 = vrot.slane %v715, 4
      %v718 = vshll.u32 %v384, 16
      %v720 = vrot.slane %v718, 5
      %v721 = vor.u32 %v717, %v720
      %v722 = vrot.slane %v721, 4
      %v724 = vshll.u32 %v385, 16
      %v726 = vrot.slane %v724, 5
      %v727 = vsel %vm401, %v722, %v726
      %v728 = vshrl.u32 %v385, 16
      %v730 = vrot.slane %v728, 4
      %v731 = vor.u32 %v730, %v726
      %v732 = vrot.slane %v731, 4
      %v734 = vshll.u32 %v386, 16
      %v736 = vrot.slane %v734, 5
      %v737 = vsel %vm401, %v732, %v736
      %v739 = vshrl.u32 %v387, 16
      %v741 = vrot.slane %v739, 4
      %v742 = vshll.u32 %v387, 16
      %v744 = vrot.slane %v742, 5
      %v745 = vor.u32 %v741, %v744
      %v746 = vrot.slane %v745, 4
      %v748 = vshll.u32 %v388, 16
      %v750 = vrot.slane %v748, 5
      %v751 = vsel %vm401, %v746, %v750
      %v752 = vshrl.u32 %v388, 16
      %v754 = vrot.slane %v752, 4
      %v755 = vor.u32 %v754, %v750
      %v756 = vrot.slane %v755, 4
      %v758 = vshll.u32 %v389, 16
      %v760 = vrot.slane %v758, 5
      %v761 = vsel %vm401, %v756, %v760
      %v763 = vshrl.u32 %v390, 16
      %v765 = vrot.slane %v763, 4
      %v766 = vshll.u32 %v390, 16
      %v768 = vrot.slane %v766, 5
      %v769 = vor.u32 %v765, %v768
      %v770 = vrot.slane %v769, 4
      %v772 = vshll.u32 %v391, 16
      %v774 = vrot.slane %v772, 5
      %v775 = vsel %vm401, %v770, %v774
      %v776 = vshrl.u32 %v391, 16
      %v778 = vrot.slane %v776, 4
      %v779 = vor.u32 %v778, %v774
      %v780 = vrot.slane %v779, 4
      %v782 = vshll.u32 %v392, 16
      %v784 = vrot.slane %v782, 5
      %v785 = vsel %vm401, %v780, %v784
      %vm834 = vcmask 1042432
      %vm835 = vcmask 1046532
      %vm836 = vmor %vm834, %vm835
      %v837 = vrot.slane %v345, 5
      %v838 = vrot.slane %v837, 4
      %v839 = vrot.slane %v346, 5
      %v840 = vsel %vm836, %v838, %v839
      %v841 = vrot.slane %v839, 4
      %v842 = vrot.slane %v347, 5
      %v843 = vsel %vm836, %v841, %v842
      %v844 = vrot.slane %v348, 5
      %v845 = vrot.slane %v844, 4
      %v846 = vrot.slane %v349, 5
      %v847 = vsel %vm836, %v845, %v846
      %v848 = vrot.slane %v846, 4
      %v849 = vrot.slane %v350, 5
      %v850 = vsel %vm836, %v848, %v849
      %v851 = vrot.slane %v351, 5
      %v852 = vrot.slane %v851, 4
      %v853 = vrot.slane %v352, 5
      %v854 = vsel %vm836, %v852, %v853
      %v855 = vrot.slane %v853, 4
      %v856 = vrot.slane %v353, 5
      %v857 = vsel %vm836, %v855, %v856
      %v858 = vrot.slane %v354, 5
      %v859 = vrot.slane %v858, 4
      %v860 = vrot.slane %v355, 5
      %v861 = vsel %vm836, %v859, %v860
      %v862 = vrot.slane %v860, 4
      %v863 = vrot.slane %v356, 5
      %v864 = vsel %vm836, %v862, %v863
      %v865 = vrot.slane %v357, 5
      %v866 = vrot.slane %v865, 4
      %v867 = vrot.slane %v358, 5
      %v868 = vsel %vm836, %v866, %v867
      %v869 = vrot.slane %v867, 4
      %v870 = vrot.slane %v359, 5
      %v871 = vsel %vm836, %v869, %v870
      %v872 = vrot.slane %v360, 5
      %v873 = vrot.slane %v872, 4
      %v874 = vrot.slane %v361, 5
      %v875 = vsel %vm836, %v873, %v874
      %v876 = vrot.slane %v874, 4
      %v877 = vrot.slane %v362, 5
      %v878 = vsel %vm836, %v876, %v877
      %v879 = vrot.slane %v363, 5
      %v880 = vrot.slane %v879, 4
      %v881 = vrot.slane %v364, 5
      %v882 = vsel %vm836, %v880, %v881
      %v883 = vrot.slane %v881, 4
      %v884 = vrot.slane %v365, 5
      %v885 = vsel %vm836, %v883, %v884
      %v886 = vrot.slane %v366, 5
      %v887 = vrot.slane %v886, 4
      %v888 = vrot.slane %v367, 5
      %v889 = vsel %vm836, %v887, %v888
      %v890 = vrot.slane %v888, 4
      %v891 = vrot.slane %v368, 5
      %v892 = vsel %vm836, %v890, %v891
      %v893 = vrot.slane %v369, 5
      %v894 = vrot.slane %v893, 4
      %v895 = vrot.slane %v370, 5
      %v896 = vsel %vm836, %v894, %v895
      %v897 = vrot.slane %v895, 4
      %v898 = vrot.slane %v371, 5
      %v899 = vsel %vm836, %v897, %v898
      %v900 = vrot.slane %v372, 5
      %v901 = vrot.slane %v900, 4
      %v902 = vrot.slane %v373, 5
      %v903 = vsel %vm836, %v901, %v902
      %v904 = vrot.slane %v902, 4
      %v905 = vrot.slane %v374, 5
      %v906 = vsel %vm836, %v904, %v905
      %v907 = vrot.slane %v375, 5
      %v908 = vrot.slane %v907, 4
      %v909 = vrot.slane %v376, 5
      %v910 = vsel %vm836, %v908, %v909
      %v911 = vrot.slane %v909, 4
      %v912 = vrot.slane %v377, 5
      %v913 = vsel %vm836, %v911, %v912
      %v914 = vrot.slane %v378, 5
      %v915 = vrot.slane %v914, 4
      %v916 = vrot.slane %v379, 5
      %v917 = vsel %vm836, %v915, %v916
      %v918 = vrot.slane %v916, 4
      %v919 = vrot.slane %v380, 5
      %v920 = vsel %vm836, %v918, %v919
      %v921 = vrot.slane %v381, 5
      %v922 = vrot.slane %v921, 4
      %v923 = vrot.slane %v382, 5
      %v924 = vsel %vm836, %v922, %v923
      %v925 = vrot.slane %v923, 4
      %v926 = vrot.slane %v383, 5
      %v927 = vsel %vm836, %v925, %v926
      %v928 = vrot.slane %v384, 5
      %v929 = vrot.slane %v928, 4
      %v930 = vrot.slane %v385, 5
      %v931 = vsel %vm836, %v929, %v930
      %v932 = vrot.slane %v930, 4
      %v933 = vrot.slane %v386, 5
      %v934 = vsel %vm836, %v932, %v933
      %v935 = vrot.slane %v387, 5
      %v936 = vrot.slane %v935, 4
      %v937 = vrot.slane %v388, 5
      %v938 = vsel %vm836, %v936, %v937
      %v939 = vrot.slane %v937, 4
      %v940 = vrot.slane %v389, 5
      %v941 = vsel %vm836, %v939, %v940
      %v942 = vrot.slane %v390, 5
      %v943 = vrot.slane %v942, 4
      %v944 = vrot.slane %v391, 5
      %v945 = vsel %vm836, %v943, %v944
      %v946 = vrot.slane %v944, 4
      %v947 = vrot.slane %v392, 5
      %v948 = vsel %vm836, %v946, %v947
      %v950 = vshrl.u32 %v393, 16
      %v952 = vrot.slane %v950, 4
      %v953 = vshll.u32 %v393, 16
      %v955 = vrot.slane %v953, 5
      %v956 = vor.u32 %v952, %v955
      %v957 = vrot.slane %v956, 4
      %v959 = vshll.u32 %v394, 16
      %v961 = vrot.slane %v959, 5
      %v962 = vsel %vm401, %v957, %v961
      %v963 = vshrl.u32 %v394, 16
      %v965 = vrot.slane %v963, 4
      %v966 = vor.u32 %v965, %v961
      %v967 = vrot.slane %v966, 4
      %v969 = vshll.u32 %v395, 16
      %v971 = vrot.slane %v969, 5
      %v972 = vsel %vm401, %v967, %v971
      %v976 = vrot.slane %v393, 5
      %v977 = vrot.slane %v976, 4
      %v978 = vrot.slane %v394, 5
      %v979 = vsel %vm836, %v977, %v978
      %v980 = vrot.slane %v978, 4
      %v981 = vrot.slane %v395, 5
      %v982 = vsel %vm836, %v980, %v981
      %v984 = vshrl.u32 %v396, 16
      %v986 = vrot.slane %v984, 4
      %v987 = vshll.u32 %v396, 16
      %v989 = vrot.slane %v987, 5
      %v990 = vor.u32 %v986, %v989
      %v991 = vrot.slane %v990, 4
      %v993 = vshll.u32 %v397, 16
      %v995 = vrot.slane %v993, 5
      %v996 = vsel %vm401, %v991, %v995
      %v997 = vshrl.u32 %v397, 16
      %v999 = vrot.slane %v997, 4
      %v1000 = vor.u32 %v999, %v995
      %v1001 = vrot.slane %v1000, 4
      %v1003 = vshll.u32 %v398, 16
      %v1005 = vrot.slane %v1003, 5
      %v1006 = vsel %vm401, %v1001, %v1005
      %v1010 = vrot.slane %v396, 5
      %v1011 = vrot.slane %v1010, 4
      %v1012 = vrot.slane %v397, 5
      %v1013 = vsel %vm836, %v1011, %v1012
      %v1014 = vrot.slane %v1012, 4
      %v1015 = vrot.slane %v398, 5
      %v1016 = vsel %vm836, %v1014, %v1015
      %v1017 = vunpack.c.l.b16 %v345
      %v1018 = vunpack.c.l.b16 %v346
      %v1019 = vunpack.c.l.b16 %v348
      %v1020 = vunpack.c.l.b16 %v349
      %v1021 = vunpack.c.l.b16 %v351
      %v1022 = vunpack.c.l.b16 %v352
      %v1023 = vunpack.c.l.b16 %v354
      %v1024 = vunpack.c.l.b16 %v355
      %v1025 = vunpack.c.l.b16 %v357
      %v1026 = vunpack.c.l.b16 %v358
      %v1027 = vunpack.c.l.b16 %v360
      %v1028 = vunpack.c.l.b16 %v361
      %v1029 = vunpack.c.l.b16 %v363
      %v1030 = vunpack.c.l.b16 %v364
      %v1031 = vunpack.c.l.b16 %v366
      %v1032 = vunpack.c.l.b16 %v367
      %v1033 = vunpack.c.l.b16 %v369
      %v1034 = vunpack.c.l.b16 %v370
      %v1035 = vunpack.c.l.b16 %v372
      %v1036 = vunpack.c.l.b16 %v373
      %v1037 = vunpack.c.l.b16 %v375
      %v1038 = vunpack.c.l.b16 %v376
      %v1039 = vunpack.c.l.b16 %v378
      %v1040 = vunpack.c.l.b16 %v379
      %v1041 = vunpack.c.l.b16 %v381
      %v1042 = vunpack.c.l.b16 %v382
      %v1043 = vunpack.c.l.b16 %v384
      %v1044 = vunpack.c.l.b16 %v385
      %v1045 = vunpack.c.l.b16 %v387
      %v1046 = vunpack.c.l.b16 %v388
      %v1047 = vunpack.c.l.b16 %v390
      %v1048 = vunpack.c.l.b16 %v391
      %v1049 = vpack.c.b16 %v1018, %v1017
      %v1050 = vpack.c.b16 %v1020, %v1019
      %v1051 = vpack.c.b16 %v1022, %v1021
      %v1052 = vpack.c.b16 %v1024, %v1023
      %v1053 = vpack.c.b16 %v1026, %v1025
      %v1054 = vpack.c.b16 %v1028, %v1027
      %v1055 = vpack.c.b16 %v1030, %v1029
      %v1056 = vpack.c.b16 %v1032, %v1031
      %v1057 = vpack.c.b16 %v1034, %v1033
      %v1058 = vpack.c.b16 %v1036, %v1035
      %v1059 = vpack.c.b16 %v1038, %v1037
      %v1060 = vpack.c.b16 %v1040, %v1039
      %v1061 = vpack.c.b16 %v1042, %v1041
      %v1062 = vpack.c.b16 %v1044, %v1043
      %v1063 = vpack.c.b16 %v1046, %v1045
      %v1064 = vpack.c.b16 %v1048, %v1047
      %v1065 = vunpack.c.l.b16 %v415
      %v1066 = vunpack.c.l.b16 %v425
      %v1067 = vunpack.c.l.b16 %v439
      %v1068 = vunpack.c.l.b16 %v449
      %v1069 = vunpack.c.l.b16 %v463
      %v1070 = vunpack.c.l.b16 %v473
      %v1071 = vunpack.c.l.b16 %v487
      %v1072 = vunpack.c.l.b16 %v497
      %v1073 = vunpack.c.l.b16 %v511
      %v1074 = vunpack.c.l.b16 %v521
      %v1075 = vunpack.c.l.b16 %v535
      %v1076 = vunpack.c.l.b16 %v545
      %v1077 = vunpack.c.l.b16 %v559
      %v1078 = vunpack.c.l.b16 %v569
      %v1079 = vunpack.c.l.b16 %v583
      %v1080 = vunpack.c.l.b16 %v593
      %v1081 = vunpack.c.l.b16 %v607
      %v1082 = vunpack.c.l.b16 %v617
      %v1083 = vunpack.c.l.b16 %v631
      %v1084 = vunpack.c.l.b16 %v641
      %v1085 = vunpack.c.l.b16 %v655
      %v1086 = vunpack.c.l.b16 %v665
      %v1087 = vunpack.c.l.b16 %v679
      %v1088 = vunpack.c.l.b16 %v689
      %v1089 = vunpack.c.l.b16 %v703
      %v1090 = vunpack.c.l.b16 %v713
      %v1091 = vunpack.c.l.b16 %v727
      %v1092 = vunpack.c.l.b16 %v737
      %v1093 = vunpack.c.l.b16 %v751
      %v1094 = vunpack.c.l.b16 %v761
      %v1095 = vunpack.c.l.b16 %v775
      %v1096 = vunpack.c.l.b16 %v785
      %v1097 = vpack.c.b16 %v1066, %v1065
      %v1098 = vpack.c.b16 %v1068, %v1067
      %v1099 = vpack.c.b16 %v1070, %v1069
      %v1100 = vpack.c.b16 %v1072, %v1071
      %v1101 = vpack.c.b16 %v1074, %v1073
      %v1102 = vpack.c.b16 %v1076, %v1075
      %v1103 = vpack.c.b16 %v1078, %v1077
      %v1104 = vpack.c.b16 %v1080, %v1079
      %v1105 = vpack.c.b16 %v1082, %v1081
      %v1106 = vpack.c.b16 %v1084, %v1083
      %v1107 = vpack.c.b16 %v1086, %v1085
      %v1108 = vpack.c.b16 %v1088, %v1087
      %v1109 = vpack.c.b16 %v1090, %v1089
      %v1110 = vpack.c.b16 %v1092, %v1091
      %v1111 = vpack.c.b16 %v1094, %v1093
      %v1112 = vpack.c.b16 %v1096, %v1095
      %1113 = vrot.lane.b32.xlu0 %v1097, 4
      %v1114 = vpop.permute.xlu0 %1113
      %1115 = vrot.lane.b32.xlu0 %v1098, 4
      %v1116 = vpop.permute.xlu0 %1115
      %1117 = vrot.lane.b32.xlu0 %v1099, 4
      %v1118 = vpop.permute.xlu0 %1117
      %1119 = vrot.lane.b32.xlu0 %v1100, 4
      %v1120 = vpop.permute.xlu0 %1119
      %1121 = vrot.lane.b32.xlu0 %v1101, 4
      %v1122 = vpop.permute.xlu0 %1121
      %1123 = vrot.lane.b32.xlu0 %v1102, 4
      %v1124 = vpop.permute.xlu0 %1123
      %1125 = vrot.lane.b32.xlu0 %v1103, 4
      %v1126 = vpop.permute.xlu0 %1125
      %1127 = vrot.lane.b32.xlu0 %v1104, 4
      %v1128 = vpop.permute.xlu0 %1127
      %1129 = vrot.lane.b32.xlu0 %v1105, 4
      %v1130 = vpop.permute.xlu0 %1129
      %1131 = vrot.lane.b32.xlu0 %v1106, 4
      %v1132 = vpop.permute.xlu0 %1131
      %1133 = vrot.lane.b32.xlu0 %v1107, 4
      %v1134 = vpop.permute.xlu0 %1133
      %1135 = vrot.lane.b32.xlu0 %v1108, 4
      %v1136 = vpop.permute.xlu0 %1135
      %1137 = vrot.lane.b32.xlu0 %v1109, 4
      %v1138 = vpop.permute.xlu0 %1137
      %1139 = vrot.lane.b32.xlu0 %v1110, 4
      %v1140 = vpop.permute.xlu0 %1139
      %1141 = vrot.lane.b32.xlu0 %v1111, 4
      %v1142 = vpop.permute.xlu0 %1141
      %1143 = vrot.lane.b32.xlu0 %v1112, 4
      %v1144 = vpop.permute.xlu0 %1143
      %v1145 = vunpack.c.l.b16 %v840
      %v1146 = vunpack.c.l.b16 %v843
      %v1147 = vunpack.c.l.b16 %v847
      %v1148 = vunpack.c.l.b16 %v850
      %v1149 = vunpack.c.l.b16 %v854
      %v1150 = vunpack.c.l.b16 %v857
      %v1151 = vunpack.c.l.b16 %v861
      %v1152 = vunpack.c.l.b16 %v864
      %v1153 = vunpack.c.l.b16 %v868
      %v1154 = vunpack.c.l.b16 %v871
      %v1155 = vunpack.c.l.b16 %v875
      %v1156 = vunpack.c.l.b16 %v878
      %v1157 = vunpack.c.l.b16 %v882
      %v1158 = vunpack.c.l.b16 %v885
      %v1159 = vunpack.c.l.b16 %v889
      %v1160 = vunpack.c.l.b16 %v892
      %v1161 = vunpack.c.l.b16 %v896
      %v1162 = vunpack.c.l.b16 %v899
      %v1163 = vunpack.c.l.b16 %v903
      %v1164 = vunpack.c.l.b16 %v906
      %v1165 = vunpack.c.l.b16 %v910
      %v1166 = vunpack.c.l.b16 %v913
      %v1167 = vunpack.c.l.b16 %v917
      %v1168 = vunpack.c.l.b16 %v920
      %v1169 = vunpack.c.l.b16 %v924
      %v1170 = vunpack.c.l.b16 %v927
      %v1171 = vunpack.c.l.b16 %v931
      %v1172 = vunpack.c.l.b16 %v934
      %v1173 = vunpack.c.l.b16 %v938
      %v1174 = vunpack.c.l.b16 %v941
      %v1175 = vunpack.c.l.b16 %v945
      %v1176 = vunpack.c.l.b16 %v948
      %v1177 = vpack.c.b16 %v1146, %v1145
      %v1178 = vpack.c.b16 %v1148, %v1147
      %v1179 = vpack.c.b16 %v1150, %v1149
      %v1180 = vpack.c.b16 %v1152, %v1151
      %v1181 = vpack.c.b16 %v1154, %v1153
      %v1182 = vpack.c.b16 %v1156, %v1155
      %v1183 = vpack.c.b16 %v1158, %v1157
      %v1184 = vpack.c.b16 %v1160, %v1159
      %v1185 = vpack.c.b16 %v1162, %v1161
      %v1186 = vpack.c.b16 %v1164, %v1163
      %v1187 = vpack.c.b16 %v1166, %v1165
      %v1188 = vpack.c.b16 %v1168, %v1167
      %v1189 = vpack.c.b16 %v1170, %v1169
      %v1190 = vpack.c.b16 %v1172, %v1171
      %v1191 = vpack.c.b16 %v1174, %v1173
      %v1192 = vpack.c.b16 %v1176, %v1175
      %1193 = vrot.lane.b32.xlu0 %v1177, 8
      %v1194 = vpop.permute.xlu0 %1193
      %1195 = vrot.lane.b32.xlu0 %v1178, 8
      %v1196 = vpop.permute.xlu0 %1195
      %1197 = vrot.lane.b32.xlu0 %v1179, 8
      %v1198 = vpop.permute.xlu0 %1197
      %1199 = vrot.lane.b32.xlu0 %v1180, 8
      %v1200 = vpop.permute.xlu0 %1199
      %1201 = vrot.lane.b32.xlu0 %v1181, 8
      %v1202 = vpop.permute.xlu0 %1201
      %1203 = vrot.lane.b32.xlu0 %v1182, 8
      %v1204 = vpop.permute.xlu0 %1203
      %1205 = vrot.lane.b32.xlu0 %v1183, 8
      %v1206 = vpop.permute.xlu0 %1205
      %1207 = vrot.lane.b32.xlu0 %v1184, 8
      %v1208 = vpop.permute.xlu0 %1207
      %1209 = vrot.lane.b32.xlu0 %v1185, 8
      %v1210 = vpop.permute.xlu0 %1209
      %1211 = vrot.lane.b32.xlu0 %v1186, 8
      %v1212 = vpop.permute.xlu0 %1211
      %1213 = vrot.lane.b32.xlu0 %v1187, 8
      %v1214 = vpop.permute.xlu0 %1213
      %1215 = vrot.lane.b32.xlu0 %v1188, 8
      %v1216 = vpop.permute.xlu0 %1215
      %1217 = vrot.lane.b32.xlu0 %v1189, 8
      %v1218 = vpop.permute.xlu0 %1217
      %1219 = vrot.lane.b32.xlu0 %v1190, 8
      %v1220 = vpop.permute.xlu0 %1219
      %1221 = vrot.lane.b32.xlu0 %v1191, 8
      %v1222 = vpop.permute.xlu0 %1221
      %1223 = vrot.lane.b32.xlu0 %v1192, 8
      %v1224 = vpop.permute.xlu0 %1223
      %v1225 = vunpack.c.l.b16 %v393
      %v1226 = vunpack.c.l.b16 %v394
      %v1227 = vpack.c.b16 %v1226, %v1225
      %1228 = vrot.lane.b32.xlu0 %v1050, 12
      %v1229 = vpop.permute.xlu0 %1228
      %1230 = vrot.lane.b32.xlu0 %v1051, 12
      %v1231 = vpop.permute.xlu0 %1230
      %1232 = vrot.lane.b32.xlu0 %v1052, 12
      %v1233 = vpop.permute.xlu0 %1232
      %1234 = vrot.lane.b32.xlu0 %v1053, 12
      %v1235 = vpop.permute.xlu0 %1234
      %1236 = vrot.lane.b32.xlu0 %v1054, 12
      %v1237 = vpop.permute.xlu0 %1236
      %1238 = vrot.lane.b32.xlu0 %v1055, 12
      %v1239 = vpop.permute.xlu0 %1238
      %1240 = vrot.lane.b32.xlu0 %v1056, 12
      %v1241 = vpop.permute.xlu0 %1240
      %1242 = vrot.lane.b32.xlu0 %v1057, 12
      %v1243 = vpop.permute.xlu0 %1242
      %1244 = vrot.lane.b32.xlu0 %v1058, 12
      %v1245 = vpop.permute.xlu0 %1244
      %1246 = vrot.lane.b32.xlu0 %v1059, 12
      %v1247 = vpop.permute.xlu0 %1246
      %1248 = vrot.lane.b32.xlu0 %v1060, 12
      %v1249 = vpop.permute.xlu0 %1248
      %1250 = vrot.lane.b32.xlu0 %v1061, 12
      %v1251 = vpop.permute.xlu0 %1250
      %1252 = vrot.lane.b32.xlu0 %v1062, 12
      %v1253 = vpop.permute.xlu0 %1252
      %1254 = vrot.lane.b32.xlu0 %v1063, 12
      %v1255 = vpop.permute.xlu0 %1254
      %1256 = vrot.lane.b32.xlu0 %v1064, 12
      %v1257 = vpop.permute.xlu0 %1256
      %1258 = vrot.lane.b32.xlu0 %v1227, 12
      %v1259 = vpop.permute.xlu0 %1258
      %v1260 = vunpack.c.l.b16 %v962
      %v1261 = vunpack.c.l.b16 %v972
      %v1262 = vpack.c.b16 %v1261, %v1260
      %1263 = vrot.lane.b32.xlu0 %v1098, 16
      %v1264 = vpop.permute.xlu0 %1263
      %1265 = vrot.lane.b32.xlu0 %v1099, 16
      %v1266 = vpop.permute.xlu0 %1265
      %1267 = vrot.lane.b32.xlu0 %v1100, 16
      %v1268 = vpop.permute.xlu0 %1267
      %1269 = vrot.lane.b32.xlu0 %v1101, 16
      %v1270 = vpop.permute.xlu0 %1269
      %1271 = vrot.lane.b32.xlu0 %v1102, 16
      %v1272 = vpop.permute.xlu0 %1271
      %1273 = vrot.lane.b32.xlu0 %v1103, 16
      %v1274 = vpop.permute.xlu0 %1273
      %1275 = vrot.lane.b32.xlu0 %v1104, 16
      %v1276 = vpop.permute.xlu0 %1275
      %1277 = vrot.lane.b32.xlu0 %v1105, 16
      %v1278 = vpop.permute.xlu0 %1277
      %1279 = vrot.lane.b32.xlu0 %v1106, 16
      %v1280 = vpop.permute.xlu0 %1279
      %1281 = vrot.lane.b32.xlu0 %v1107, 16
      %v1282 = vpop.permute.xlu0 %1281
      %1283 = vrot.lane.b32.xlu0 %v1108, 16
      %v1284 = vpop.permute.xlu0 %1283
      %1285 = vrot.lane.b32.xlu0 %v1109, 16
      %v1286 = vpop.permute.xlu0 %1285
      %1287 = vrot.lane.b32.xlu0 %v1110, 16
      %v1288 = vpop.permute.xlu0 %1287
      %1289 = vrot.lane.b32.xlu0 %v1111, 16
      %v1290 = vpop.permute.xlu0 %1289
      %1291 = vrot.lane.b32.xlu0 %v1112, 16
      %v1292 = vpop.permute.xlu0 %1291
      %1293 = vrot.lane.b32.xlu0 %v1262, 16
      %v1294 = vpop.permute.xlu0 %1293
      %v1295 = vunpack.c.l.b16 %v979
      %v1296 = vunpack.c.l.b16 %v982
      %v1297 = vpack.c.b16 %v1296, %v1295
      %1298 = vrot.lane.b32.xlu0 %v1178, 20
      %v1299 = vpop.permute.xlu0 %1298
      %1300 = vrot.lane.b32.xlu0 %v1179, 20
      %v1301 = vpop.permute.xlu0 %1300
      %1302 = vrot.lane.b32.xlu0 %v1180, 20
      %v1303 = vpop.permute.xlu0 %1302
      %1304 = vrot.lane.b32.xlu0 %v1181, 20
      %v1305 = vpop.permute.xlu0 %1304
      %1306 = vrot.lane.b32.xlu0 %v1182, 20
      %v1307 = vpop.permute.xlu0 %1306
      %1308 = vrot.lane.b32.xlu0 %v1183, 20
      %v1309 = vpop.permute.xlu0 %1308
      %1310 = vrot.lane.b32.xlu0 %v1184, 20
      %v1311 = vpop.permute.xlu0 %1310
      %1312 = vrot.lane.b32.xlu0 %v1185, 20
      %v1313 = vpop.permute.xlu0 %1312
      %1314 = vrot.lane.b32.xlu0 %v1186, 20
      %v1315 = vpop.permute.xlu0 %1314
      %1316 = vrot.lane.b32.xlu0 %v1187, 20
      %v1317 = vpop.permute.xlu0 %1316
      %1318 = vrot.lane.b32.xlu0 %v1188, 20
      %v1319 = vpop.permute.xlu0 %1318
      %1320 = vrot.lane.b32.xlu0 %v1189, 20
      %v1321 = vpop.permute.xlu0 %1320
      %1322 = vrot.lane.b32.xlu0 %v1190, 20
      %v1323 = vpop.permute.xlu0 %1322
      %1324 = vrot.lane.b32.xlu0 %v1191, 20
      %v1325 = vpop.permute.xlu0 %1324
      %1326 = vrot.lane.b32.xlu0 %v1192, 20
      %v1327 = vpop.permute.xlu0 %1326
      %1328 = vrot.lane.b32.xlu0 %v1297, 20
      %v1329 = vpop.permute.xlu0 %1328
      %v1330 = vunpack.c.l.b16 %v396
      %v1331 = vunpack.c.l.b16 %v397
      %v1332 = vpack.c.b16 %v1331, %v1330
      %1333 = vrot.lane.b32.xlu0 %v1051, 24
      %v1334 = vpop.permute.xlu0 %1333
      %1335 = vrot.lane.b32.xlu0 %v1052, 24
      %v1336 = vpop.permute.xlu0 %1335
      %1337 = vrot.lane.b32.xlu0 %v1053, 24
      %v1338 = vpop.permute.xlu0 %1337
      %1339 = vrot.lane.b32.xlu0 %v1054, 24
      %v1340 = vpop.permute.xlu0 %1339
      %1341 = vrot.lane.b32.xlu0 %v1055, 24
      %v1342 = vpop.permute.xlu0 %1341
      %1343 = vrot.lane.b32.xlu0 %v1056, 24
      %v1344 = vpop.permute.xlu0 %1343
      %1345 = vrot.lane.b32.xlu0 %v1057, 24
      %v1346 = vpop.permute.xlu0 %1345
      %1347 = vrot.lane.b32.xlu0 %v1058, 24
      %v1348 = vpop.permute.xlu0 %1347
      %1349 = vrot.lane.b32.xlu0 %v1059, 24
      %v1350 = vpop.permute.xlu0 %1349
      %1351 = vrot.lane.b32.xlu0 %v1060, 24
      %v1352 = vpop.permute.xlu0 %1351
      %1353 = vrot.lane.b32.xlu0 %v1061, 24
      %v1354 = vpop.permute.xlu0 %1353
      %1355 = vrot.lane.b32.xlu0 %v1062, 24
      %v1356 = vpop.permute.xlu0 %1355
      %1357 = vrot.lane.b32.xlu0 %v1063, 24
      %v1358 = vpop.permute.xlu0 %1357
      %1359 = vrot.lane.b32.xlu0 %v1064, 24
      %v1360 = vpop.permute.xlu0 %1359
      %1361 = vrot.lane.b32.xlu0 %v1227, 24
      %v1362 = vpop.permute.xlu0 %1361
      %1363 = vrot.lane.b32.xlu0 %v1332, 24
      %v1364 = vpop.permute.xlu0 %1363
      %v1365 = vunpack.c.l.b16 %v996
      %v1366 = vunpack.c.l.b16 %v1006
      %v1367 = vpack.c.b16 %v1366, %v1365
      %1368 = vrot.lane.b32.xlu0 %v1099, 28
      %v1369 = vpop.permute.xlu0 %1368
      %1370 = vrot.lane.b32.xlu0 %v1100, 28
      %v1371 = vpop.permute.xlu0 %1370
      %1372 = vrot.lane.b32.xlu0 %v1101, 28
      %v1373 = vpop.permute.xlu0 %1372
      %1374 = vrot.lane.b32.xlu0 %v1102, 28
      %v1375 = vpop.permute.xlu0 %1374
      %1376 = vrot.lane.b32.xlu0 %v1103, 28
      %v1377 = vpop.permute.xlu0 %1376
      %1378 = vrot.lane.b32.xlu0 %v1104, 28
      %v1379 = vpop.permute.xlu0 %1378
      %1380 = vrot.lane.b32.xlu0 %v1105, 28
      %v1381 = vpop.permute.xlu0 %1380
      %1382 = vrot.lane.b32.xlu0 %v1106, 28
      %v1383 = vpop.permute.xlu0 %1382
      %1384 = vrot.lane.b32.xlu0 %v1107, 28
      %v1385 = vpop.permute.xlu0 %1384
      %1386 = vrot.lane.b32.xlu0 %v1108, 28
      %v1387 = vpop.permute.xlu0 %1386
      %1388 = vrot.lane.b32.xlu0 %v1109, 28
      %v1389 = vpop.permute.xlu0 %1388
      %1390 = vrot.lane.b32.xlu0 %v1110, 28
      %v1391 = vpop.permute.xlu0 %1390
      %1392 = vrot.lane.b32.xlu0 %v1111, 28
      %v1393 = vpop.permute.xlu0 %1392
      %1394 = vrot.lane.b32.xlu0 %v1112, 28
      %v1395 = vpop.permute.xlu0 %1394
      %1396 = vrot.lane.b32.xlu0 %v1262, 28
      %v1397 = vpop.permute.xlu0 %1396
      %1398 = vrot.lane.b32.xlu0 %v1367, 28
      %v1399 = vpop.permute.xlu0 %1398
      %v1400 = vunpack.c.l.b16 %v1013
      %v1401 = vunpack.c.l.b16 %v1016
      %v1402 = vpack.c.b16 %v1401, %v1400
      %1403 = vrot.lane.b32.xlu0 %v1179, 32
      %v1404 = vpop.permute.xlu0 %1403
      %1405 = vrot.lane.b32.xlu0 %v1180, 32
      %v1406 = vpop.permute.xlu0 %1405
      %1407 = vrot.lane.b32.xlu0 %v1181, 32
      %v1408 = vpop.permute.xlu0 %1407
      %1409 = vrot.lane.b32.xlu0 %v1182, 32
      %v1410 = vpop.permute.xlu0 %1409
      %1411 = vrot.lane.b32.xlu0 %v1183, 32
      %v1412 = vpop.permute.xlu0 %1411
      %1413 = vrot.lane.b32.xlu0 %v1184, 32
      %v1414 = vpop.permute.xlu0 %1413
      %1415 = vrot.lane.b32.xlu0 %v1185, 32
      %v1416 = vpop.permute.xlu0 %1415
      %1417 = vrot.lane.b32.xlu0 %v1186, 32
      %v1418 = vpop.permute.xlu0 %1417
      %1419 = vrot.lane.b32.xlu0 %v1187, 32
      %v1420 = vpop.permute.xlu0 %1419
      %1421 = vrot.lane.b32.xlu0 %v1188, 32
      %v1422 = vpop.permute.xlu0 %1421
      %1423 = vrot.lane.b32.xlu0 %v1189, 32
      %v1424 = vpop.permute.xlu0 %1423
      %1425 = vrot.lane.b32.xlu0 %v1190, 32
      %v1426 = vpop.permute.xlu0 %1425
      %1427 = vrot.lane.b32.xlu0 %v1191, 32
      %v1428 = vpop.permute.xlu0 %1427
      %1429 = vrot.lane.b32.xlu0 %v1192, 32
      %v1430 = vpop.permute.xlu0 %1429
      %1431 = vrot.lane.b32.xlu0 %v1297, 32
      %v1432 = vpop.permute.xlu0 %1431
      %1433 = vrot.lane.b32.xlu0 %v1402, 32
      %v1434 = vpop.permute.xlu0 %1433
      %vm1435 = vcmask 31744
      %v1438 = vsel %vm1435, %v1049, %v1114
      %v1441 = vsel %vm1435, %v1050, %v1116
      %v1444 = vsel %vm1435, %v1051, %v1118
      %v1447 = vsel %vm1435, %v1052, %v1120
      %v1450 = vsel %vm1435, %v1053, %v1122
      %v1453 = vsel %vm1435, %v1054, %v1124
      %v1456 = vsel %vm1435, %v1055, %v1126
      %v1459 = vsel %vm1435, %v1056, %v1128
      %v1462 = vsel %vm1435, %v1057, %v1130
      %v1465 = vsel %vm1435, %v1058, %v1132
      %v1468 = vsel %vm1435, %v1059, %v1134
      %v1471 = vsel %vm1435, %v1060, %v1136
      %v1474 = vsel %vm1435, %v1061, %v1138
      %v1477 = vsel %vm1435, %v1062, %v1140
      %v1480 = vsel %vm1435, %v1063, %v1142
      %v1483 = vsel %vm1435, %v1064, %v1144
      %vm1484 = vcmask 64512
      %v1486 = vsel %vm1484, %v1438, %v1194
      %v1488 = vsel %vm1484, %v1441, %v1196
      %v1490 = vsel %vm1484, %v1444, %v1198
      %v1492 = vsel %vm1484, %v1447, %v1200
      %v1494 = vsel %vm1484, %v1450, %v1202
      %v1496 = vsel %vm1484, %v1453, %v1204
      %v1498 = vsel %vm1484, %v1456, %v1206
      %v1500 = vsel %vm1484, %v1459, %v1208
      %v1502 = vsel %vm1484, %v1462, %v1210
      %v1504 = vsel %vm1484, %v1465, %v1212
      %v1506 = vsel %vm1484, %v1468, %v1214
      %v1508 = vsel %vm1484, %v1471, %v1216
      %v1510 = vsel %vm1484, %v1474, %v1218
      %v1512 = vsel %vm1484, %v1477, %v1220
      %v1514 = vsel %vm1484, %v1480, %v1222
      %v1516 = vsel %vm1484, %v1483, %v1224
      %vm1517 = vcmask 97280
      %v1519 = vsel %vm1517, %v1486, %v1229
      %v1521 = vsel %vm1517, %v1488, %v1231
      %v1523 = vsel %vm1517, %v1490, %v1233
      %v1525 = vsel %vm1517, %v1492, %v1235
      %v1527 = vsel %vm1517, %v1494, %v1237
      %v1529 = vsel %vm1517, %v1496, %v1239
      %v1531 = vsel %vm1517, %v1498, %v1241
      %v1533 = vsel %vm1517, %v1500, %v1243
      %v1535 = vsel %vm1517, %v1502, %v1245
      %v1537 = vsel %vm1517, %v1504, %v1247
      %v1539 = vsel %vm1517, %v1506, %v1249
      %v1541 = vsel %vm1517, %v1508, %v1251
      %v1543 = vsel %vm1517, %v1510, %v1253
      %v1545 = vsel %vm1517, %v1512, %v1255
      %v1547 = vsel %vm1517, %v1514, %v1257
      %v1549 = vsel %vm1517, %v1516, %v1259
      %vm1550 = vcmask 130048
      %v1552 = vsel %vm1550, %v1519, %v1264
      %v1554 = vsel %vm1550, %v1521, %v1266
      %v1556 = vsel %vm1550, %v1523, %v1268
      %v1558 = vsel %vm1550, %v1525, %v1270
      %v1560 = vsel %vm1550, %v1527, %v1272
      %v1562 = vsel %vm1550, %v1529, %v1274
      %v1564 = vsel %vm1550, %v1531, %v1276
      %v1566 = vsel %vm1550, %v1533, %v1278
      %v1568 = vsel %vm1550, %v1535, %v1280
      %v1570 = vsel %vm1550, %v1537, %v1282
      %v1572 = vsel %vm1550, %v1539, %v1284
      %v1574 = vsel %vm1550, %v1541, %v1286
      %v1576 = vsel %vm1550, %v1543, %v1288
      %v1578 = vsel %vm1550, %v1545, %v1290
      %v1580 = vsel %vm1550, %v1547, %v1292
      %v1582 = vsel %vm1550, %v1549, %v1294
      %vm1583 = vcmask 162816
      %v1585 = vsel %vm1583, %v1552, %v1299
      %v1587 = vsel %vm1583, %v1554, %v1301
      %v1589 = vsel %vm1583, %v1556, %v1303
      %v1591 = vsel %vm1583, %v1558, %v1305
      %v1593 = vsel %vm1583, %v1560, %v1307
      %v1595 = vsel %vm1583, %v1562, %v1309
      %v1597 = vsel %vm1583, %v1564, %v1311
      %v1599 = vsel %vm1583, %v1566, %v1313
      %v1601 = vsel %vm1583, %v1568, %v1315
      %v1603 = vsel %vm1583, %v1570, %v1317
      %v1605 = vsel %vm1583, %v1572, %v1319
      %v1607 = vsel %vm1583, %v1574, %v1321
      %v1609 = vsel %vm1583, %v1576, %v1323
      %v1611 = vsel %vm1583, %v1578, %v1325
      %v1613 = vsel %vm1583, %v1580, %v1327
      %v1615 = vsel %vm1583, %v1582, %v1329
      %vm1616 = vcmask 195584
      %v1618 = vsel %vm1616, %v1585, %v1334
      %v1620 = vsel %vm1616, %v1587, %v1336
      %v1622 = vsel %vm1616, %v1589, %v1338
      %v1624 = vsel %vm1616, %v1591, %v1340
      %v1626 = vsel %vm1616, %v1593, %v1342
      %v1628 = vsel %vm1616, %v1595, %v1344
      %v1630 = vsel %vm1616, %v1597, %v1346
      %v1632 = vsel %vm1616, %v1599, %v1348
      %v1634 = vsel %vm1616, %v1601, %v1350
      %v1636 = vsel %vm1616, %v1603, %v1352
      %v1638 = vsel %vm1616, %v1605, %v1354
      %v1640 = vsel %vm1616, %v1607, %v1356
      %v1642 = vsel %vm1616, %v1609, %v1358
      %v1644 = vsel %vm1616, %v1611, %v1360
      %v1646 = vsel %vm1616, %v1613, %v1362
      %v1648 = vsel %vm1616, %v1615, %v1364
      %vm1649 = vcmask 228352
      %v1651 = vsel %vm1649, %v1618, %v1369
      %v1653 = vsel %vm1649, %v1620, %v1371
      %v1655 = vsel %vm1649, %v1622, %v1373
      %v1657 = vsel %vm1649, %v1624, %v1375
      %v1659 = vsel %vm1649, %v1626, %v1377
      %v1661 = vsel %vm1649, %v1628, %v1379
      %v1663 = vsel %vm1649, %v1630, %v1381
      %v1665 = vsel %vm1649, %v1632, %v1383
      %v1667 = vsel %vm1649, %v1634, %v1385
      %v1669 = vsel %vm1649, %v1636, %v1387
      %v1671 = vsel %vm1649, %v1638, %v1389
      %v1673 = vsel %vm1649, %v1640, %v1391
      %v1675 = vsel %vm1649, %v1642, %v1393
      %v1677 = vsel %vm1649, %v1644, %v1395
      %v1679 = vsel %vm1649, %v1646, %v1397
      %v1681 = vsel %vm1649, %v1648, %v1399
      %vm1682 = vcmask 261120
      %v1684 = vsel %vm1682, %v1651, %v1404
      %v1686 = vsel %vm1682, %v1653, %v1406
      %v1688 = vsel %vm1682, %v1655, %v1408
      %v1690 = vsel %vm1682, %v1657, %v1410
      %v1692 = vsel %vm1682, %v1659, %v1412
      %v1694 = vsel %vm1682, %v1661, %v1414
      %v1696 = vsel %vm1682, %v1663, %v1416
      %v1698 = vsel %vm1682, %v1665, %v1418
      %v1700 = vsel %vm1682, %v1667, %v1420
      %v1702 = vsel %vm1682, %v1669, %v1422
      %v1704 = vsel %vm1682, %v1671, %v1424
      %v1706 = vsel %vm1682, %v1673, %v1426
      %v1708 = vsel %vm1682, %v1675, %v1428
      %v1710 = vsel %vm1682, %v1677, %v1430
      %v1712 = vsel %vm1682, %v1679, %v1432
      %v1714 = vsel %vm1682, %v1681, %v1434
      %v1715 = vld [vmem:[%s2] sm:$0xf]
      %v1716 = vld [vmem:[%s2 + $0x4] sm:$0xf]
      %v1717 = vld [vmem:[%s2 + $0x8] sm:$0xf]
      %v1718 = vld [vmem:[%s2 + $0xc] sm:$0xf]
      %v1719 = vld [vmem:[%s2 + $0x10] sm:$0x3]
      %v1725 = vunpack.c.l.b16 %v1715
      %v1726 = vunpack.c.l.b16 %v1716
      %v1727 = vunpack.c.l.b16 %v1717
      %v1728 = vunpack.c.l.b16 %v1718
      %v1729 = vunpack.c.l.b16 %v1719
      %v1730 = vpack.c.b16 %v1726, %v1725
      %v1731 = vpack.c.b16 %v1728, %v1727
      %v1732 = vpack.c.b16 %v1729, %v1729
      %vm1735 = vcmask 293888
      %v1736 = vsel %vm1735, %v1684, 0
      %v1738 = vsel %vm1735, %v1686, 0
      %v1740 = vsel %vm1735, %v1688, 0
      %v1742 = vsel %vm1735, %v1690, 0
      %v1744 = vsel %vm1735, %v1692, 0
      %v1746 = vsel %vm1735, %v1694, 0
      %v1748 = vsel %vm1735, %v1696, 0
      %v1750 = vsel %vm1735, %v1698, 0
      %v1752 = vsel %vm1735, %v1700, 0
      %v1754 = vsel %vm1735, %v1702, 0
      %v1756 = vsel %vm1735, %v1704, 0
      %v1758 = vsel %vm1735, %v1706, 0
      %v1760 = vsel %vm1735, %v1708, 0
      %v1762 = vsel %vm1735, %v1710, 0
      %v1764 = vsel %vm1735, %v1712, 0
      %v1766 = vsel %vm1735, %v1714, 0
      %vm1768 = vcmask 1041408
      %v1770 = vsel %vm1768, %v1732, 0
      %1772 = vmatprep.subr.bf16.mxu0 0
      %1773 = vmatpush1.bf16.msra.mxu0 0
      %1774 = vmatprep.subr.bf16.mxu0 0
      %1775 = vmatpush1.bf16.msra.mxu0 0
      %1776 = vmatprep.subr.bf16.mxu0 0
      %1777 = vmatpush1.bf16.msra.mxu0 0
      %1778 = vmatprep.subr.bf16.mxu0 0
      %1779 = vmatpush1.bf16.msra.mxu0 0
      %1780 = vmatprep.subr.bf16.mxu0 0
      %1781 = vmatpush1.bf16.msra.mxu0 0
      %1782 = vmatprep.subr.bf16.mxu0 0
      %1783 = vmatpush1.bf16.msra.mxu0 %v1770
      %1784 = vmatprep.subr.bf16.mxu0 0
      %1785 = vmatpush1.bf16.msra.mxu0 %v1731
      %1786 = vmatprep.subr.bf16.mxu0 0
      %1787 = vmatpush1.bf16.msra.mxu0 %v1730
      %1788 = vmatprep.subr.bf16.mxu0 0
      %1789 = vmatpush2.bf16.msra.mxu0 0
      %1790 = vmatprep.subr.bf16.mxu0 0
      %1791 = vmatpush2.bf16.msra.mxu0 0
      %1792 = vmatprep.subr.bf16.mxu0 0
      %1793 = vmatpush2.bf16.msra.mxu0 0
      %1794 = vmatprep.subr.bf16.mxu0 0
      %1795 = vmatpush2.bf16.msra.mxu0 0
      %1796 = vmatprep.subr.bf16.mxu0 0
      %1797 = vmatpush2.bf16.msra.mxu0 0
      %1798 = vmatprep.subr.bf16.mxu0 0
      %1799 = vmatpush2.bf16.msra.mxu0 0
      %1800 = vmatprep.subr.bf16.mxu0 0
      %1801 = vmatpush2.bf16.msra.mxu0 0
      %1802 = vmatprep.subr.bf16.mxu0 0
      %1803 = vmatpush2.bf16.msra.mxu0 0
      %1804 = vmatprep.mubr.bf16.mxu0 0
      %1805 = vmatmul.mubr.bf16.gmra.mxu0 %v1736
      %v1806 = vpop.f32.mrf.mxu0
      %v1807 = vadd.f32 0.0, %v1806
      %v1808 = vpop.f32.mrf.mxu0
      %v1809 = vpop.f32.mrf.mxu0
      %v1810 = vadd.f32 0.0, %v1809
      %v1811 = vpop.f32.mrf.mxu0
      %1812 = vmatprep.mubr.bf16.mxu0 0
      %1813 = vmatmul.mubr.bf16.gmra.mxu0 %v1738
      %v1814 = vpop.f32.mrf.mxu0
      %v1815 = vadd.f32 0.0, %v1814
      %v1816 = vpop.f32.mrf.mxu0
      %v1817 = vpop.f32.mrf.mxu0
      %v1818 = vadd.f32 0.0, %v1817
      %v1819 = vpop.f32.mrf.mxu0
      %1820 = vmatprep.mubr.bf16.mxu0 0
      %1821 = vmatmul.mubr.bf16.gmra.mxu0 %v1740
      %v1822 = vpop.f32.mrf.mxu0
      %v1823 = vadd.f32 0.0, %v1822
      %v1824 = vpop.f32.mrf.mxu0
      %v1825 = vpop.f32.mrf.mxu0
      %v1826 = vadd.f32 0.0, %v1825
      %v1827 = vpop.f32.mrf.mxu0
      %1828 = vmatprep.mubr.bf16.mxu0 0
      %1829 = vmatmul.mubr.bf16.gmra.mxu0 %v1742
      %v1830 = vpop.f32.mrf.mxu0
      %v1831 = vadd.f32 0.0, %v1830
      %v1832 = vpop.f32.mrf.mxu0
      %v1833 = vpop.f32.mrf.mxu0
      %v1834 = vadd.f32 0.0, %v1833
      %v1835 = vpop.f32.mrf.mxu0
      %1836 = vmatprep.mubr.bf16.mxu0 0
      %1837 = vmatmul.mubr.bf16.gmra.mxu0 %v1744
      %v1838 = vpop.f32.mrf.mxu0
      %v1839 = vadd.f32 0.0, %v1838
      %v1840 = vpop.f32.mrf.mxu0
      %v1841 = vpop.f32.mrf.mxu0
      %v1842 = vadd.f32 0.0, %v1841
      %v1843 = vpop.f32.mrf.mxu0
      %1844 = vmatprep.mubr.bf16.mxu0 0
      %1845 = vmatmul.mubr.bf16.gmra.mxu0 %v1746
      %v1846 = vpop.f32.mrf.mxu0
      %v1847 = vadd.f32 0.0, %v1846
      %v1848 = vpop.f32.mrf.mxu0
      %v1849 = vpop.f32.mrf.mxu0
      %v1850 = vadd.f32 0.0, %v1849
      %v1851 = vpop.f32.mrf.mxu0
      %1852 = vmatprep.mubr.bf16.mxu0 0
      %1853 = vmatmul.mubr.bf16.gmra.mxu0 %v1748
      %v1854 = vpop.f32.mrf.mxu0
      %v1855 = vadd.f32 0.0, %v1854
      %v1856 = vpop.f32.mrf.mxu0
      %v1857 = vpop.f32.mrf.mxu0
      %v1858 = vadd.f32 0.0, %v1857
      %v1859 = vpop.f32.mrf.mxu0
      %1860 = vmatprep.mubr.bf16.mxu0 0
      %1861 = vmatmul.mubr.bf16.gmra.mxu0 %v1750
      %v1862 = vpop.f32.mrf.mxu0
      %v1863 = vadd.f32 0.0, %v1862
      %v1864 = vpop.f32.mrf.mxu0
      %v1865 = vpop.f32.mrf.mxu0
      %v1866 = vadd.f32 0.0, %v1865
      %v1867 = vpop.f32.mrf.mxu0
      %1868 = vmatprep.mubr.bf16.mxu0 0
      %1869 = vmatmul.mubr.bf16.gmra.mxu0 %v1752
      %v1870 = vpop.f32.mrf.mxu0
      %v1871 = vadd.f32 0.0, %v1870
      %v1872 = vpop.f32.mrf.mxu0
      %v1873 = vpop.f32.mrf.mxu0
      %v1874 = vadd.f32 0.0, %v1873
      %v1875 = vpop.f32.mrf.mxu0
      %1876 = vmatprep.mubr.bf16.mxu0 0
      %1877 = vmatmul.mubr.bf16.gmra.mxu0 %v1754
      %v1878 = vpop.f32.mrf.mxu0
      %v1879 = vadd.f32 0.0, %v1878
      %v1880 = vpop.f32.mrf.mxu0
      %v1881 = vpop.f32.mrf.mxu0
      %v1882 = vadd.f32 0.0, %v1881
      %v1883 = vpop.f32.mrf.mxu0
      %1884 = vmatprep.mubr.bf16.mxu0 0
      %1885 = vmatmul.mubr.bf16.gmra.mxu0 %v1756
      %v1886 = vpop.f32.mrf.mxu0
      %v1887 = vadd.f32 0.0, %v1886
      %v1888 = vpop.f32.mrf.mxu0
      %v1889 = vpop.f32.mrf.mxu0
      %v1890 = vadd.f32 0.0, %v1889
      %v1891 = vpop.f32.mrf.mxu0
      %1892 = vmatprep.mubr.bf16.mxu0 0
      %1893 = vmatmul.mubr.bf16.gmra.mxu0 %v1758
      %v1894 = vpop.f32.mrf.mxu0
      %v1895 = vadd.f32 0.0, %v1894
      %v1896 = vpop.f32.mrf.mxu0
      %v1897 = vpop.f32.mrf.mxu0
      %v1898 = vadd.f32 0.0, %v1897
      %v1899 = vpop.f32.mrf.mxu0
      %1900 = vmatprep.mubr.bf16.mxu0 0
      %1901 = vmatmul.mubr.bf16.gmra.mxu0 %v1760
      %v1902 = vpop.f32.mrf.mxu0
      %v1903 = vadd.f32 0.0, %v1902
      %v1904 = vpop.f32.mrf.mxu0
      %v1905 = vpop.f32.mrf.mxu0
      %v1906 = vadd.f32 0.0, %v1905
      %v1907 = vpop.f32.mrf.mxu0
      %1908 = vmatprep.mubr.bf16.mxu0 0
      %1909 = vmatmul.mubr.bf16.gmra.mxu0 %v1762
      %v1910 = vpop.f32.mrf.mxu0
      %v1911 = vadd.f32 0.0, %v1910
      %v1912 = vpop.f32.mrf.mxu0
      %v1913 = vpop.f32.mrf.mxu0
      %v1914 = vadd.f32 0.0, %v1913
      %v1915 = vpop.f32.mrf.mxu0
      %1916 = vmatprep.mubr.bf16.mxu0 0
      %1917 = vmatmul.mubr.bf16.gmra.mxu0 %v1764
      %v1918 = vpop.f32.mrf.mxu0
      %v1919 = vadd.f32 0.0, %v1918
      %v1920 = vpop.f32.mrf.mxu0
      %v1921 = vpop.f32.mrf.mxu0
      %v1922 = vadd.f32 0.0, %v1921
      %v1923 = vpop.f32.mrf.mxu0
      %1924 = vmatprep.mubr.bf16.mxu0 0
      %1925 = vmatmul.mubr.bf16.gmra.mxu0 %v1766
      %v1926 = vpop.f32.mrf.mxu0
      %v1927 = vadd.f32 0.0, %v1926
      %v1928 = vpop.f32.mrf.mxu0
      %v1929 = vpop.f32.mrf.mxu0
      %v1930 = vadd.f32 0.0, %v1929
      %v1931 = vpop.f32.mrf.mxu0
      %1932 = vdwg.mxu0
      %v1933 = vld [vmem:[%s3] sm:$0x1]
      %v1935 = vlaneseq
      %v1936 = vshrl.u32 %v1935, 7
      %v1937 = vsub.s32 0, %v1936
      %v1938 = vrot.slane %v1933, %v1937
      %v1940 = vmul.f32 %v1807, %v1938
      %v1941 = vmul.f32 %v1810, %v1938
      %v1942 = vmul.f32 %v1815, %v1938
      %v1943 = vmul.f32 %v1818, %v1938
      %v1944 = vmul.f32 %v1823, %v1938
      %v1945 = vmul.f32 %v1826, %v1938
      %v1946 = vmul.f32 %v1831, %v1938
      %v1947 = vmul.f32 %v1834, %v1938
      %v1948 = vmul.f32 %v1839, %v1938
      %v1949 = vmul.f32 %v1842, %v1938
      %v1950 = vmul.f32 %v1847, %v1938
      %v1951 = vmul.f32 %v1850, %v1938
      %v1952 = vmul.f32 %v1855, %v1938
      %v1953 = vmul.f32 %v1858, %v1938
      %v1954 = vmul.f32 %v1863, %v1938
      %v1955 = vmul.f32 %v1866, %v1938
      %v1956 = vmul.f32 %v1871, %v1938
      %v1957 = vmul.f32 %v1874, %v1938
      %v1958 = vmul.f32 %v1879, %v1938
      %v1959 = vmul.f32 %v1882, %v1938
      %v1960 = vmul.f32 %v1887, %v1938
      %v1961 = vmul.f32 %v1890, %v1938
      %v1962 = vmul.f32 %v1895, %v1938
      %v1963 = vmul.f32 %v1898, %v1938
      %v1964 = vmul.f32 %v1903, %v1938
      %v1965 = vmul.f32 %v1906, %v1938
      %v1966 = vmul.f32 %v1911, %v1938
      %v1967 = vmul.f32 %v1914, %v1938
      %v1968 = vmul.f32 %v1919, %v1938
      %v1969 = vmul.f32 %v1922, %v1938
      %v1970 = vmul.f32 %v1927, %v1938
      %v1971 = vmul.f32 %v1930, %v1938
      %v1972 = vld [vmem:[%s4] sm:$0x1]
      %v1974 = vlaneseq
      %v1975 = vshrl.u32 %v1974, 7
      %v1976 = vsub.s32 0, %v1975
      %v1977 = vrot.slane %v1972, %v1976
      %v1979 = vadd.f32 %v1940, %v1977
      %v1980 = vadd.f32 %v1941, %v1977
      %v1981 = vadd.f32 %v1942, %v1977
      %v1982 = vadd.f32 %v1943, %v1977
      %v1983 = vadd.f32 %v1944, %v1977
      %v1984 = vadd.f32 %v1945, %v1977
      %v1985 = vadd.f32 %v1946, %v1977
      %v1986 = vadd.f32 %v1947, %v1977
      %v1987 = vadd.f32 %v1948, %v1977
      %v1988 = vadd.f32 %v1949, %v1977
      %v1989 = vadd.f32 %v1950, %v1977
      %v1990 = vadd.f32 %v1951, %v1977
      %v1991 = vadd.f32 %v1952, %v1977
      %v1992 = vadd.f32 %v1953, %v1977
      %v1993 = vadd.f32 %v1954, %v1977
      %v1994 = vadd.f32 %v1955, %v1977
      %v1995 = vadd.f32 %v1956, %v1977
      %v1996 = vadd.f32 %v1957, %v1977
      %v1997 = vadd.f32 %v1958, %v1977
      %v1998 = vadd.f32 %v1959, %v1977
      %v1999 = vadd.f32 %v1960, %v1977
      %v2000 = vadd.f32 %v1961, %v1977
      %v2001 = vadd.f32 %v1962, %v1977
      %v2002 = vadd.f32 %v1963, %v1977
      %v2003 = vadd.f32 %v1964, %v1977
      %v2004 = vadd.f32 %v1965, %v1977
      %v2005 = vadd.f32 %v1966, %v1977
      %v2006 = vadd.f32 %v1967, %v1977
      %v2007 = vadd.f32 %v1968, %v1977
      %v2008 = vadd.f32 %v1969, %v1977
      %v2009 = vadd.f32 %v1970, %v1977
      %v2010 = vadd.f32 %v1971, %v1977
      %v2011 = vmax.f32 %v1979, 0.0
      %v2012 = vmax.f32 %v1980, 0.0
      %v2013 = vmax.f32 %v1981, 0.0
      %v2014 = vmax.f32 %v1982, 0.0
      %v2015 = vmax.f32 %v1983, 0.0
      %v2016 = vmax.f32 %v1984, 0.0
      %v2017 = vmax.f32 %v1985, 0.0
      %v2018 = vmax.f32 %v1986, 0.0
      %v2019 = vmax.f32 %v1987, 0.0
      %v2020 = vmax.f32 %v1988, 0.0
      %v2021 = vmax.f32 %v1989, 0.0
      %v2022 = vmax.f32 %v1990, 0.0
      %v2023 = vmax.f32 %v1991, 0.0
      %v2024 = vmax.f32 %v1992, 0.0
      %v2025 = vmax.f32 %v1993, 0.0
      %v2026 = vmax.f32 %v1994, 0.0
      %v2027 = vmax.f32 %v1995, 0.0
      %v2028 = vmax.f32 %v1996, 0.0
      %v2029 = vmax.f32 %v1997, 0.0
      %v2030 = vmax.f32 %v1998, 0.0
      %v2031 = vmax.f32 %v1999, 0.0
      %v2032 = vmax.f32 %v2000, 0.0
      %v2033 = vmax.f32 %v2001, 0.0
      %v2034 = vmax.f32 %v2002, 0.0
      %v2035 = vmax.f32 %v2003, 0.0
      %v2036 = vmax.f32 %v2004, 0.0
      %v2037 = vmax.f32 %v2005, 0.0
      %v2038 = vmax.f32 %v2006, 0.0
      %v2039 = vmax.f32 %v2007, 0.0
      %v2040 = vmax.f32 %v2008, 0.0
      %v2041 = vmax.f32 %v2009, 0.0
      %v2042 = vmax.f32 %v2010, 0.0
      %v2043 = vpack.c.bf16 %v2012, %v2011
      %v2044 = vpack.c.bf16 %v2014, %v2013
      %v2045 = vpack.c.bf16 %v2016, %v2015
      %v2046 = vpack.c.bf16 %v2018, %v2017
      %v2047 = vpack.c.bf16 %v2020, %v2019
      %v2048 = vpack.c.bf16 %v2022, %v2021
      %v2049 = vpack.c.bf16 %v2024, %v2023
      %v2050 = vpack.c.bf16 %v2026, %v2025
      %v2051 = vpack.c.bf16 %v2028, %v2027
      %v2052 = vpack.c.bf16 %v2030, %v2029
      %v2053 = vpack.c.bf16 %v2032, %v2031
      %v2054 = vpack.c.bf16 %v2034, %v2033
      %v2055 = vpack.c.bf16 %v2036, %v2035
      %v2056 = vpack.c.bf16 %v2038, %v2037
      %v2057 = vpack.c.bf16 %v2040, %v2039
      %v2058 = vpack.c.bf16 %v2042, %v2041
      %v2075 = vunpack.c.l.b16 %v2043
      %v2076 = vunpack.c.h.b16 %v2043
      %v2077 = vunpack.c.l.b16 %v2044
      %v2078 = vunpack.c.h.b16 %v2044
      %v2079 = vunpack.c.l.b16 %v2045
      %v2080 = vunpack.c.h.b16 %v2045
      %v2081 = vunpack.c.l.b16 %v2046
      %v2082 = vunpack.c.h.b16 %v2046
      %v2083 = vunpack.c.l.b16 %v2047
      %v2084 = vunpack.c.h.b16 %v2047
      %v2085 = vunpack.c.l.b16 %v2048
      %v2086 = vunpack.c.h.b16 %v2048
      %v2087 = vunpack.c.l.b16 %v2049
      %v2088 = vunpack.c.h.b16 %v2049
      %v2089 = vunpack.c.l.b16 %v2050
      %v2090 = vunpack.c.h.b16 %v2050
      %v2091 = vunpack.c.l.b16 %v2051
      %v2092 = vunpack.c.h.b16 %v2051
      %v2093 = vunpack.c.l.b16 %v2052
      %v2094 = vunpack.c.h.b16 %v2052
      %v2095 = vunpack.c.l.b16 %v2053
      %v2096 = vunpack.c.h.b16 %v2053
      %v2097 = vunpack.c.l.b16 %v2054
      %v2098 = vunpack.c.h.b16 %v2054
      %v2099 = vunpack.c.l.b16 %v2055
      %v2100 = vunpack.c.h.b16 %v2055
      %v2101 = vunpack.c.l.b16 %v2056
      %v2102 = vunpack.c.h.b16 %v2056
      %v2103 = vunpack.c.l.b16 %v2057
      %v2104 = vunpack.c.h.b16 %v2057
      %v2105 = vunpack.c.l.b16 %v2058
      %v2106 = vunpack.c.h.b16 %v2058
      %v2107 = vpack.c.b16 %v2075, %v2075
      %v2108 = vpack.c.b16 %v2076, %v2076
      %v2109 = vpack.c.b16 %v2077, %v2077
      %v2110 = vpack.c.b16 %v2078, %v2078
      %v2111 = vpack.c.b16 %v2079, %v2079
      %v2112 = vpack.c.b16 %v2080, %v2080
      %v2113 = vpack.c.b16 %v2081, %v2081
      %v2114 = vpack.c.b16 %v2082, %v2082
      %v2115 = vpack.c.b16 %v2083, %v2083
      %v2116 = vpack.c.b16 %v2084, %v2084
      %v2117 = vpack.c.b16 %v2085, %v2085
      %v2118 = vpack.c.b16 %v2086, %v2086
      %v2119 = vpack.c.b16 %v2087, %v2087
      %v2120 = vpack.c.b16 %v2088, %v2088
      %v2121 = vpack.c.b16 %v2089, %v2089
      %v2122 = vpack.c.b16 %v2090, %v2090
      %v2123 = vpack.c.b16 %v2091, %v2091
      %v2124 = vpack.c.b16 %v2092, %v2092
      %v2125 = vpack.c.b16 %v2093, %v2093
      %v2126 = vpack.c.b16 %v2094, %v2094
      %v2127 = vpack.c.b16 %v2095, %v2095
      %v2128 = vpack.c.b16 %v2096, %v2096
      %v2129 = vpack.c.b16 %v2097, %v2097
      %v2130 = vpack.c.b16 %v2098, %v2098
      %v2131 = vpack.c.b16 %v2099, %v2099
      %v2132 = vpack.c.b16 %v2100, %v2100
      %v2133 = vpack.c.b16 %v2101, %v2101
      %v2134 = vpack.c.b16 %v2102, %v2102
      %v2135 = vpack.c.b16 %v2103, %v2103
      %v2136 = vpack.c.b16 %v2104, %v2104
      %v2137 = vpack.c.b16 %v2105, %v2105
      %v2138 = vpack.c.b16 %v2106, %v2106
      %vm2171 = vcmask 257024
      %2172 = vst.msk [vmem:[%s343] sm:$0xf] %vm2171, %v2107
      %2173 = vst.msk [vmem:[%s343 + $0x4] sm:$0xf] %vm2171, %v2108
      %2174 = vst.msk [vmem:[%s343 + $0x8] sm:$0xf] %vm2171, %v2109
      %2175 = vst.msk [vmem:[%s343 + $0xc] sm:$0xf] %vm2171, %v2110
      %2176 = vst.msk [vmem:[%s343 + $0x10] sm:$0xf] %vm2171, %v2111
      %2177 = vst.msk [vmem:[%s343 + $0x14] sm:$0xf] %vm2171, %v2112
      %2178 = vst.msk [vmem:[%s343 + $0x18] sm:$0xf] %vm2171, %v2113
      %2179 = vst.msk [vmem:[%s343 + $0x1c] sm:$0xf] %vm2171, %v2114
      %2180 = vst.msk [vmem:[%s343 + $0x20] sm:$0xf] %vm2171, %v2115
      %2181 = vst.msk [vmem:[%s343 + $0x24] sm:$0xf] %vm2171, %v2116
      %2182 = vst.msk [vmem:[%s343 + $0x28] sm:$0xf] %vm2171, %v2117
      %2183 = vst.msk [vmem:[%s343 + $0x2c] sm:$0xf] %vm2171, %v2118
      %2184 = vst.msk [vmem:[%s343 + $0x30] sm:$0xf] %vm2171, %v2119
      %2185 = vst.msk [vmem:[%s343 + $0x34] sm:$0xf] %vm2171, %v2120
      %2186 = vst.msk [vmem:[%s343 + $0x38] sm:$0xf] %vm2171, %v2121
      %2187 = vst.msk [vmem:[%s343 + $0x3c] sm:$0xf] %vm2171, %v2122
      %2188 = vst.msk [vmem:[%s343 + $0x40] sm:$0xf] %vm2171, %v2123
      %2189 = vst.msk [vmem:[%s343 + $0x44] sm:$0xf] %vm2171, %v2124
      %2190 = vst.msk [vmem:[%s343 + $0x48] sm:$0xf] %vm2171, %v2125
      %2191 = vst.msk [vmem:[%s343 + $0x4c] sm:$0xf] %vm2171, %v2126
      %2192 = vst.msk [vmem:[%s343 + $0x50] sm:$0xf] %vm2171, %v2127
      %2193 = vst.msk [vmem:[%s343 + $0x54] sm:$0xf] %vm2171, %v2128
      %2194 = vst.msk [vmem:[%s343 + $0x58] sm:$0xf] %vm2171, %v2129
      %2195 = vst.msk [vmem:[%s343 + $0x5c] sm:$0xf] %vm2171, %v2130
      %2196 = vst.msk [vmem:[%s343 + $0x60] sm:$0xf] %vm2171, %v2131
      %2197 = vst.msk [vmem:[%s343 + $0x64] sm:$0xf] %vm2171, %v2132
      %2198 = vst.msk [vmem:[%s343 + $0x68] sm:$0xf] %vm2171, %v2133
      %2199 = vst.msk [vmem:[%s343 + $0x6c] sm:$0xf] %vm2171, %v2134
      %2200 = vst.msk [vmem:[%s343 + $0x70] sm:$0xf] %vm2171, %v2135
      %2201 = vst.msk [vmem:[%s343 + $0x74] sm:$0xf] %vm2171, %v2136
      %2202 = vst.msk [vmem:[%s343 + $0x78] sm:$0xf] %vm2171, %v2137
      %2203 = vst.msk [vmem:[%s343 + $0x7c] sm:$0xf] %vm2171, %v2138
      %p2204 = scmp.lt.s32.totalorder %s20, 1
      %s2205 = scalar_select %p2204, %s20, 1
      %p2206 = scmp.lt.s32.totalorder %s21, 0
      %s2207 = scalar_select %p2206, %s21, 0
      %s2208 = smul.addr %s2207, 32
      %s2209 = smul.addr %s2205, 32
      %s2210 = sadd.s32 %s2208, %s2209
      %s2211 = smul.addr %s2210, 4
      %s2212 = scalar_lea.vmem %s5, %s2211
      // Predicated region
      $region41: #{upconv_pallas.3} parent=39 // pred_check
        %p2213 = pneg %p171
      $region42: #{upconv_pallas.3} parent=39 // pred_check_branch
        %2215 = sbr.rel (%p2213) target = $region44
      $region43: #{upconv_pallas.3} parent=39 // pred_region
        _
      $region44: #{upconv_pallas.3} parent=39 // pred_fallthru
        _
    $region40: #{upconv_pallas.3} parent=5 // pred_fallthru
      _
    %p2216 = scmp.le.s32.totalorder 2, %s11
    // Predicated region
    $region45: #{upconv_pallas.3} parent=5 // pred_check
      %p2217 = pneg %p2216
    $region46: #{upconv_pallas.3} parent=5 // pred_check_branch
      %2219 = sbr.rel (%p2217) target = $region48
    $region47: #{upconv_pallas.3} parent=5 // pred_region
      %s2220 = ssub.s32 %s11, 2
      // Predicated region
      $region49: #{upconv_pallas.3} parent=47 // pred_check
        %p2221 = pneg %p177
      $region50: #{upconv_pallas.3} parent=47 // pred_check_branch
        %2223 = sbr.rel (%p2221) target = $region52
      $region51: #{upconv_pallas.3} parent=47 // pred_region
        %p2224 = scmp.lt.s32.totalorder %s22, 1
        %s2225 = scalar_select %p2224, %s22, 1
        %p2226 = scmp.lt.s32.totalorder %s23, 0
        %s2227 = scalar_select %p2226, %s23, 0
        %s2228 = smul.addr %s2227, 32
        %s2229 = smul.addr %s2225, 32
        %s2230 = sadd.s32 %s2228, %s2229
        %s2231 = smul.addr %s2230, 4
        %s2232 = scalar_lea.vmem %s5, %s2231
      $region52: #{upconv_pallas.3} parent=47 // pred_fallthru
        _
    $region48: #{upconv_pallas.3} parent=5 // pred_fallthru
      _
  $region6: #{upconv_pallas.3} parent=0 // loop_footer
    %s15 = sadd.s32 1, %s11
  $region7: #{upconv_pallas.3} parent=0 // loop_footer_branch
    %10 = sbr.rel target = $region3
  $region8: #{upconv_pallas.3} parent=0 // loop_exit
    _

</llo_original>
